<compile_context>
chip_gen: v5e
topology: v5e:2x2
jax: 0.10.0
libtpu: 0.0.40
codegen_flags: <defaults>
</compile_context>

<pallas_src>
import jax
import jax.numpy as jnp
from jax import lax
from jax.experimental import pallas as pl
from jax.experimental.pallas import tpu as pltpu


def _chamfer_kernel(x_ref, y_ref, d1_ref, d2_ref):
    # x_ref: (TB, D, N), y_ref: (TB, D, M) for the current batch tile.
    x = x_ref[...].astype(jnp.float32)
    y = y_ref[...].astype(jnp.float32)

    # Squared norms: reductions over the D=3 sublane axis, lane-dense results.
    xx = jnp.sum(x * x, axis=1)                                   # (TB, N)
    yy = jnp.sum(y * y, axis=1)                                   # (TB, M)

    # -2 * <x, y>: fold the 2x into the small operand and contract the D axis
    # (dim 1) on both sides -> batched MXU matmul, no materialized transpose.
    neg2xy = lax.dot_general(
        -2.0 * x,
        y,
        dimension_numbers=(((1,), (1,)), ((0,), (0,))),
        preferred_element_type=jnp.float32,
    )                                                             # (TB, N, M)

    # sqdist1[b, n] = xx[b, n] + min_m (yy[b, m] - 2 xy[b, n, m])
    m1 = jnp.min(neg2xy + yy[:, None, :], axis=2)                 # lane min
    d1_ref[...] = jnp.maximum(xx + m1, 0.0)

    # sqdist2[b, m] = yy[b, m] + min_n (xx[b, n] - 2 xy[b, n, m])
    m2 = jnp.min(neg2xy + xx[:, :, None], axis=1)                 # sublane min
    d2_ref[...] = jnp.maximum(yy + m2, 0.0)


def _pick_batch_tile(B, max_tb=8):
    # Batch tile: amortize per-grid-step overhead.  Keep the output block's
    # sublane dim either equal to B (full extent) or a multiple of 8 so block
    # boundaries stay aligned to the native (8, 128) tiling.
    if B <= max_tb:
        return B
    if B % 8 == 0:
        return 8
    return B  # no aligned divisor exists; process the whole batch in one step


def chamfer_loss(inputs, target):
    """inputs: (B, N, D) float, target: (B, M, D) float -> scalar loss."""
    B, N, D = inputs.shape
    B2, M, D2 = target.shape
    assert B == B2 and D == D2

    # Channel-first layout for the kernel (cheap layout plumbing outside it).
    x_cf = jnp.transpose(inputs, (0, 2, 1))   # (B, D, N)
    y_cf = jnp.transpose(target, (0, 2, 1))   # (B, D, M)

    TB = _pick_batch_tile(B)
    grid = (B // TB,)

    sqdist1, sqdist2 = pl.pallas_call(
        _chamfer_kernel,
        out_shape=(
            jax.ShapeDtypeStruct((B, N), jnp.float32),
            jax.ShapeDtypeStruct((B, M), jnp.float32),
        ),
        grid_spec=pltpu.PrefetchScalarGridSpec(
            num_scalar_prefetch=0,
            grid=grid,
            in_specs=[
                pl.BlockSpec((TB, D, N), lambda b: (b, 0, 0)),
                pl.BlockSpec((TB, D, M), lambda b: (b, 0, 0)),
            ],
            out_specs=[
                pl.BlockSpec((TB, N), lambda b: (b, 0)),
                pl.BlockSpec((TB, M), lambda b: (b, 0)),
            ],
        ),
        compiler_params=pltpu.CompilerParams(
            dimension_semantics=("parallel",),
        ),
    )(x_cf, y_cf)

    # Glue: torch.mean(sqdist1) + torch.mean(sqdist2)
    return jnp.mean(sqdist1) + jnp.mean(sqdist2)


def _chamfer_loss_ref(inputs, target):
    # Pure-JAX direct-difference reference for sanity checking.
    diff = inputs[:, :, None, :] - target[:, None, :, :]      # (B, N, M, D)
    d = jnp.sum(diff * diff, axis=-1)                         # (B, N, M)
    return jnp.mean(jnp.min(d, axis=2)) + jnp.mean(jnp.min(d, axis=1))


if __name__ == "__main__":
    key = jax.random.PRNGKey(0)
    k1, k2 = jax.random.split(key)

    B, N, M, D = 16, 256, 128, 3   # TB = 8 -> 2 grid steps
    inputs = jax.random.normal(k1, (B, N, D), dtype=jnp.float32)
    target = jax.random.normal(k2, (B, M, D), dtype=jnp.float32)

    loss = jax.block_until_ready(chamfer_loss(inputs, target))
    ref = jax.block_until_ready(_chamfer_loss_ref(inputs, target))

    assert jnp.isfinite(loss)
    assert jnp.allclose(loss, ref, rtol=1e-4, atol=1e-4), (loss, ref)
    print("KERNEL_OK")
</pallas_src>

<mosaic_0001>
module attributes {stable_mosaic.version = 11 : i64} {
  func.func @_chamfer_kernel(%arg0: i32, %arg1: memref<8x3x256xf32, #tpu.memory_space<vmem>>, %arg2: memref<8x3x128xf32, #tpu.memory_space<vmem>>, %arg3: memref<8x256xf32, #tpu.memory_space<vmem>>, %arg4: memref<8x128xf32, #tpu.memory_space<vmem>>) attributes {dimension_semantics = [#tpu.dimension_semantics<parallel>], iteration_bounds = array<i64: 2>, scalar_prefetch = 0 : i64, scratch_operands = 0 : i64, tpu.core_type = #tpu.core_type<tc>, window_params = [{transform_indices = @transform_0, window_bounds = array<i64: 8, 3, 256>}, {transform_indices = @transform_1, window_bounds = array<i64: 8, 3, 128>}, {transform_indices = @transform_2, window_bounds = array<i64: 8, 256>}, {transform_indices = @transform_3, window_bounds = array<i64: 8, 128>}]} {
    %c0 = arith.constant 0 : index
    %c0_0 = arith.constant 0 : index
    %c0_1 = arith.constant 0 : index
    %0 = vector.load %arg1[%c0, %c0_0, %c0_1] : memref<8x3x256xf32, #tpu.memory_space<vmem>>, vector<8x3x256xf32>
    %c0_2 = arith.constant 0 : index
    %c0_3 = arith.constant 0 : index
    %c0_4 = arith.constant 0 : index
    %1 = vector.load %arg2[%c0_2, %c0_3, %c0_4] : memref<8x3x128xf32, #tpu.memory_space<vmem>>, vector<8x3x128xf32>
    %2 = arith.mulf %0, %0 : vector<8x3x256xf32>
    %cst = arith.constant dense<0.000000e+00> : vector<8x256xf32>
    %3 = vector.multi_reduction <add>, %2, %cst [1] : vector<8x3x256xf32> to vector<8x256xf32>
    %4 = arith.mulf %1, %1 : vector<8x3x128xf32>
    %cst_5 = arith.constant dense<0.000000e+00> : vector<8x128xf32>
    %5 = vector.multi_reduction <add>, %4, %cst_5 [1] : vector<8x3x128xf32> to vector<8x128xf32>
    %cst_6 = arith.constant -2.000000e+00 : f32
    %6 = vector.broadcast %cst_6 : f32 to vector<8x3x256xf32>
    %7 = arith.mulf %6, %0 : vector<8x3x256xf32>
    %cst_7 = arith.constant dense<0.000000e+00> : vector<8x256x128xf32>
    %8 = tpu.matmul %7, %1, %cst_7 {dimension_numbers = #tpu.dot_dimension_numbers<[1], [1], [2], [2], [0, 0, 0, 2, 1, 2], [0], [0]>} : vector<8x3x256xf32>, vector<8x3x128xf32>, vector<8x256x128xf32> -> vector<8x256x128xf32>
    %9 = vector.shape_cast %5 : vector<8x128xf32> to vector<8x1x128xf32>
    %10 = vector.broadcast %9 : vector<8x1x128xf32> to vector<8x256x128xf32>
    %11 = arith.addf %8, %10 : vector<8x256x128xf32>
    %cst_8 = arith.constant dense<0x7F800000> : vector<8x256xf32>
    %12 = vector.multi_reduction <minimumf>, %11, %cst_8 [2] : vector<8x256x128xf32> to vector<8x256xf32>
    %13 = arith.addf %3, %12 : vector<8x256xf32>
    %cst_9 = arith.constant 0.000000e+00 : f32
    %14 = vector.broadcast %cst_9 : f32 to vector<8x256xf32>
    %15 = arith.maximumf %13, %14 : vector<8x256xf32>
    %c0_10 = arith.constant 0 : index
    %c0_11 = arith.constant 0 : index
    %16 = vector.load %arg3[%c0_10, %c0_11] : memref<8x256xf32, #tpu.memory_space<vmem>>, vector<8x256xf32>
    tpu.vector_store %arg3[%c0_10, %c0_11], %15 {strides = array<i32>} : memref<8x256xf32, #tpu.memory_space<vmem>>, vector<8x256xf32>,
    %17 = vector.shape_cast %3 : vector<8x256xf32> to vector<8x256x1xf32>
    %18 = vector.broadcast %17 : vector<8x256x1xf32> to vector<8x256x128xf32>
    %19 = arith.addf %8, %18 : vector<8x256x128xf32>
    %cst_12 = arith.constant dense<0x7F800000> : vector<8x128xf32>
    %20 = vector.multi_reduction <minimumf>, %19, %cst_12 [1] : vector<8x256x128xf32> to vector<8x128xf32>
    %21 = arith.addf %5, %20 : vector<8x128xf32>
    %cst_13 = arith.constant 0.000000e+00 : f32
    %22 = vector.broadcast %cst_13 : f32 to vector<8x128xf32>
    %23 = arith.maximumf %21, %22 : vector<8x128xf32>
    %c0_14 = arith.constant 0 : index
    %c0_15 = arith.constant 0 : index
    %24 = vector.load %arg4[%c0_14, %c0_15] : memref<8x128xf32, #tpu.memory_space<vmem>>, vector<8x128xf32>
    tpu.vector_store %arg4[%c0_14, %c0_15], %23 {strides = array<i32>} : memref<8x128xf32, #tpu.memory_space<vmem>>, vector<8x128xf32>,
    return
  }
  func.func @transform_0(%arg0: i32) -> (i32, i32, i32) {
    %c0_i32 = arith.constant 0 : i32
    %c0_i32_0 = arith.constant 0 : i32
    %c0_i32_1 = arith.constant 0 : i32
    return %arg0, %c0_i32, %c0_i32_0 : i32, i32, i32
  }
  func.func @transform_1(%arg0: i32) -> (i32, i32, i32) {
    %c0_i32 = arith.constant 0 : i32
    %c0_i32_0 = arith.constant 0 : i32
    %c0_i32_1 = arith.constant 0 : i32
    return %arg0, %c0_i32, %c0_i32_0 : i32, i32, i32
  }
  func.func @transform_2(%arg0: i32) -> (i32, i32) {
    %c0_i32 = arith.constant 0 : i32
    %c0_i32_0 = arith.constant 0 : i32
    return %arg0, %c0_i32 : i32, i32
  }
  func.func @transform_3(%arg0: i32) -> (i32, i32) {
    %c0_i32 = arith.constant 0 : i32
    %c0_i32_0 = arith.constant 0 : i32
    return %arg0, %c0_i32 : i32, i32
  }
}

</mosaic_0001>

<llo_original>
// kernel: tpu_custom_call.1
$region0: #{tpu_custom_call.1}
  #allocation0 [shape = 'u32[]', space=smem, size = 0x4, offset = 0x4, fixed_abs, tag = 'smem constant byte address 0x4 - core index']
  #allocation1 [shape = 'u32[72,128]{1,0:T(1,128)}', space=vmem, size = 0x9000, scoped, tag = 'internal scratch']
  %s0 = inlined_call_operand.vmem [shape: f32[16,3,256], index: 0, kind: input, shape index: {}]
  %s1 = inlined_call_operand.vmem [shape: f32[16,3,128], index: 1, kind: input, shape index: {}]
  %s2 = inlined_call_operand.hbm [shape: f32[16,256], index: 2, kind: output, shape index: {0}]
  %s3 = inlined_call_operand.hbm [shape: f32[16,128], index: 3, kind: output, shape index: {1}]
  %4 = xla_tuple %s2, %s3
  %s5 = sld [smem:[#allocation0]]
  $region49: #{tpu_custom_call.1} parent=0
    _
  %s7 = ssub.s32 1, %s5
  %s8 = scalar_select 0, %s7, %s5
  $region1: #{tpu_custom_call.1} parent=0
    #allocation2 [shape = 'u8[16384]{0}', space=vmem, size = 0x4000, scoped, tag = 'output window, operand 0']
    #allocation3 [shape = 's32[2]{0}', space=sflag, size = 0x8, scoped, tag = 'scoped memory for tpu_custom_call.1']
    #allocation4 [shape = 'u8[8192]{0}', space=vmem, size = 0x2000, scoped, tag = 'output window, operand 1']
    #allocation5 [shape = 's32[2]{0}', space=sflag, size = 0x8, scoped, tag = 'scoped memory for tpu_custom_call.1']
    %9 = vsyncpa [#allocation3], 0
    %s10 = scalar_lea.sflag [#allocation3], 1
    %11 = vsyncpa %s10, 0
    %12 = vsyncpa [#allocation5], 0
    %s13 = scalar_lea.sflag [#allocation5], 1
    %14 = vsyncpa %s13, 0
    loop: start=0, step=1, limit=4
    $region2: #{tpu_custom_call.1} parent=1 // loop_pre_header
      _
    $region3: #{tpu_custom_call.1} parent=1 // loop_header
      %s16 = sphi 0, %s20
      %p17 = scmp.ge.s32.totalorder %s16, 4
      %s26 = sphi 0, %s28
      %s29 = sphi 0, %s26
      %s30 = sphi 0, %s29
      %s46 = sphi 0, %s30
      %s52 = sphi 0, %s54
      %s55 = sphi 0, %s52
      %s56 = sphi 0, %s55
      %s72 = sphi 0, %s56
      %s78 = sphi 0, %s80
      %s81 = sphi 0, %s78
      %s82 = sphi 0, %s81
      %s98 = sphi 0, %s82
      %s104 = sphi 0, %s106
      %s107 = sphi 0, %s104
      %s108 = sphi 0, %s107
      %s124 = sphi 0, %s108
    $region4: #{tpu_custom_call.1} parent=1 // loop_header_branch
      %19 = sbr.rel (%p17) target = $region8
    $region5: #{tpu_custom_call.1} parent=1 // loop_body
      %s21 = ssub.s32 %s16, 1
      %s22 = ssub.s32 %s16, 2
      %s23 = sadd.s32 %s16, 1
      %s24 = ssub.s32 %s16, %s23
      %p25 = scmp.eq.s32.totalorder %s24, 0
      %s27 = sadd.s32 %s26, 1
      %s28 = scalar_select %p25, %s26, %s27
      %p31 = pneg %p25
      %p32 = scmp.eq.s32.totalorder %s16, 1
      %p33 = por %p31, %p32
      %p34 = scmp.ne.s32.totalorder %s26, %s29
      %p35 = scmp.eq.s32.totalorder %s16, 0
      %p36 = por %p34, %p35
      %p37 = scmp.ne.s32.totalorder %s26, %s29
      %p38 = scmp.eq.s32.totalorder %s21, 1
      %p39 = por %p37, %p38
      %p40 = scmp.ne.s32.totalorder %s29, %s30
      %p41 = scmp.eq.s32.totalorder %s21, 0
      %p42 = por %p40, %p41
      %p43 = scmp.ne.s32.totalorder %s29, %s30
      %p44 = scmp.eq.s32.totalorder %s22, 1
      %p45 = por %p43, %p44
      %p47 = scmp.ne.s32.totalorder %s30, %s46
      %p48 = scmp.eq.s32.totalorder %s22, 0
      %p49 = por %p47, %p48
      %s50 = ssub.s32 %s16, %s23
      %p51 = scmp.eq.s32.totalorder %s50, 0
      %s53 = sadd.s32 %s52, 1
      %s54 = scalar_select %p51, %s52, %s53
      %p57 = pneg %p51
      %p58 = scmp.eq.s32.totalorder %s16, 1
      %p59 = por %p57, %p58
      %p60 = scmp.ne.s32.totalorder %s52, %s55
      %p61 = scmp.eq.s32.totalorder %s16, 0
      %p62 = por %p60, %p61
      %p63 = scmp.ne.s32.totalorder %s52, %s55
      %p64 = scmp.eq.s32.totalorder %s21, 1
      %p65 = por %p63, %p64
      %p66 = scmp.ne.s32.totalorder %s55, %s56
      %p67 = scmp.eq.s32.totalorder %s21, 0
      %p68 = por %p66, %p67
      %p69 = scmp.ne.s32.totalorder %s55, %s56
      %p70 = scmp.eq.s32.totalorder %s22, 1
      %p71 = por %p69, %p70
      %p73 = scmp.ne.s32.totalorder %s56, %s72
      %p74 = scmp.eq.s32.totalorder %s22, 0
      %p75 = por %p73, %p74
      %s76 = ssub.s32 %s16, %s23
      %p77 = scmp.eq.s32.totalorder %s76, 0
      %s79 = sadd.s32 %s78, 1
      %s80 = scalar_select %p77, %s78, %s79
      %p83 = pneg %p77
      %p84 = scmp.eq.s32.totalorder %s16, 1
      %p85 = por %p83, %p84
      %p86 = scmp.ne.s32.totalorder %s78, %s81
      %p87 = scmp.eq.s32.totalorder %s16, 0
      %p88 = por %p86, %p87
      %p89 = scmp.ne.s32.totalorder %s78, %s81
      %p90 = scmp.eq.s32.totalorder %s21, 1
      %p91 = por %p89, %p90
      %p92 = scmp.ne.s32.totalorder %s81, %s82
      %p93 = scmp.eq.s32.totalorder %s21, 0
      %p94 = por %p92, %p93
      %p95 = scmp.ne.s32.totalorder %s81, %s82
      %p96 = scmp.eq.s32.totalorder %s22, 1
      %p97 = por %p95, %p96
      %p99 = scmp.ne.s32.totalorder %s82, %s98
      %p100 = scmp.eq.s32.totalorder %s22, 0
      %p101 = por %p99, %p100
      %s102 = ssub.s32 %s16, %s23
      %p103 = scmp.eq.s32.totalorder %s102, 0
      %s105 = sadd.s32 %s104, 1
      %s106 = scalar_select %p103, %s104, %s105
      %p109 = pneg %p103
      %p110 = scmp.eq.s32.totalorder %s16, 1
      %p111 = por %p109, %p110
      %p112 = scmp.ne.s32.totalorder %s104, %s107
      %p113 = scmp.eq.s32.totalorder %s16, 0
      %p114 = por %p112, %p113
      %p115 = scmp.ne.s32.totalorder %s104, %s107
      %p116 = scmp.eq.s32.totalorder %s21, 1
      %p117 = por %p115, %p116
      %p118 = scmp.ne.s32.totalorder %s107, %s108
      %p119 = scmp.eq.s32.totalorder %s21, 0
      %p120 = por %p118, %p119
      %p121 = scmp.ne.s32.totalorder %s107, %s108
      %p122 = scmp.eq.s32.totalorder %s22, 1
      %p123 = por %p121, %p122
      %p125 = scmp.ne.s32.totalorder %s108, %s124
      %p126 = scmp.eq.s32.totalorder %s22, 0
      %p127 = por %p125, %p126
      %p128 = scmp.le.s32.totalorder 1, %s16
      %p129 = scmp.lt.s32.totalorder %s16, 3
      %p130 = pnand %p128, %p129
      %p131 = pneg %p130
      // Predicated region
      $region9: #{tpu_custom_call.1} parent=5 // pred_check
        _
      $region10: #{tpu_custom_call.1} parent=5 // pred_check_branch
        %133 = sbr.rel (%p130) target = $region12
      $region11: #{tpu_custom_call.1} parent=5 // pred_region
        %s134 = ssub.s32 %s16, 1
      $region12: #{tpu_custom_call.1} parent=5 // pred_fallthru
        _
      %p135 = scmp.lt.s32.totalorder %s16, 2
      // Predicated region
      $region13: #{tpu_custom_call.1} parent=5 // pred_check
        %p136 = pneg %p135
      $region14: #{tpu_custom_call.1} parent=5 // pred_check_branch
        %138 = sbr.rel (%p136) target = $region16
      $region15: #{tpu_custom_call.1} parent=5 // pred_region
        // Predicated region
        $region17: #{tpu_custom_call.1} parent=15 // pred_check
          %p139 = pneg %p36
        $region18: #{tpu_custom_call.1} parent=15 // pred_check_branch
          %141 = sbr.rel (%p139) target = $region20
        $region19: #{tpu_custom_call.1} parent=15 // pred_region
          %s142 = smul.u32 8, %s16
          %p143 = scmp.lt.s32.totalorder %s142, 15
          %s144 = scalar_select %p143, %s142, 15
          %s145 = smul.addr %s144, 2
          %s146 = smul.addr %s145, 4
          %s147 = scalar_lea.vmem %s0, %s146
          %s148 = smul.u32 8, %s16
        $region20: #{tpu_custom_call.1} parent=15 // pred_fallthru
          _
        // Predicated region
        $region21: #{tpu_custom_call.1} parent=15 // pred_check
          %p149 = pneg %p62
        $region22: #{tpu_custom_call.1} parent=15 // pred_check_branch
          %151 = sbr.rel (%p149) target = $region24
        $region23: #{tpu_custom_call.1} parent=15 // pred_region
          %s152 = smul.u32 8, %s16
          %p153 = scmp.lt.s32.totalorder %s152, 15
          %s154 = scalar_select %p153, %s152, 15
          %s155 = smul.addr %s154, 4
          %s156 = scalar_lea.vmem %s1, %s155
          %s157 = smul.u32 8, %s16
        $region24: #{tpu_custom_call.1} parent=15 // pred_fallthru
          _
      $region16: #{tpu_custom_call.1} parent=5 // pred_fallthru
        _
      %p158 = scmp.le.s32.totalorder 1, %s16
      %p159 = scmp.lt.s32.totalorder %s16, 3
      %p160 = pnand %p158, %p159
      %p161 = pneg %p160
      // Predicated region
      $region25: #{tpu_custom_call.1} parent=5 // pred_check
        _
      $region26: #{tpu_custom_call.1} parent=5 // pred_check_branch
        %163 = sbr.rel (%p160) target = $region28
      $region27: #{tpu_custom_call.1} parent=5 // pred_region
        %s164 = ssub.s32 %s16, 1
        %s165 = smul.u32 8, %s21
        %p166 = scmp.lt.s32.totalorder %s165, 15
        %s167 = scalar_select %p166, %s165, 15
        %s168 = smul.addr %s167, 2
        %s169 = smul.addr %s168, 4
        %s170 = scalar_lea.vmem %s0, %s169
        %p171 = pneg %p42
        %p172 = pneg %p39
        %s173 = smul.u32 8, %s21
        %p174 = scmp.lt.s32.totalorder %s173, 15
        %s175 = scalar_select %p174, %s173, 15
        %s176 = smul.addr %s175, 4
        %s177 = scalar_lea.vmem %s1, %s176
        %p178 = pneg %p68
        %p179 = pneg %p65
        %p180 = pneg %p94
        %p181 = pneg %p91
        %s182 = sand.u32 %s81, 1
        %s183 = scalar_lea.sflag [#allocation3], %s182
        %s184 = sand.u32 %s81, 1
        %s185 = smul.addr %s184, 16
        %s186 = scalar_lea.vmem [#allocation2], %s185
        %p187 = pneg %p120
        %p188 = pneg %p117
        %s189 = sand.u32 %s107, 1
        %s190 = scalar_lea.sflag [#allocation5], %s189
        %s191 = sand.u32 %s107, 1
        %s192 = smul.addr %s191, 8
        %s193 = scalar_lea.vmem [#allocation4], %s192
        %s194 = smul.u32 8, %s21
        %p195 = scmp.lt.s32.totalorder %s194, 15
        %s196 = scalar_select %p195, %s194, 15
        %s197 = smul.addr %s196, 2
        %s198 = smul.addr %s197, 4
        %s199 = scalar_lea.vmem %s0, %s198
        %s200 = smul.u32 8, %s21
        %s201 = smul.u32 8, %s21
        %p202 = scmp.lt.s32.totalorder %s201, 15
        %s203 = scalar_select %p202, %s201, 15
        %s204 = smul.addr %s203, 4
        %s205 = scalar_lea.vmem %s1, %s204
        %s206 = smul.u32 8, %s21
        %v207 = vld [vmem:[%s199] sm:$0x77]
        %v208 = vld [vmem:[%s199 + $0x8] sm:$0x77]
        %v209 = vld [vmem:[%s199 + $0x10] sm:$0x77]
        %v210 = vld [vmem:[%s199 + $0x18] sm:$0x77]
        %v211 = vld [vmem:[%s199 + $0x20] sm:$0x77]
        %v212 = vld [vmem:[%s199 + $0x28] sm:$0x77]
        %v213 = vld [vmem:[%s199 + $0x30] sm:$0x77]
        %v214 = vld [vmem:[%s199 + $0x38] sm:$0x77]
        %v215 = vld [vmem:[%s205] sm:$0x7]
        %v216 = vld [vmem:[%s205 + $0x4] sm:$0x7]
        %v217 = vld [vmem:[%s205 + $0x8] sm:$0x7]
        %v218 = vld [vmem:[%s205 + $0xc] sm:$0x7]
        %v219 = vld [vmem:[%s205 + $0x10] sm:$0x7]
        %v220 = vld [vmem:[%s205 + $0x14] sm:$0x7]
        %v221 = vld [vmem:[%s205 + $0x18] sm:$0x7]
        %v222 = vld [vmem:[%s205 + $0x1c] sm:$0x7]
        %v223 = vmul.f32 %v207, %v207
        %v224 = vmul.f32 %v208, %v208
        %v225 = vmul.f32 %v209, %v209
        %v226 = vmul.f32 %v210, %v210
        %v227 = vmul.f32 %v211, %v211
        %v228 = vmul.f32 %v212, %v212
        %v229 = vmul.f32 %v213, %v213
        %v230 = vmul.f32 %v214, %v214
        %239 = vst [vmem:[#allocation1] ss:$2 sm:$0xff] %v223
        %v240 = vld.sshfl [vmem:[#allocation1] sm:$0xff pattern:$0x75316420]
        %v241 = vld.sshfl [vmem:[#allocation1 + $0x8] sm:$0xff pattern:$0x75316420]
        %s242 = scalar_lea.vmem [#allocation1], 16
        %243 = vst [vmem:[%s242] ss:$2 sm:$0xff] %v224
        %v244 = vld.sshfl [vmem:[#allocation1 + $0x10] sm:$0xff pattern:$0x75316420]
        %v245 = vld.sshfl [vmem:[#allocation1 + $0x18] sm:$0xff pattern:$0x75316420]
        %s246 = scalar_lea.vmem [#allocation1], 32
        %247 = vst [vmem:[%s246] ss:$2 sm:$0xff] %v225
        %v248 = vld.sshfl [vmem:[#allocation1 + $0x20] sm:$0xff pattern:$0x75316420]
        %v249 = vld.sshfl [vmem:[#allocation1 + $0x28] sm:$0xff pattern:$0x75316420]
        %s250 = scalar_lea.vmem [#allocation1], 48
        %251 = vst [vmem:[%s250] ss:$2 sm:$0xff] %v226
        %v252 = vld.sshfl [vmem:[#allocation1 + $0x30] sm:$0xff pattern:$0x75316420]
        %v253 = vld.sshfl [vmem:[#allocation1 + $0x38] sm:$0xff pattern:$0x75316420]
        %254 = vst [vmem:[#allocation1] ss:$2 sm:$0xff] %v227
        %v255 = vld.sshfl [vmem:[#allocation1] sm:$0xff pattern:$0x75316420]
        %v256 = vld.sshfl [vmem:[#allocation1 + $0x8] sm:$0xff pattern:$0x75316420]
        %257 = vst [vmem:[%s242] ss:$2 sm:$0xff] %v228
        %v258 = vld.sshfl [vmem:[#allocation1 + $0x10] sm:$0xff pattern:$0x75316420]
        %v259 = vld.sshfl [vmem:[#allocation1 + $0x18] sm:$0xff pattern:$0x75316420]
        %260 = vst [vmem:[%s246] ss:$2 sm:$0xff] %v229
        %v261 = vld.sshfl [vmem:[#allocation1 + $0x20] sm:$0xff pattern:$0x75316420]
        %v262 = vld.sshfl [vmem:[#allocation1 + $0x28] sm:$0xff pattern:$0x75316420]
        %263 = vst [vmem:[%s250] ss:$2 sm:$0xff] %v230
        %v264 = vld.sshfl [vmem:[#allocation1 + $0x30] sm:$0xff pattern:$0x75316420]
        %v265 = vld.sshfl [vmem:[#allocation1 + $0x38] sm:$0xff pattern:$0x75316420]
        %vm282 = vcmask 1042432
        %v283 = vsel %vm282, %v240, 0.0
        %v284 = vrot.slane %v283, 4
        %v285 = vadd.f32 %v283, %v284
        %v286 = vrot.slane %v285, 2
        %v287 = vadd.f32 %v285, %v286
        %v288 = vrot.slane %v287, 1
        %v289 = vadd.f32 %v287, %v288
        %v290 = vsel %vm282, %v241, 0.0
        %v291 = vrot.slane %v290, 4
        %v292 = vadd.f32 %v290, %v291
        %v293 = vrot.slane %v292, 2
        %v294 = vadd.f32 %v292, %v293
        %v295 = vrot.slane %v294, 1
        %v296 = vadd.f32 %v294, %v295
        %v297 = vsel %vm282, %v244, 0.0
        %v298 = vrot.slane %v297, 4
        %v299 = vadd.f32 %v297, %v298
        %v300 = vrot.slane %v299, 2
        %v301 = vadd.f32 %v299, %v300
        %v302 = vrot.slane %v301, 1
        %v303 = vadd.f32 %v301, %v302
        %v304 = vsel %vm282, %v245, 0.0
        %v305 = vrot.slane %v304, 4
        %v306 = vadd.f32 %v304, %v305
        %v307 = vrot.slane %v306, 2
        %v308 = vadd.f32 %v306, %v307
        %v309 = vrot.slane %v308, 1
        %v310 = vadd.f32 %v308, %v309
        %v311 = vsel %vm282, %v248, 0.0
        %v312 = vrot.slane %v311, 4
        %v313 = vadd.f32 %v311, %v312
        %v314 = vrot.slane %v313, 2
        %v315 = vadd.f32 %v313, %v314
        %v316 = vrot.slane %v315, 1
        %v317 = vadd.f32 %v315, %v316
        %v318 = vsel %vm282, %v249, 0.0
        %v319 = vrot.slane %v318, 4
        %v320 = vadd.f32 %v318, %v319
        %v321 = vrot.slane %v320, 2
        %v322 = vadd.f32 %v320, %v321
        %v323 = vrot.slane %v322, 1
        %v324 = vadd.f32 %v322, %v323
        %v325 = vsel %vm282, %v252, 0.0
        %v326 = vrot.slane %v325, 4
        %v327 = vadd.f32 %v325, %v326
        %v328 = vrot.slane %v327, 2
        %v329 = vadd.f32 %v327, %v328
        %v330 = vrot.slane %v329, 1
        %v331 = vadd.f32 %v329, %v330
        %v332 = vsel %vm282, %v253, 0.0
        %v333 = vrot.slane %v332, 4
        %v334 = vadd.f32 %v332, %v333
        %v335 = vrot.slane %v334, 2
        %v336 = vadd.f32 %v334, %v335
        %v337 = vrot.slane %v336, 1
        %v338 = vadd.f32 %v336, %v337
        %v339 = vsel %vm282, %v255, 0.0
        %v340 = vrot.slane %v339, 4
        %v341 = vadd.f32 %v339, %v340
        %v342 = vrot.slane %v341, 2
        %v343 = vadd.f32 %v341, %v342
        %v344 = vrot.slane %v343, 1
        %v345 = vadd.f32 %v343, %v344
        %v346 = vsel %vm282, %v256, 0.0
        %v347 = vrot.slane %v346, 4
        %v348 = vadd.f32 %v346, %v347
        %v349 = vrot.slane %v348, 2
        %v350 = vadd.f32 %v348, %v349
        %v351 = vrot.slane %v350, 1
        %v352 = vadd.f32 %v350, %v351
        %v353 = vsel %vm282, %v258, 0.0
        %v354 = vrot.slane %v353, 4
        %v355 = vadd.f32 %v353, %v354
        %v356 = vrot.slane %v355, 2
        %v357 = vadd.f32 %v355, %v356
        %v358 = vrot.slane %v357, 1
        %v359 = vadd.f32 %v357, %v358
        %v360 = vsel %vm282, %v259, 0.0
        %v361 = vrot.slane %v360, 4
        %v362 = vadd.f32 %v360, %v361
        %v363 = vrot.slane %v362, 2
        %v364 = vadd.f32 %v362, %v363
        %v365 = vrot.slane %v364, 1
        %v366 = vadd.f32 %v364, %v365
        %v367 = vsel %vm282, %v261, 0.0
        %v368 = vrot.slane %v367, 4
        %v369 = vadd.f32 %v367, %v368
        %v370 = vrot.slane %v369, 2
        %v371 = vadd.f32 %v369, %v370
        %v372 = vrot.slane %v371, 1
        %v373 = vadd.f32 %v371, %v372
        %v374 = vsel %vm282, %v262, 0.0
        %v375 = vrot.slane %v374, 4
        %v376 = vadd.f32 %v374, %v375
        %v377 = vrot.slane %v376, 2
        %v378 = vadd.f32 %v376, %v377
        %v379 = vrot.slane %v378, 1
        %v380 = vadd.f32 %v378, %v379
        %v381 = vsel %vm282, %v264, 0.0
        %v382 = vrot.slane %v381, 4
        %v383 = vadd.f32 %v381, %v382
        %v384 = vrot.slane %v383, 2
        %v385 = vadd.f32 %v383, %v384
        %v386 = vrot.slane %v385, 1
        %v387 = vadd.f32 %v385, %v386
        %v388 = vsel %vm282, %v265, 0.0
        %v389 = vrot.slane %v388, 4
        %v390 = vadd.f32 %v388, %v389
        %v391 = vrot.slane %v390, 2
        %v392 = vadd.f32 %v390, %v391
        %v393 = vrot.slane %v392, 1
        %v394 = vadd.f32 %v392, %v393
        %v395 = vmul.f32 %v215, %v215
        %v396 = vmul.f32 %v216, %v216
        %v397 = vmul.f32 %v217, %v217
        %v398 = vmul.f32 %v218, %v218
        %v399 = vmul.f32 %v219, %v219
        %v400 = vmul.f32 %v220, %v220
        %v401 = vmul.f32 %v221, %v221
        %v402 = vmul.f32 %v222, %v222
        %v403 = vsel %vm282, %v395, 0.0
        %v404 = vrot.slane %v403, 4
        %v405 = vadd.f32 %v403, %v404
        %v406 = vrot.slane %v405, 2
        %v407 = vadd.f32 %v405, %v406
        %v408 = vrot.slane %v407, 1
        %v409 = vadd.f32 %v407, %v408
        %v410 = vsel %vm282, %v396, 0.0
        %v411 = vrot.slane %v410, 4
        %v412 = vadd.f32 %v410, %v411
        %v413 = vrot.slane %v412, 2
        %v414 = vadd.f32 %v412, %v413
        %v415 = vrot.slane %v414, 1
        %v416 = vadd.f32 %v414, %v415
        %v417 = vsel %vm282, %v397, 0.0
        %v418 = vrot.slane %v417, 4
        %v419 = vadd.f32 %v417, %v418
        %v420 = vrot.slane %v419, 2
        %v421 = vadd.f32 %v419, %v420
        %v422 = vrot.slane %v421, 1
        %v423 = vadd.f32 %v421, %v422
        %v424 = vsel %vm282, %v398, 0.0
        %v425 = vrot.slane %v424, 4
        %v426 = vadd.f32 %v424, %v425
        %v427 = vrot.slane %v426, 2
        %v428 = vadd.f32 %v426, %v427
        %v429 = vrot.slane %v428, 1
        %v430 = vadd.f32 %v428, %v429
        %v431 = vsel %vm282, %v399, 0.0
        %v432 = vrot.slane %v431, 4
        %v433 = vadd.f32 %v431, %v432
        %v434 = vrot.slane %v433, 2
        %v435 = vadd.f32 %v433, %v434
        %v436 = vrot.slane %v435, 1
        %v437 = vadd.f32 %v435, %v436
        %v438 = vsel %vm282, %v400, 0.0
        %v439 = vrot.slane %v438, 4
        %v440 = vadd.f32 %v438, %v439
        %v441 = vrot.slane %v440, 2
        %v442 = vadd.f32 %v440, %v441
        %v443 = vrot.slane %v442, 1
        %v444 = vadd.f32 %v442, %v443
        %v445 = vsel %vm282, %v401, 0.0
        %v446 = vrot.slane %v445, 4
        %v447 = vadd.f32 %v445, %v446
        %v448 = vrot.slane %v447, 2
        %v449 = vadd.f32 %v447, %v448
        %v450 = vrot.slane %v449, 1
        %v451 = vadd.f32 %v449, %v450
        %v452 = vsel %vm282, %v402, 0.0
        %v453 = vrot.slane %v452, 4
        %v454 = vadd.f32 %v452, %v453
        %v455 = vrot.slane %v454, 2
        %v456 = vadd.f32 %v454, %v455
        %v457 = vrot.slane %v456, 1
        %v458 = vadd.f32 %v456, %v457
        %v459 = vmul.f32 %v207, -2.0
        %v460 = vmul.f32 %v208, -2.0
        %v461 = vmul.f32 %v209, -2.0
        %v462 = vmul.f32 %v210, -2.0
        %v463 = vmul.f32 %v211, -2.0
        %v464 = vmul.f32 %v212, -2.0
        %v465 = vmul.f32 %v213, -2.0
        %v466 = vmul.f32 %v214, -2.0
        %468 = vst [vmem:[#allocation1] ss:$2 sm:$0xff] %v459
        %v469 = vld.sshfl [vmem:[#allocation1] sm:$0xff pattern:$0x75316420]
        %v470 = vld.sshfl [vmem:[#allocation1 + $0x8] sm:$0xff pattern:$0x75316420]
        %473 = vxpose.xlu0.b32.start [1/16] %v469, 128
        %474 = vxpose.xlu0.b32.cont [2/16] 0.0, 128
        %475 = vxpose.xlu0.b32.cont [3/16] 0.0, 128
        %476 = vxpose.xlu0.b32.cont [4/16] 0.0, 128
        %477 = vxpose.xlu0.b32.cont [5/16] 0.0, 128
        %478 = vxpose.xlu0.b32.cont [6/16] 0.0, 128
        %479 = vxpose.xlu0.b32.cont [7/16] 0.0, 128
        %480 = vxpose.xlu0.b32.cont [8/16] 0.0, 128
        %481 = vxpose.xlu0.b32.cont [9/16] 0.0, 128
        %482 = vxpose.xlu0.b32.cont [10/16] 0.0, 128
        %483 = vxpose.xlu0.b32.cont [11/16] 0.0, 128
        %484 = vxpose.xlu0.b32.cont [12/16] 0.0, 128
        %485 = vxpose.xlu0.b32.cont [13/16] 0.0, 128
        %486 = vxpose.xlu0.b32.cont [14/16] 0.0, 128
        %487 = vxpose.xlu0.b32.cont [15/16] 0.0, 128
        %488 = vxpose.xlu0.b32.end [16/16] 0.0, 128
        %v489 = vpop.trf.xlu0
        %v490 = vpop.trf.xlu0
        %v491 = vpop.trf.xlu0
        %v492 = vpop.trf.xlu0
        %v493 = vpop.trf.xlu0
        %v494 = vpop.trf.xlu0
        %v495 = vpop.trf.xlu0
        %v496 = vpop.trf.xlu0
        %v497 = vpop.trf.xlu0
        %v498 = vpop.trf.xlu0
        %v499 = vpop.trf.xlu0
        %v500 = vpop.trf.xlu0
        %v501 = vpop.trf.xlu0
        %v502 = vpop.trf.xlu0
        %v503 = vpop.trf.xlu0
        %v504 = vpop.trf.xlu0
        %505 = vxpose.xlu0.b32.start [1/16] %v470, 128
        %506 = vxpose.xlu0.b32.cont [2/16] 0.0, 128
        %507 = vxpose.xlu0.b32.cont [3/16] 0.0, 128
        %508 = vxpose.xlu0.b32.cont [4/16] 0.0, 128
        %509 = vxpose.xlu0.b32.cont [5/16] 0.0, 128
        %510 = vxpose.xlu0.b32.cont [6/16] 0.0, 128
        %511 = vxpose.xlu0.b32.cont [7/16] 0.0, 128
        %512 = vxpose.xlu0.b32.cont [8/16] 0.0, 128
        %513 = vxpose.xlu0.b32.cont [9/16] 0.0, 128
        %514 = vxpose.xlu0.b32.cont [10/16] 0.0, 128
        %515 = vxpose.xlu0.b32.cont [11/16] 0.0, 128
        %516 = vxpose.xlu0.b32.cont [12/16] 0.0, 128
        %517 = vxpose.xlu0.b32.cont [13/16] 0.0, 128
        %518 = vxpose.xlu0.b32.cont [14/16] 0.0, 128
        %519 = vxpose.xlu0.b32.cont [15/16] 0.0, 128
        %520 = vxpose.xlu0.b32.end [16/16] 0.0, 128
        %v521 = vpop.trf.xlu0
        %v522 = vpop.trf.xlu0
        %v523 = vpop.trf.xlu0
        %v524 = vpop.trf.xlu0
        %v525 = vpop.trf.xlu0
        %v526 = vpop.trf.xlu0
        %v527 = vpop.trf.xlu0
        %v528 = vpop.trf.xlu0
        %v529 = vpop.trf.xlu0
        %v530 = vpop.trf.xlu0
        %v531 = vpop.trf.xlu0
        %v532 = vpop.trf.xlu0
        %v533 = vpop.trf.xlu0
        %v534 = vpop.trf.xlu0
        %v535 = vpop.trf.xlu0
        %v536 = vpop.trf.xlu0
        %vm537 = vcmask 23552
        %v539 = vsel %vm537, %v489, 0
        %v542 = vsel %vm537, %v490, 0
        %v545 = vsel %vm537, %v491, 0
        %v548 = vsel %vm537, %v492, 0
        %v551 = vsel %vm537, %v493, 0
        %v554 = vsel %vm537, %v494, 0
        %v557 = vsel %vm537, %v495, 0
        %v560 = vsel %vm537, %v496, 0
        %v563 = vsel %vm537, %v497, 0
        %v566 = vsel %vm537, %v498, 0
        %v569 = vsel %vm537, %v499, 0
        %v572 = vsel %vm537, %v500, 0
        %v575 = vsel %vm537, %v501, 0
        %v578 = vsel %vm537, %v502, 0
        %v581 = vsel %vm537, %v503, 0
        %v584 = vsel %vm537, %v504, 0
        %v587 = vsel %vm537, %v521, 0
        %v590 = vsel %vm537, %v522, 0
        %v593 = vsel %vm537, %v523, 0
        %v596 = vsel %vm537, %v524, 0
        %v599 = vsel %vm537, %v525, 0
        %v602 = vsel %vm537, %v526, 0
        %v605 = vsel %vm537, %v527, 0
        %v608 = vsel %vm537, %v528, 0
        %v611 = vsel %vm537, %v529, 0
        %v614 = vsel %vm537, %v530, 0
        %v617 = vsel %vm537, %v531, 0
        %v620 = vsel %vm537, %v532, 0
        %v623 = vsel %vm537, %v533, 0
        %v626 = vsel %vm537, %v534, 0
        %v629 = vsel %vm537, %v535, 0
        %v632 = vsel %vm537, %v536, 0
        %v635 = vsel %vm282, %v215, 0
        %637 = vmatpush.msra.mxu0 0.0
        %638 = vmatpush.msra.mxu0 0.0
        %639 = vmatpush.msra.mxu0 0.0
        %640 = vmatpush.msra.mxu0 0.0
        %641 = vmatpush.msra.mxu0 0.0
        %642 = vmatpush.msra.mxu0 0.0
        %643 = vmatpush.msra.mxu0 0.0
        %644 = vmatpush.msra.mxu0 0.0
        %645 = vmatpush.msra.mxu0 0.0
        %646 = vmatpush.msra.mxu0 0.0
        %647 = vmatpush.msra.mxu0 0.0
        %648 = vmatpush.msra.mxu0 0.0
        %649 = vmatpush.msra.mxu0 0.0
        %650 = vmatpush.msra.mxu0 0.0
        %651 = vmatpush.msra.mxu0 0.0
        %652 = vmatpush.msra.mxu0 %v635
        %653 = vmatmul.f32.gmra.mxu0 %v539
        %v654 = vpop.f32.mrf.mxu0
        %v655 = vadd.f32 0.0, %v654
        %656 = vmatmul.f32.gmra.mxu0 %v542
        %v657 = vpop.f32.mrf.mxu0
        %v658 = vadd.f32 0.0, %v657
        %659 = vmatmul.f32.gmra.mxu0 %v545
        %v660 = vpop.f32.mrf.mxu0
        %v661 = vadd.f32 0.0, %v660
        %662 = vmatmul.f32.gmra.mxu0 %v548
        %v663 = vpop.f32.mrf.mxu0
        %v664 = vadd.f32 0.0, %v663
        %665 = vmatmul.f32.gmra.mxu0 %v551
        %v666 = vpop.f32.mrf.mxu0
        %v667 = vadd.f32 0.0, %v666
        %668 = vmatmul.f32.gmra.mxu0 %v554
        %v669 = vpop.f32.mrf.mxu0
        %v670 = vadd.f32 0.0, %v669
        %671 = vmatmul.f32.gmra.mxu0 %v557
        %v672 = vpop.f32.mrf.mxu0
        %v673 = vadd.f32 0.0, %v672
        %674 = vmatmul.f32.gmra.mxu0 %v560
        %v675 = vpop.f32.mrf.mxu0
        %v676 = vadd.f32 0.0, %v675
        %677 = vmatmul.f32.gmra.mxu0 %v563
        %v678 = vpop.f32.mrf.mxu0
        %v679 = vadd.f32 0.0, %v678
        %680 = vmatmul.f32.gmra.mxu0 %v566
        %v681 = vpop.f32.mrf.mxu0
        %v682 = vadd.f32 0.0, %v681
        %683 = vmatmul.f32.gmra.mxu0 %v569
        %v684 = vpop.f32.mrf.mxu0
        %v685 = vadd.f32 0.0, %v684
        %686 = vmatmul.f32.gmra.mxu0 %v572
        %v687 = vpop.f32.mrf.mxu0
        %v688 = vadd.f32 0.0, %v687
        %689 = vmatmul.f32.gmra.mxu0 %v575
        %v690 = vpop.f32.mrf.mxu0
        %v691 = vadd.f32 0.0, %v690
        %692 = vmatmul.f32.gmra.mxu0 %v578
        %v693 = vpop.f32.mrf.mxu0
        %v694 = vadd.f32 0.0, %v693
        %695 = vmatmul.f32.gmra.mxu0 %v581
        %v696 = vpop.f32.mrf.mxu0
        %v697 = vadd.f32 0.0, %v696
        %698 = vmatmul.f32.gmra.mxu0 %v584
        %v699 = vpop.f32.mrf.mxu0
        %v700 = vadd.f32 0.0, %v699
        %701 = vmatmul.f32.gmra.mxu0 %v587
        %v702 = vpop.f32.mrf.mxu0
        %v703 = vadd.f32 0.0, %v702
        %704 = vmatmul.f32.gmra.mxu0 %v590
        %v705 = vpop.f32.mrf.mxu0
        %v706 = vadd.f32 0.0, %v705
        %707 = vmatmul.f32.gmra.mxu0 %v593
        %v708 = vpop.f32.mrf.mxu0
        %v709 = vadd.f32 0.0, %v708
        %710 = vmatmul.f32.gmra.mxu0 %v596
        %v711 = vpop.f32.mrf.mxu0
        %v712 = vadd.f32 0.0, %v711
        %713 = vmatmul.f32.gmra.mxu0 %v599
        %v714 = vpop.f32.mrf.mxu0
        %v715 = vadd.f32 0.0, %v714
        %716 = vmatmul.f32.gmra.mxu0 %v602
        %v717 = vpop.f32.mrf.mxu0
        %v718 = vadd.f32 0.0, %v717
        %719 = vmatmul.f32.gmra.mxu0 %v605
        %v720 = vpop.f32.mrf.mxu0
        %v721 = vadd.f32 0.0, %v720
        %722 = vmatmul.f32.gmra.mxu0 %v608
        %v723 = vpop.f32.mrf.mxu0
        %v724 = vadd.f32 0.0, %v723
        %725 = vmatmul.f32.gmra.mxu0 %v611
        %v726 = vpop.f32.mrf.mxu0
        %v727 = vadd.f32 0.0, %v726
        %728 = vmatmul.f32.gmra.mxu0 %v614
        %v729 = vpop.f32.mrf.mxu0
        %v730 = vadd.f32 0.0, %v729
        %731 = vmatmul.f32.gmra.mxu0 %v617
        %v732 = vpop.f32.mrf.mxu0
        %v733 = vadd.f32 0.0, %v732
        %734 = vmatmul.f32.gmra.mxu0 %v620
        %v735 = vpop.f32.mrf.mxu0
        %v736 = vadd.f32 0.0, %v735
        %737 = vmatmul.f32.gmra.mxu0 %v623
        %v738 = vpop.f32.mrf.mxu0
        %v739 = vadd.f32 0.0, %v738
        %740 = vmatmul.f32.gmra.mxu0 %v626
        %v741 = vpop.f32.mrf.mxu0
        %v742 = vadd.f32 0.0, %v741
        %743 = vmatmul.f32.gmra.mxu0 %v629
        %v744 = vpop.f32.mrf.mxu0
        %v745 = vadd.f32 0.0, %v744
        %746 = vmatmul.f32.gmra.mxu0 %v632
        %v747 = vpop.f32.mrf.mxu0
        %v748 = vadd.f32 0.0, %v747
        %749 = vdwg.mxu0
        %751 = vst [vmem:[#allocation1] ss:$2 sm:$0xff] %v460
        %v752 = vld.sshfl [vmem:[#allocation1] sm:$0xff pattern:$0x75316420]
        %v753 = vld.sshfl [vmem:[#allocation1 + $0x8] sm:$0xff pattern:$0x75316420]
        %756 = vxpose.xlu0.b32.start [1/16] %v752, 128
        %757 = vxpose.xlu0.b32.cont [2/16] 0.0, 128
        %758 = vxpose.xlu0.b32.cont [3/16] 0.0, 128
        %759 = vxpose.xlu0.b32.cont [4/16] 0.0, 128
        %760 = vxpose.xlu0.b32.cont [5/16] 0.0, 128
        %761 = vxpose.xlu0.b32.cont [6/16] 0.0, 128
        %762 = vxpose.xlu0.b32.cont [7/16] 0.0, 128
        %763 = vxpose.xlu0.b32.cont [8/16] 0.0, 128
        %764 = vxpose.xlu0.b32.cont [9/16] 0.0, 128
        %765 = vxpose.xlu0.b32.cont [10/16] 0.0, 128
        %766 = vxpose.xlu0.b32.cont [11/16] 0.0, 128
        %767 = vxpose.xlu0.b32.cont [12/16] 0.0, 128
        %768 = vxpose.xlu0.b32.cont [13/16] 0.0, 128
        %769 = vxpose.xlu0.b32.cont [14/16] 0.0, 128
        %770 = vxpose.xlu0.b32.cont [15/16] 0.0, 128
        %771 = vxpose.xlu0.b32.end [16/16] 0.0, 128
        %v772 = vpop.trf.xlu0
        %v773 = vpop.trf.xlu0
        %v774 = vpop.trf.xlu0
        %v775 = vpop.trf.xlu0
        %v776 = vpop.trf.xlu0
        %v777 = vpop.trf.xlu0
        %v778 = vpop.trf.xlu0
        %v779 = vpop.trf.xlu0
        %v780 = vpop.trf.xlu0
        %v781 = vpop.trf.xlu0
        %v782 = vpop.trf.xlu0
        %v783 = vpop.trf.xlu0
        %v784 = vpop.trf.xlu0
        %v785 = vpop.trf.xlu0
        %v786 = vpop.trf.xlu0
        %v787 = vpop.trf.xlu0
        %788 = vxpose.xlu0.b32.start [1/16] %v753, 128
        %789 = vxpose.xlu0.b32.cont [2/16] 0.0, 128
        %790 = vxpose.xlu0.b32.cont [3/16] 0.0, 128
        %791 = vxpose.xlu0.b32.cont [4/16] 0.0, 128
        %792 = vxpose.xlu0.b32.cont [5/16] 0.0, 128
        %793 = vxpose.xlu0.b32.cont [6/16] 0.0, 128
        %794 = vxpose.xlu0.b32.cont [7/16] 0.0, 128
        %795 = vxpose.xlu0.b32.cont [8/16] 0.0, 128
        %796 = vxpose.xlu0.b32.cont [9/16] 0.0, 128
        %797 = vxpose.xlu0.b32.cont [10/16] 0.0, 128
        %798 = vxpose.xlu0.b32.cont [11/16] 0.0, 128
        %799 = vxpose.xlu0.b32.cont [12/16] 0.0, 128
        %800 = vxpose.xlu0.b32.cont [13/16] 0.0, 128
        %801 = vxpose.xlu0.b32.cont [14/16] 0.0, 128
        %802 = vxpose.xlu0.b32.cont [15/16] 0.0, 128
        %803 = vxpose.xlu0.b32.end [16/16] 0.0, 128
        %v804 = vpop.trf.xlu0
        %v805 = vpop.trf.xlu0
        %v806 = vpop.trf.xlu0
        %v807 = vpop.trf.xlu0
        %v808 = vpop.trf.xlu0
        %v809 = vpop.trf.xlu0
        %v810 = vpop.trf.xlu0
        %v811 = vpop.trf.xlu0
        %v812 = vpop.trf.xlu0
        %v813 = vpop.trf.xlu0
        %v814 = vpop.trf.xlu0
        %v815 = vpop.trf.xlu0
        %v816 = vpop.trf.xlu0
        %v817 = vpop.trf.xlu0
        %v818 = vpop.trf.xlu0
        %v819 = vpop.trf.xlu0
        %v821 = vsel %vm537, %v772, 0
        %v824 = vsel %vm537, %v773, 0
        %v827 = vsel %vm537, %v774, 0
        %v830 = vsel %vm537, %v775, 0
        %v833 = vsel %vm537, %v776, 0
        %v836 = vsel %vm537, %v777, 0
        %v839 = vsel %vm537, %v778, 0
        %v842 = vsel %vm537, %v779, 0
        %v845 = vsel %vm537, %v780, 0
        %v848 = vsel %vm537, %v781, 0
        %v851 = vsel %vm537, %v782, 0
        %v854 = vsel %vm537, %v783, 0
        %v857 = vsel %vm537, %v784, 0
        %v860 = vsel %vm537, %v785, 0
        %v863 = vsel %vm537, %v786, 0
        %v866 = vsel %vm537, %v787, 0
        %v869 = vsel %vm537, %v804, 0
        %v872 = vsel %vm537, %v805, 0
        %v875 = vsel %vm537, %v806, 0
        %v878 = vsel %vm537, %v807, 0
        %v881 = vsel %vm537, %v808, 0
        %v884 = vsel %vm537, %v809, 0
        %v887 = vsel %vm537, %v810, 0
        %v890 = vsel %vm537, %v811, 0
        %v893 = vsel %vm537, %v812, 0
        %v896 = vsel %vm537, %v813, 0
        %v899 = vsel %vm537, %v814, 0
        %v902 = vsel %vm537, %v815, 0
        %v905 = vsel %vm537, %v816, 0
        %v908 = vsel %vm537, %v817, 0
        %v911 = vsel %vm537, %v818, 0
        %v914 = vsel %vm537, %v819, 0
        %v917 = vsel %vm282, %v216, 0
        %919 = vmatpush.msra.mxu0 0.0
        %920 = vmatpush.msra.mxu0 0.0
        %921 = vmatpush.msra.mxu0 0.0
        %922 = vmatpush.msra.mxu0 0.0
        %923 = vmatpush.msra.mxu0 0.0
        %924 = vmatpush.msra.mxu0 0.0
        %925 = vmatpush.msra.mxu0 0.0
        %926 = vmatpush.msra.mxu0 0.0
        %927 = vmatpush.msra.mxu0 0.0
        %928 = vmatpush.msra.mxu0 0.0
        %929 = vmatpush.msra.mxu0 0.0
        %930 = vmatpush.msra.mxu0 0.0
        %931 = vmatpush.msra.mxu0 0.0
        %932 = vmatpush.msra.mxu0 0.0
        %933 = vmatpush.msra.mxu0 0.0
        %934 = vmatpush.msra.mxu0 %v917
        %935 = vmatmul.f32.gmra.mxu0 %v821
        %v936 = vpop.f32.mrf.mxu0
        %v937 = vadd.f32 0.0, %v936
        %938 = vmatmul.f32.gmra.mxu0 %v824
        %v939 = vpop.f32.mrf.mxu0
        %v940 = vadd.f32 0.0, %v939
        %941 = vmatmul.f32.gmra.mxu0 %v827
        %v942 = vpop.f32.mrf.mxu0
        %v943 = vadd.f32 0.0, %v942
        %944 = vmatmul.f32.gmra.mxu0 %v830
        %v945 = vpop.f32.mrf.mxu0
        %v946 = vadd.f32 0.0, %v945
        %947 = vmatmul.f32.gmra.mxu0 %v833
        %v948 = vpop.f32.mrf.mxu0
        %v949 = vadd.f32 0.0, %v948
        %950 = vmatmul.f32.gmra.mxu0 %v836
        %v951 = vpop.f32.mrf.mxu0
        %v952 = vadd.f32 0.0, %v951
        %953 = vmatmul.f32.gmra.mxu0 %v839
        %v954 = vpop.f32.mrf.mxu0
        %v955 = vadd.f32 0.0, %v954
        %956 = vmatmul.f32.gmra.mxu0 %v842
        %v957 = vpop.f32.mrf.mxu0
        %v958 = vadd.f32 0.0, %v957
        %959 = vmatmul.f32.gmra.mxu0 %v845
        %v960 = vpop.f32.mrf.mxu0
        %v961 = vadd.f32 0.0, %v960
        %962 = vmatmul.f32.gmra.mxu0 %v848
        %v963 = vpop.f32.mrf.mxu0
        %v964 = vadd.f32 0.0, %v963
        %965 = vmatmul.f32.gmra.mxu0 %v851
        %v966 = vpop.f32.mrf.mxu0
        %v967 = vadd.f32 0.0, %v966
        %968 = vmatmul.f32.gmra.mxu0 %v854
        %v969 = vpop.f32.mrf.mxu0
        %v970 = vadd.f32 0.0, %v969
        %971 = vmatmul.f32.gmra.mxu0 %v857
        %v972 = vpop.f32.mrf.mxu0
        %v973 = vadd.f32 0.0, %v972
        %974 = vmatmul.f32.gmra.mxu0 %v860
        %v975 = vpop.f32.mrf.mxu0
        %v976 = vadd.f32 0.0, %v975
        %977 = vmatmul.f32.gmra.mxu0 %v863
        %v978 = vpop.f32.mrf.mxu0
        %v979 = vadd.f32 0.0, %v978
        %980 = vmatmul.f32.gmra.mxu0 %v866
        %v981 = vpop.f32.mrf.mxu0
        %v982 = vadd.f32 0.0, %v981
        %983 = vmatmul.f32.gmra.mxu0 %v869
        %v984 = vpop.f32.mrf.mxu0
        %v985 = vadd.f32 0.0, %v984
        %986 = vmatmul.f32.gmra.mxu0 %v872
        %v987 = vpop.f32.mrf.mxu0
        %v988 = vadd.f32 0.0, %v987
        %989 = vmatmul.f32.gmra.mxu0 %v875
        %v990 = vpop.f32.mrf.mxu0
        %v991 = vadd.f32 0.0, %v990
        %992 = vmatmul.f32.gmra.mxu0 %v878
        %v993 = vpop.f32.mrf.mxu0
        %v994 = vadd.f32 0.0, %v993
        %995 = vmatmul.f32.gmra.mxu0 %v881
        %v996 = vpop.f32.mrf.mxu0
        %v997 = vadd.f32 0.0, %v996
        %998 = vmatmul.f32.gmra.mxu0 %v884
        %v999 = vpop.f32.mrf.mxu0
        %v1000 = vadd.f32 0.0, %v999
        %1001 = vmatmul.f32.gmra.mxu0 %v887
        %v1002 = vpop.f32.mrf.mxu0
        %v1003 = vadd.f32 0.0, %v1002
        %1004 = vmatmul.f32.gmra.mxu0 %v890
        %v1005 = vpop.f32.mrf.mxu0
        %v1006 = vadd.f32 0.0, %v1005
        %1007 = vmatmul.f32.gmra.mxu0 %v893
        %v1008 = vpop.f32.mrf.mxu0
        %v1009 = vadd.f32 0.0, %v1008
        %1010 = vmatmul.f32.gmra.mxu0 %v896
        %v1011 = vpop.f32.mrf.mxu0
        %v1012 = vadd.f32 0.0, %v1011
        %1013 = vmatmul.f32.gmra.mxu0 %v899
        %v1014 = vpop.f32.mrf.mxu0
        %v1015 = vadd.f32 0.0, %v1014
        %1016 = vmatmul.f32.gmra.mxu0 %v902
        %v1017 = vpop.f32.mrf.mxu0
        %v1018 = vadd.f32 0.0, %v1017
        %1019 = vmatmul.f32.gmra.mxu0 %v905
        %v1020 = vpop.f32.mrf.mxu0
        %v1021 = vadd.f32 0.0, %v1020
        %1022 = vmatmul.f32.gmra.mxu0 %v908
        %v1023 = vpop.f32.mrf.mxu0
        %v1024 = vadd.f32 0.0, %v1023
        %1025 = vmatmul.f32.gmra.mxu0 %v911
        %v1026 = vpop.f32.mrf.mxu0
        %v1027 = vadd.f32 0.0, %v1026
        %1028 = vmatmul.f32.gmra.mxu0 %v914
        %v1029 = vpop.f32.mrf.mxu0
        %v1030 = vadd.f32 0.0, %v1029
        %1031 = vdwg.mxu0
        %1033 = vst [vmem:[#allocation1] ss:$2 sm:$0xff] %v461
        %v1034 = vld.sshfl [vmem:[#allocation1] sm:$0xff pattern:$0x75316420]
        %v1035 = vld.sshfl [vmem:[#allocation1 + $0x8] sm:$0xff pattern:$0x75316420]
        %1038 = vxpose.xlu0.b32.start [1/16] %v1034, 128
        %1039 = vxpose.xlu0.b32.cont [2/16] 0.0, 128
        %1040 = vxpose.xlu0.b32.cont [3/16] 0.0, 128
        %1041 = vxpose.xlu0.b32.cont [4/16] 0.0, 128
        %1042 = vxpose.xlu0.b32.cont [5/16] 0.0, 128
        %1043 = vxpose.xlu0.b32.cont [6/16] 0.0, 128
        %1044 = vxpose.xlu0.b32.cont [7/16] 0.0, 128
        %1045 = vxpose.xlu0.b32.cont [8/16] 0.0, 128
        %1046 = vxpose.xlu0.b32.cont [9/16] 0.0, 128
        %1047 = vxpose.xlu0.b32.cont [10/16] 0.0, 128
        %1048 = vxpose.xlu0.b32.cont [11/16] 0.0, 128
        %1049 = vxpose.xlu0.b32.cont [12/16] 0.0, 128
        %1050 = vxpose.xlu0.b32.cont [13/16] 0.0, 128
        %1051 = vxpose.xlu0.b32.cont [14/16] 0.0, 128
        %1052 = vxpose.xlu0.b32.cont [15/16] 0.0, 128
        %1053 = vxpose.xlu0.b32.end [16/16] 0.0, 128
        %v1054 = vpop.trf.xlu0
        %v1055 = vpop.trf.xlu0
        %v1056 = vpop.trf.xlu0
        %v1057 = vpop.trf.xlu0
        %v1058 = vpop.trf.xlu0
        %v1059 = vpop.trf.xlu0
        %v1060 = vpop.trf.xlu0
        %v1061 = vpop.trf.xlu0
        %v1062 = vpop.trf.xlu0
        %v1063 = vpop.trf.xlu0
        %v1064 = vpop.trf.xlu0
        %v1065 = vpop.trf.xlu0
        %v1066 = vpop.trf.xlu0
        %v1067 = vpop.trf.xlu0
        %v1068 = vpop.trf.xlu0
        %v1069 = vpop.trf.xlu0
        %1070 = vxpose.xlu0.b32.start [1/16] %v1035, 128
        %1071 = vxpose.xlu0.b32.cont [2/16] 0.0, 128
        %1072 = vxpose.xlu0.b32.cont [3/16] 0.0, 128
        %1073 = vxpose.xlu0.b32.cont [4/16] 0.0, 128
        %1074 = vxpose.xlu0.b32.cont [5/16] 0.0, 128
        %1075 = vxpose.xlu0.b32.cont [6/16] 0.0, 128
        %1076 = vxpose.xlu0.b32.cont [7/16] 0.0, 128
        %1077 = vxpose.xlu0.b32.cont [8/16] 0.0, 128
        %1078 = vxpose.xlu0.b32.cont [9/16] 0.0, 128
        %1079 = vxpose.xlu0.b32.cont [10/16] 0.0, 128
        %1080 = vxpose.xlu0.b32.cont [11/16] 0.0, 128
        %1081 = vxpose.xlu0.b32.cont [12/16] 0.0, 128
        %1082 = vxpose.xlu0.b32.cont [13/16] 0.0, 128
        %1083 = vxpose.xlu0.b32.cont [14/16] 0.0, 128
        %1084 = vxpose.xlu0.b32.cont [15/16] 0.0, 128
        %1085 = vxpose.xlu0.b32.end [16/16] 0.0, 128
        %v1086 = vpop.trf.xlu0
        %v1087 = vpop.trf.xlu0
        %v1088 = vpop.trf.xlu0
        %v1089 = vpop.trf.xlu0
        %v1090 = vpop.trf.xlu0
        %v1091 = vpop.trf.xlu0
        %v1092 = vpop.trf.xlu0
        %v1093 = vpop.trf.xlu0
        %v1094 = vpop.trf.xlu0
        %v1095 = vpop.trf.xlu0
        %v1096 = vpop.trf.xlu0
        %v1097 = vpop.trf.xlu0
        %v1098 = vpop.trf.xlu0
        %v1099 = vpop.trf.xlu0
        %v1100 = vpop.trf.xlu0
        %v1101 = vpop.trf.xlu0
        %v1103 = vsel %vm537, %v1054, 0
        %v1106 = vsel %vm537, %v1055, 0
        %v1109 = vsel %vm537, %v1056, 0
        %v1112 = vsel %vm537, %v1057, 0
        %v1115 = vsel %vm537, %v1058, 0
        %v1118 = vsel %vm537, %v1059, 0
        %v1121 = vsel %vm537, %v1060, 0
        %v1124 = vsel %vm537, %v1061, 0
        %v1127 = vsel %vm537, %v1062, 0
        %v1130 = vsel %vm537, %v1063, 0
        %v1133 = vsel %vm537, %v1064, 0
        %v1136 = vsel %vm537, %v1065, 0
        %v1139 = vsel %vm537, %v1066, 0
        %v1142 = vsel %vm537, %v1067, 0
        %v1145 = vsel %vm537, %v1068, 0
        %v1148 = vsel %vm537, %v1069, 0
        %v1151 = vsel %vm537, %v1086, 0
        %v1154 = vsel %vm537, %v1087, 0
        %v1157 = vsel %vm537, %v1088, 0
        %v1160 = vsel %vm537, %v1089, 0
        %v1163 = vsel %vm537, %v1090, 0
        %v1166 = vsel %vm537, %v1091, 0
        %v1169 = vsel %vm537, %v1092, 0
        %v1172 = vsel %vm537, %v1093, 0
        %v1175 = vsel %vm537, %v1094, 0
        %v1178 = vsel %vm537, %v1095, 0
        %v1181 = vsel %vm537, %v1096, 0
        %v1184 = vsel %vm537, %v1097, 0
        %v1187 = vsel %vm537, %v1098, 0
        %v1190 = vsel %vm537, %v1099, 0
        %v1193 = vsel %vm537, %v1100, 0
        %v1196 = vsel %vm537, %v1101, 0
        %v1199 = vsel %vm282, %v217, 0
        %1201 = vmatpush.msra.mxu0 0.0
        %1202 = vmatpush.msra.mxu0 0.0
        %1203 = vmatpush.msra.mxu0 0.0
        %1204 = vmatpush.msra.mxu0 0.0
        %1205 = vmatpush.msra.mxu0 0.0
        %1206 = vmatpush.msra.mxu0 0.0
        %1207 = vmatpush.msra.mxu0 0.0
        %1208 = vmatpush.msra.mxu0 0.0
        %1209 = vmatpush.msra.mxu0 0.0
        %1210 = vmatpush.msra.mxu0 0.0
        %1211 = vmatpush.msra.mxu0 0.0
        %1212 = vmatpush.msra.mxu0 0.0
        %1213 = vmatpush.msra.mxu0 0.0
        %1214 = vmatpush.msra.mxu0 0.0
        %1215 = vmatpush.msra.mxu0 0.0
        %1216 = vmatpush.msra.mxu0 %v1199
        %1217 = vmatmul.f32.gmra.mxu0 %v1103
        %v1218 = vpop.f32.mrf.mxu0
        %v1219 = vadd.f32 0.0, %v1218
        %1220 = vmatmul.f32.gmra.mxu0 %v1106
        %v1221 = vpop.f32.mrf.mxu0
        %v1222 = vadd.f32 0.0, %v1221
        %1223 = vmatmul.f32.gmra.mxu0 %v1109
        %v1224 = vpop.f32.mrf.mxu0
        %v1225 = vadd.f32 0.0, %v1224
        %1226 = vmatmul.f32.gmra.mxu0 %v1112
        %v1227 = vpop.f32.mrf.mxu0
        %v1228 = vadd.f32 0.0, %v1227
        %1229 = vmatmul.f32.gmra.mxu0 %v1115
        %v1230 = vpop.f32.mrf.mxu0
        %v1231 = vadd.f32 0.0, %v1230
        %1232 = vmatmul.f32.gmra.mxu0 %v1118
        %v1233 = vpop.f32.mrf.mxu0
        %v1234 = vadd.f32 0.0, %v1233
        %1235 = vmatmul.f32.gmra.mxu0 %v1121
        %v1236 = vpop.f32.mrf.mxu0
        %v1237 = vadd.f32 0.0, %v1236
        %1238 = vmatmul.f32.gmra.mxu0 %v1124
        %v1239 = vpop.f32.mrf.mxu0
        %v1240 = vadd.f32 0.0, %v1239
        %1241 = vmatmul.f32.gmra.mxu0 %v1127
        %v1242 = vpop.f32.mrf.mxu0
        %v1243 = vadd.f32 0.0, %v1242
        %1244 = vmatmul.f32.gmra.mxu0 %v1130
        %v1245 = vpop.f32.mrf.mxu0
        %v1246 = vadd.f32 0.0, %v1245
        %1247 = vmatmul.f32.gmra.mxu0 %v1133
        %v1248 = vpop.f32.mrf.mxu0
        %v1249 = vadd.f32 0.0, %v1248
        %1250 = vmatmul.f32.gmra.mxu0 %v1136
        %v1251 = vpop.f32.mrf.mxu0
        %v1252 = vadd.f32 0.0, %v1251
        %1253 = vmatmul.f32.gmra.mxu0 %v1139
        %v1254 = vpop.f32.mrf.mxu0
        %v1255 = vadd.f32 0.0, %v1254
        %1256 = vmatmul.f32.gmra.mxu0 %v1142
        %v1257 = vpop.f32.mrf.mxu0
        %v1258 = vadd.f32 0.0, %v1257
        %1259 = vmatmul.f32.gmra.mxu0 %v1145
        %v1260 = vpop.f32.mrf.mxu0
        %v1261 = vadd.f32 0.0, %v1260
        %1262 = vmatmul.f32.gmra.mxu0 %v1148
        %v1263 = vpop.f32.mrf.mxu0
        %v1264 = vadd.f32 0.0, %v1263
        %1265 = vmatmul.f32.gmra.mxu0 %v1151
        %v1266 = vpop.f32.mrf.mxu0
        %v1267 = vadd.f32 0.0, %v1266
        %1268 = vmatmul.f32.gmra.mxu0 %v1154
        %v1269 = vpop.f32.mrf.mxu0
        %v1270 = vadd.f32 0.0, %v1269
        %1271 = vmatmul.f32.gmra.mxu0 %v1157
        %v1272 = vpop.f32.mrf.mxu0
        %v1273 = vadd.f32 0.0, %v1272
        %1274 = vmatmul.f32.gmra.mxu0 %v1160
        %v1275 = vpop.f32.mrf.mxu0
        %v1276 = vadd.f32 0.0, %v1275
        %1277 = vmatmul.f32.gmra.mxu0 %v1163
        %v1278 = vpop.f32.mrf.mxu0
        %v1279 = vadd.f32 0.0, %v1278
        %1280 = vmatmul.f32.gmra.mxu0 %v1166
        %v1281 = vpop.f32.mrf.mxu0
        %v1282 = vadd.f32 0.0, %v1281
        %1283 = vmatmul.f32.gmra.mxu0 %v1169
        %v1284 = vpop.f32.mrf.mxu0
        %v1285 = vadd.f32 0.0, %v1284
        %1286 = vmatmul.f32.gmra.mxu0 %v1172
        %v1287 = vpop.f32.mrf.mxu0
        %v1288 = vadd.f32 0.0, %v1287
        %1289 = vmatmul.f32.gmra.mxu0 %v1175
        %v1290 = vpop.f32.mrf.mxu0
        %v1291 = vadd.f32 0.0, %v1290
        %1292 = vmatmul.f32.gmra.mxu0 %v1178
        %v1293 = vpop.f32.mrf.mxu0
        %v1294 = vadd.f32 0.0, %v1293
        %1295 = vmatmul.f32.gmra.mxu0 %v1181
        %v1296 = vpop.f32.mrf.mxu0
        %v1297 = vadd.f32 0.0, %v1296
        %1298 = vmatmul.f32.gmra.mxu0 %v1184
        %v1299 = vpop.f32.mrf.mxu0
        %v1300 = vadd.f32 0.0, %v1299
        %1301 = vmatmul.f32.gmra.mxu0 %v1187
        %v1302 = vpop.f32.mrf.mxu0
        %v1303 = vadd.f32 0.0, %v1302
        %1304 = vmatmul.f32.gmra.mxu0 %v1190
        %v1305 = vpop.f32.mrf.mxu0
        %v1306 = vadd.f32 0.0, %v1305
        %1307 = vmatmul.f32.gmra.mxu0 %v1193
        %v1308 = vpop.f32.mrf.mxu0
        %v1309 = vadd.f32 0.0, %v1308
        %1310 = vmatmul.f32.gmra.mxu0 %v1196
        %v1311 = vpop.f32.mrf.mxu0
        %v1312 = vadd.f32 0.0, %v1311
        %1313 = vdwg.mxu0
        %1315 = vst [vmem:[#allocation1] ss:$2 sm:$0xff] %v462
        %v1316 = vld.sshfl [vmem:[#allocation1] sm:$0xff pattern:$0x75316420]
        %v1317 = vld.sshfl [vmem:[#allocation1 + $0x8] sm:$0xff pattern:$0x75316420]
        %1320 = vxpose.xlu0.b32.start [1/16] %v1316, 128
        %1321 = vxpose.xlu0.b32.cont [2/16] 0.0, 128
        %1322 = vxpose.xlu0.b32.cont [3/16] 0.0, 128
        %1323 = vxpose.xlu0.b32.cont [4/16] 0.0, 128
        %1324 = vxpose.xlu0.b32.cont [5/16] 0.0, 128
        %1325 = vxpose.xlu0.b32.cont [6/16] 0.0, 128
        %1326 = vxpose.xlu0.b32.cont [7/16] 0.0, 128
        %1327 = vxpose.xlu0.b32.cont [8/16] 0.0, 128
        %1328 = vxpose.xlu0.b32.cont [9/16] 0.0, 128
        %1329 = vxpose.xlu0.b32.cont [10/16] 0.0, 128
        %1330 = vxpose.xlu0.b32.cont [11/16] 0.0, 128
        %1331 = vxpose.xlu0.b32.cont [12/16] 0.0, 128
        %1332 = vxpose.xlu0.b32.cont [13/16] 0.0, 128
        %1333 = vxpose.xlu0.b32.cont [14/16] 0.0, 128
        %1334 = vxpose.xlu0.b32.cont [15/16] 0.0, 128
        %1335 = vxpose.xlu0.b32.end [16/16] 0.0, 128
        %v1336 = vpop.trf.xlu0
        %v1337 = vpop.trf.xlu0
        %v1338 = vpop.trf.xlu0
        %v1339 = vpop.trf.xlu0
        %v1340 = vpop.trf.xlu0
        %v1341 = vpop.trf.xlu0
        %v1342 = vpop.trf.xlu0
        %v1343 = vpop.trf.xlu0
        %v1344 = vpop.trf.xlu0
        %v1345 = vpop.trf.xlu0
        %v1346 = vpop.trf.xlu0
        %v1347 = vpop.trf.xlu0
        %v1348 = vpop.trf.xlu0
        %v1349 = vpop.trf.xlu0
        %v1350 = vpop.trf.xlu0
        %v1351 = vpop.trf.xlu0
        %1352 = vxpose.xlu0.b32.start [1/16] %v1317, 128
        %1353 = vxpose.xlu0.b32.cont [2/16] 0.0, 128
        %1354 = vxpose.xlu0.b32.cont [3/16] 0.0, 128
        %1355 = vxpose.xlu0.b32.cont [4/16] 0.0, 128
        %1356 = vxpose.xlu0.b32.cont [5/16] 0.0, 128
        %1357 = vxpose.xlu0.b32.cont [6/16] 0.0, 128
        %1358 = vxpose.xlu0.b32.cont [7/16] 0.0, 128
        %1359 = vxpose.xlu0.b32.cont [8/16] 0.0, 128
        %1360 = vxpose.xlu0.b32.cont [9/16] 0.0, 128
        %1361 = vxpose.xlu0.b32.cont [10/16] 0.0, 128
        %1362 = vxpose.xlu0.b32.cont [11/16] 0.0, 128
        %1363 = vxpose.xlu0.b32.cont [12/16] 0.0, 128
        %1364 = vxpose.xlu0.b32.cont [13/16] 0.0, 128
        %1365 = vxpose.xlu0.b32.cont [14/16] 0.0, 128
        %1366 = vxpose.xlu0.b32.cont [15/16] 0.0, 128
        %1367 = vxpose.xlu0.b32.end [16/16] 0.0, 128
        %v1368 = vpop.trf.xlu0
        %v1369 = vpop.trf.xlu0
        %v1370 = vpop.trf.xlu0
        %v1371 = vpop.trf.xlu0
        %v1372 = vpop.trf.xlu0
        %v1373 = vpop.trf.xlu0
        %v1374 = vpop.trf.xlu0
        %v1375 = vpop.trf.xlu0
        %v1376 = vpop.trf.xlu0
        %v1377 = vpop.trf.xlu0
        %v1378 = vpop.trf.xlu0
        %v1379 = vpop.trf.xlu0
        %v1380 = vpop.trf.xlu0
        %v1381 = vpop.trf.xlu0
        %v1382 = vpop.trf.xlu0
        %v1383 = vpop.trf.xlu0
        %v1385 = vsel %vm537, %v1336, 0
        %v1388 = vsel %vm537, %v1337, 0
        %v1391 = vsel %vm537, %v1338, 0
        %v1394 = vsel %vm537, %v1339, 0
        %v1397 = vsel %vm537, %v1340, 0
        %v1400 = vsel %vm537, %v1341, 0
        %v1403 = vsel %vm537, %v1342, 0
        %v1406 = vsel %vm537, %v1343, 0
        %v1409 = vsel %vm537, %v1344, 0
        %v1412 = vsel %vm537, %v1345, 0
        %v1415 = vsel %vm537, %v1346, 0
        %v1418 = vsel %vm537, %v1347, 0
        %v1421 = vsel %vm537, %v1348, 0
        %v1424 = vsel %vm537, %v1349, 0
        %v1427 = vsel %vm537, %v1350, 0
        %v1430 = vsel %vm537, %v1351, 0
        %v1433 = vsel %vm537, %v1368, 0
        %v1436 = vsel %vm537, %v1369, 0
        %v1439 = vsel %vm537, %v1370, 0
        %v1442 = vsel %vm537, %v1371, 0
        %v1445 = vsel %vm537, %v1372, 0
        %v1448 = vsel %vm537, %v1373, 0
        %v1451 = vsel %vm537, %v1374, 0
        %v1454 = vsel %vm537, %v1375, 0
        %v1457 = vsel %vm537, %v1376, 0
        %v1460 = vsel %vm537, %v1377, 0
        %v1463 = vsel %vm537, %v1378, 0
        %v1466 = vsel %vm537, %v1379, 0
        %v1469 = vsel %vm537, %v1380, 0
        %v1472 = vsel %vm537, %v1381, 0
        %v1475 = vsel %vm537, %v1382, 0
        %v1478 = vsel %vm537, %v1383, 0
        %v1481 = vsel %vm282, %v218, 0
        %1483 = vmatpush.msra.mxu0 0.0
        %1484 = vmatpush.msra.mxu0 0.0
        %1485 = vmatpush.msra.mxu0 0.0
        %1486 = vmatpush.msra.mxu0 0.0
        %1487 = vmatpush.msra.mxu0 0.0
        %1488 = vmatpush.msra.mxu0 0.0
        %1489 = vmatpush.msra.mxu0 0.0
        %1490 = vmatpush.msra.mxu0 0.0
        %1491 = vmatpush.msra.mxu0 0.0
        %1492 = vmatpush.msra.mxu0 0.0
        %1493 = vmatpush.msra.mxu0 0.0
        %1494 = vmatpush.msra.mxu0 0.0
        %1495 = vmatpush.msra.mxu0 0.0
        %1496 = vmatpush.msra.mxu0 0.0
        %1497 = vmatpush.msra.mxu0 0.0
        %1498 = vmatpush.msra.mxu0 %v1481
        %1499 = vmatmul.f32.gmra.mxu0 %v1385
        %v1500 = vpop.f32.mrf.mxu0
        %v1501 = vadd.f32 0.0, %v1500
        %1502 = vmatmul.f32.gmra.mxu0 %v1388
        %v1503 = vpop.f32.mrf.mxu0
        %v1504 = vadd.f32 0.0, %v1503
        %1505 = vmatmul.f32.gmra.mxu0 %v1391
        %v1506 = vpop.f32.mrf.mxu0
        %v1507 = vadd.f32 0.0, %v1506
        %1508 = vmatmul.f32.gmra.mxu0 %v1394
        %v1509 = vpop.f32.mrf.mxu0
        %v1510 = vadd.f32 0.0, %v1509
        %1511 = vmatmul.f32.gmra.mxu0 %v1397
        %v1512 = vpop.f32.mrf.mxu0
        %v1513 = vadd.f32 0.0, %v1512
        %1514 = vmatmul.f32.gmra.mxu0 %v1400
        %v1515 = vpop.f32.mrf.mxu0
        %v1516 = vadd.f32 0.0, %v1515
        %1517 = vmatmul.f32.gmra.mxu0 %v1403
        %v1518 = vpop.f32.mrf.mxu0
        %v1519 = vadd.f32 0.0, %v1518
        %1520 = vmatmul.f32.gmra.mxu0 %v1406
        %v1521 = vpop.f32.mrf.mxu0
        %v1522 = vadd.f32 0.0, %v1521
        %1523 = vmatmul.f32.gmra.mxu0 %v1409
        %v1524 = vpop.f32.mrf.mxu0
        %v1525 = vadd.f32 0.0, %v1524
        %1526 = vmatmul.f32.gmra.mxu0 %v1412
        %v1527 = vpop.f32.mrf.mxu0
        %v1528 = vadd.f32 0.0, %v1527
        %1529 = vmatmul.f32.gmra.mxu0 %v1415
        %v1530 = vpop.f32.mrf.mxu0
        %v1531 = vadd.f32 0.0, %v1530
        %1532 = vmatmul.f32.gmra.mxu0 %v1418
        %v1533 = vpop.f32.mrf.mxu0
        %v1534 = vadd.f32 0.0, %v1533
        %1535 = vmatmul.f32.gmra.mxu0 %v1421
        %v1536 = vpop.f32.mrf.mxu0
        %v1537 = vadd.f32 0.0, %v1536
        %1538 = vmatmul.f32.gmra.mxu0 %v1424
        %v1539 = vpop.f32.mrf.mxu0
        %v1540 = vadd.f32 0.0, %v1539
        %1541 = vmatmul.f32.gmra.mxu0 %v1427
        %v1542 = vpop.f32.mrf.mxu0
        %v1543 = vadd.f32 0.0, %v1542
        %1544 = vmatmul.f32.gmra.mxu0 %v1430
        %v1545 = vpop.f32.mrf.mxu0
        %v1546 = vadd.f32 0.0, %v1545
        %1547 = vmatmul.f32.gmra.mxu0 %v1433
        %v1548 = vpop.f32.mrf.mxu0
        %v1549 = vadd.f32 0.0, %v1548
        %1550 = vmatmul.f32.gmra.mxu0 %v1436
        %v1551 = vpop.f32.mrf.mxu0
        %v1552 = vadd.f32 0.0, %v1551
        %1553 = vmatmul.f32.gmra.mxu0 %v1439
        %v1554 = vpop.f32.mrf.mxu0
        %v1555 = vadd.f32 0.0, %v1554
        %1556 = vmatmul.f32.gmra.mxu0 %v1442
        %v1557 = vpop.f32.mrf.mxu0
        %v1558 = vadd.f32 0.0, %v1557
        %1559 = vmatmul.f32.gmra.mxu0 %v1445
        %v1560 = vpop.f32.mrf.mxu0
        %v1561 = vadd.f32 0.0, %v1560
        %1562 = vmatmul.f32.gmra.mxu0 %v1448
        %v1563 = vpop.f32.mrf.mxu0
        %v1564 = vadd.f32 0.0, %v1563
        %1565 = vmatmul.f32.gmra.mxu0 %v1451
        %v1566 = vpop.f32.mrf.mxu0
        %v1567 = vadd.f32 0.0, %v1566
        %1568 = vmatmul.f32.gmra.mxu0 %v1454
        %v1569 = vpop.f32.mrf.mxu0
        %v1570 = vadd.f32 0.0, %v1569
        %1571 = vmatmul.f32.gmra.mxu0 %v1457
        %v1572 = vpop.f32.mrf.mxu0
        %v1573 = vadd.f32 0.0, %v1572
        %1574 = vmatmul.f32.gmra.mxu0 %v1460
        %v1575 = vpop.f32.mrf.mxu0
        %v1576 = vadd.f32 0.0, %v1575
        %1577 = vmatmul.f32.gmra.mxu0 %v1463
        %v1578 = vpop.f32.mrf.mxu0
        %v1579 = vadd.f32 0.0, %v1578
        %1580 = vmatmul.f32.gmra.mxu0 %v1466
        %v1581 = vpop.f32.mrf.mxu0
        %v1582 = vadd.f32 0.0, %v1581
        %1583 = vmatmul.f32.gmra.mxu0 %v1469
        %v1584 = vpop.f32.mrf.mxu0
        %v1585 = vadd.f32 0.0, %v1584
        %1586 = vmatmul.f32.gmra.mxu0 %v1472
        %v1587 = vpop.f32.mrf.mxu0
        %v1588 = vadd.f32 0.0, %v1587
        %1589 = vmatmul.f32.gmra.mxu0 %v1475
        %v1590 = vpop.f32.mrf.mxu0
        %v1591 = vadd.f32 0.0, %v1590
        %1592 = vmatmul.f32.gmra.mxu0 %v1478
        %v1593 = vpop.f32.mrf.mxu0
        %v1594 = vadd.f32 0.0, %v1593
        %1595 = vdwg.mxu0
        %1597 = vst [vmem:[#allocation1] ss:$2 sm:$0xff] %v463
        %v1598 = vld.sshfl [vmem:[#allocation1] sm:$0xff pattern:$0x75316420]
        %v1599 = vld.sshfl [vmem:[#allocation1 + $0x8] sm:$0xff pattern:$0x75316420]
        %1602 = vxpose.xlu0.b32.start [1/16] %v1598, 128
        %1603 = vxpose.xlu0.b32.cont [2/16] 0.0, 128
        %1604 = vxpose.xlu0.b32.cont [3/16] 0.0, 128
        %1605 = vxpose.xlu0.b32.cont [4/16] 0.0, 128
        %1606 = vxpose.xlu0.b32.cont [5/16] 0.0, 128
        %1607 = vxpose.xlu0.b32.cont [6/16] 0.0, 128
        %1608 = vxpose.xlu0.b32.cont [7/16] 0.0, 128
        %1609 = vxpose.xlu0.b32.cont [8/16] 0.0, 128
        %1610 = vxpose.xlu0.b32.cont [9/16] 0.0, 128
        %1611 = vxpose.xlu0.b32.cont [10/16] 0.0, 128
        %1612 = vxpose.xlu0.b32.cont [11/16] 0.0, 128
        %1613 = vxpose.xlu0.b32.cont [12/16] 0.0, 128
        %1614 = vxpose.xlu0.b32.cont [13/16] 0.0, 128
        %1615 = vxpose.xlu0.b32.cont [14/16] 0.0, 128
        %1616 = vxpose.xlu0.b32.cont [15/16] 0.0, 128
        %1617 = vxpose.xlu0.b32.end [16/16] 0.0, 128
        %v1618 = vpop.trf.xlu0
        %v1619 = vpop.trf.xlu0
        %v1620 = vpop.trf.xlu0
        %v1621 = vpop.trf.xlu0
        %v1622 = vpop.trf.xlu0
        %v1623 = vpop.trf.xlu0
        %v1624 = vpop.trf.xlu0
        %v1625 = vpop.trf.xlu0
        %v1626 = vpop.trf.xlu0
        %v1627 = vpop.trf.xlu0
        %v1628 = vpop.trf.xlu0
        %v1629 = vpop.trf.xlu0
        %v1630 = vpop.trf.xlu0
        %v1631 = vpop.trf.xlu0
        %v1632 = vpop.trf.xlu0
        %v1633 = vpop.trf.xlu0
        %1634 = vxpose.xlu0.b32.start [1/16] %v1599, 128
        %1635 = vxpose.xlu0.b32.cont [2/16] 0.0, 128
        %1636 = vxpose.xlu0.b32.cont [3/16] 0.0, 128
        %1637 = vxpose.xlu0.b32.cont [4/16] 0.0, 128
        %1638 = vxpose.xlu0.b32.cont [5/16] 0.0, 128
        %1639 = vxpose.xlu0.b32.cont [6/16] 0.0, 128
        %1640 = vxpose.xlu0.b32.cont [7/16] 0.0, 128
        %1641 = vxpose.xlu0.b32.cont [8/16] 0.0, 128
        %1642 = vxpose.xlu0.b32.cont [9/16] 0.0, 128
        %1643 = vxpose.xlu0.b32.cont [10/16] 0.0, 128
        %1644 = vxpose.xlu0.b32.cont [11/16] 0.0, 128
        %1645 = vxpose.xlu0.b32.cont [12/16] 0.0, 128
        %1646 = vxpose.xlu0.b32.cont [13/16] 0.0, 128
        %1647 = vxpose.xlu0.b32.cont [14/16] 0.0, 128
        %1648 = vxpose.xlu0.b32.cont [15/16] 0.0, 128
        %1649 = vxpose.xlu0.b32.end [16/16] 0.0, 128
        %v1650 = vpop.trf.xlu0
        %v1651 = vpop.trf.xlu0
        %v1652 = vpop.trf.xlu0
        %v1653 = vpop.trf.xlu0
        %v1654 = vpop.trf.xlu0
        %v1655 = vpop.trf.xlu0
        %v1656 = vpop.trf.xlu0
        %v1657 = vpop.trf.xlu0
        %v1658 = vpop.trf.xlu0
        %v1659 = vpop.trf.xlu0
        %v1660 = vpop.trf.xlu0
        %v1661 = vpop.trf.xlu0
        %v1662 = vpop.trf.xlu0
        %v1663 = vpop.trf.xlu0
        %v1664 = vpop.trf.xlu0
        %v1665 = vpop.trf.xlu0
        %v1667 = vsel %vm537, %v1618, 0
        %v1670 = vsel %vm537, %v1619, 0
        %v1673 = vsel %vm537, %v1620, 0
        %v1676 = vsel %vm537, %v1621, 0
        %v1679 = vsel %vm537, %v1622, 0
        %v1682 = vsel %vm537, %v1623, 0
        %v1685 = vsel %vm537, %v1624, 0
        %v1688 = vsel %vm537, %v1625, 0
        %v1691 = vsel %vm537, %v1626, 0
        %v1694 = vsel %vm537, %v1627, 0
        %v1697 = vsel %vm537, %v1628, 0
        %v1700 = vsel %vm537, %v1629, 0
        %v1703 = vsel %vm537, %v1630, 0
        %v1706 = vsel %vm537, %v1631, 0
        %v1709 = vsel %vm537, %v1632, 0
        %v1712 = vsel %vm537, %v1633, 0
        %v1715 = vsel %vm537, %v1650, 0
        %v1718 = vsel %vm537, %v1651, 0
        %v1721 = vsel %vm537, %v1652, 0
        %v1724 = vsel %vm537, %v1653, 0
        %v1727 = vsel %vm537, %v1654, 0
        %v1730 = vsel %vm537, %v1655, 0
        %v1733 = vsel %vm537, %v1656, 0
        %v1736 = vsel %vm537, %v1657, 0
        %v1739 = vsel %vm537, %v1658, 0
        %v1742 = vsel %vm537, %v1659, 0
        %v1745 = vsel %vm537, %v1660, 0
        %v1748 = vsel %vm537, %v1661, 0
        %v1751 = vsel %vm537, %v1662, 0
        %v1754 = vsel %vm537, %v1663, 0
        %v1757 = vsel %vm537, %v1664, 0
        %v1760 = vsel %vm537, %v1665, 0
        %v1763 = vsel %vm282, %v219, 0
        %1765 = vmatpush.msra.mxu0 0.0
        %1766 = vmatpush.msra.mxu0 0.0
        %1767 = vmatpush.msra.mxu0 0.0
        %1768 = vmatpush.msra.mxu0 0.0
        %1769 = vmatpush.msra.mxu0 0.0
        %1770 = vmatpush.msra.mxu0 0.0
        %1771 = vmatpush.msra.mxu0 0.0
        %1772 = vmatpush.msra.mxu0 0.0
        %1773 = vmatpush.msra.mxu0 0.0
        %1774 = vmatpush.msra.mxu0 0.0
        %1775 = vmatpush.msra.mxu0 0.0
        %1776 = vmatpush.msra.mxu0 0.0
        %1777 = vmatpush.msra.mxu0 0.0
        %1778 = vmatpush.msra.mxu0 0.0
        %1779 = vmatpush.msra.mxu0 0.0
        %1780 = vmatpush.msra.mxu0 %v1763
        %1781 = vmatmul.f32.gmra.mxu0 %v1667
        %v1782 = vpop.f32.mrf.mxu0
        %v1783 = vadd.f32 0.0, %v1782
        %1784 = vmatmul.f32.gmra.mxu0 %v1670
        %v1785 = vpop.f32.mrf.mxu0
        %v1786 = vadd.f32 0.0, %v1785
        %1787 = vmatmul.f32.gmra.mxu0 %v1673
        %v1788 = vpop.f32.mrf.mxu0
        %v1789 = vadd.f32 0.0, %v1788
        %1790 = vmatmul.f32.gmra.mxu0 %v1676
        %v1791 = vpop.f32.mrf.mxu0
        %v1792 = vadd.f32 0.0, %v1791
        %1793 = vmatmul.f32.gmra.mxu0 %v1679
        %v1794 = vpop.f32.mrf.mxu0
        %v1795 = vadd.f32 0.0, %v1794
        %1796 = vmatmul.f32.gmra.mxu0 %v1682
        %v1797 = vpop.f32.mrf.mxu0
        %v1798 = vadd.f32 0.0, %v1797
        %1799 = vmatmul.f32.gmra.mxu0 %v1685
        %v1800 = vpop.f32.mrf.mxu0
        %v1801 = vadd.f32 0.0, %v1800
        %1802 = vmatmul.f32.gmra.mxu0 %v1688
        %v1803 = vpop.f32.mrf.mxu0
        %v1804 = vadd.f32 0.0, %v1803
        %1805 = vmatmul.f32.gmra.mxu0 %v1691
        %v1806 = vpop.f32.mrf.mxu0
        %v1807 = vadd.f32 0.0, %v1806
        %1808 = vmatmul.f32.gmra.mxu0 %v1694
        %v1809 = vpop.f32.mrf.mxu0
        %v1810 = vadd.f32 0.0, %v1809
        %1811 = vmatmul.f32.gmra.mxu0 %v1697
        %v1812 = vpop.f32.mrf.mxu0
        %v1813 = vadd.f32 0.0, %v1812
        %1814 = vmatmul.f32.gmra.mxu0 %v1700
        %v1815 = vpop.f32.mrf.mxu0
        %v1816 = vadd.f32 0.0, %v1815
        %1817 = vmatmul.f32.gmra.mxu0 %v1703
        %v1818 = vpop.f32.mrf.mxu0
        %v1819 = vadd.f32 0.0, %v1818
        %1820 = vmatmul.f32.gmra.mxu0 %v1706
        %v1821 = vpop.f32.mrf.mxu0
        %v1822 = vadd.f32 0.0, %v1821
        %1823 = vmatmul.f32.gmra.mxu0 %v1709
        %v1824 = vpop.f32.mrf.mxu0
        %v1825 = vadd.f32 0.0, %v1824
        %1826 = vmatmul.f32.gmra.mxu0 %v1712
        %v1827 = vpop.f32.mrf.mxu0
        %v1828 = vadd.f32 0.0, %v1827
        %1829 = vmatmul.f32.gmra.mxu0 %v1715
        %v1830 = vpop.f32.mrf.mxu0
        %v1831 = vadd.f32 0.0, %v1830
        %1832 = vmatmul.f32.gmra.mxu0 %v1718
        %v1833 = vpop.f32.mrf.mxu0
        %v1834 = vadd.f32 0.0, %v1833
        %1835 = vmatmul.f32.gmra.mxu0 %v1721
        %v1836 = vpop.f32.mrf.mxu0
        %v1837 = vadd.f32 0.0, %v1836
        %1838 = vmatmul.f32.gmra.mxu0 %v1724
        %v1839 = vpop.f32.mrf.mxu0
        %v1840 = vadd.f32 0.0, %v1839
        %1841 = vmatmul.f32.gmra.mxu0 %v1727
        %v1842 = vpop.f32.mrf.mxu0
        %v1843 = vadd.f32 0.0, %v1842
        %1844 = vmatmul.f32.gmra.mxu0 %v1730
        %v1845 = vpop.f32.mrf.mxu0
        %v1846 = vadd.f32 0.0, %v1845
        %1847 = vmatmul.f32.gmra.mxu0 %v1733
        %v1848 = vpop.f32.mrf.mxu0
        %v1849 = vadd.f32 0.0, %v1848
        %1850 = vmatmul.f32.gmra.mxu0 %v1736
        %v1851 = vpop.f32.mrf.mxu0
        %v1852 = vadd.f32 0.0, %v1851
        %1853 = vmatmul.f32.gmra.mxu0 %v1739
        %v1854 = vpop.f32.mrf.mxu0
        %v1855 = vadd.f32 0.0, %v1854
        %1856 = vmatmul.f32.gmra.mxu0 %v1742
        %v1857 = vpop.f32.mrf.mxu0
        %v1858 = vadd.f32 0.0, %v1857
        %1859 = vmatmul.f32.gmra.mxu0 %v1745
        %v1860 = vpop.f32.mrf.mxu0
        %v1861 = vadd.f32 0.0, %v1860
        %1862 = vmatmul.f32.gmra.mxu0 %v1748
        %v1863 = vpop.f32.mrf.mxu0
        %v1864 = vadd.f32 0.0, %v1863
        %1865 = vmatmul.f32.gmra.mxu0 %v1751
        %v1866 = vpop.f32.mrf.mxu0
        %v1867 = vadd.f32 0.0, %v1866
        %1868 = vmatmul.f32.gmra.mxu0 %v1754
        %v1869 = vpop.f32.mrf.mxu0
        %v1870 = vadd.f32 0.0, %v1869
        %1871 = vmatmul.f32.gmra.mxu0 %v1757
        %v1872 = vpop.f32.mrf.mxu0
        %v1873 = vadd.f32 0.0, %v1872
        %1874 = vmatmul.f32.gmra.mxu0 %v1760
        %v1875 = vpop.f32.mrf.mxu0
        %v1876 = vadd.f32 0.0, %v1875
        %1877 = vdwg.mxu0
        %1879 = vst [vmem:[#allocation1] ss:$2 sm:$0xff] %v464
        %v1880 = vld.sshfl [vmem:[#allocation1] sm:$0xff pattern:$0x75316420]
        %v1881 = vld.sshfl [vmem:[#allocation1 + $0x8] sm:$0xff pattern:$0x75316420]
        %1884 = vxpose.xlu0.b32.start [1/16] %v1880, 128
        %1885 = vxpose.xlu0.b32.cont [2/16] 0.0, 128
        %1886 = vxpose.xlu0.b32.cont [3/16] 0.0, 128
        %1887 = vxpose.xlu0.b32.cont [4/16] 0.0, 128
        %1888 = vxpose.xlu0.b32.cont [5/16] 0.0, 128
        %1889 = vxpose.xlu0.b32.cont [6/16] 0.0, 128
        %1890 = vxpose.xlu0.b32.cont [7/16] 0.0, 128
        %1891 = vxpose.xlu0.b32.cont [8/16] 0.0, 128
        %1892 = vxpose.xlu0.b32.cont [9/16] 0.0, 128
        %1893 = vxpose.xlu0.b32.cont [10/16] 0.0, 128
        %1894 = vxpose.xlu0.b32.cont [11/16] 0.0, 128
        %1895 = vxpose.xlu0.b32.cont [12/16] 0.0, 128
        %1896 = vxpose.xlu0.b32.cont [13/16] 0.0, 128
        %1897 = vxpose.xlu0.b32.cont [14/16] 0.0, 128
        %1898 = vxpose.xlu0.b32.cont [15/16] 0.0, 128
        %1899 = vxpose.xlu0.b32.end [16/16] 0.0, 128
        %v1900 = vpop.trf.xlu0
        %v1901 = vpop.trf.xlu0
        %v1902 = vpop.trf.xlu0
        %v1903 = vpop.trf.xlu0
        %v1904 = vpop.trf.xlu0
        %v1905 = vpop.trf.xlu0
        %v1906 = vpop.trf.xlu0
        %v1907 = vpop.trf.xlu0
        %v1908 = vpop.trf.xlu0
        %v1909 = vpop.trf.xlu0
        %v1910 = vpop.trf.xlu0
        %v1911 = vpop.trf.xlu0
        %v1912 = vpop.trf.xlu0
        %v1913 = vpop.trf.xlu0
        %v1914 = vpop.trf.xlu0
        %v1915 = vpop.trf.xlu0
        %1916 = vxpose.xlu0.b32.start [1/16] %v1881, 128
        %1917 = vxpose.xlu0.b32.cont [2/16] 0.0, 128
        %1918 = vxpose.xlu0.b32.cont [3/16] 0.0, 128
        %1919 = vxpose.xlu0.b32.cont [4/16] 0.0, 128
        %1920 = vxpose.xlu0.b32.cont [5/16] 0.0, 128
        %1921 = vxpose.xlu0.b32.cont [6/16] 0.0, 128
        %1922 = vxpose.xlu0.b32.cont [7/16] 0.0, 128
        %1923 = vxpose.xlu0.b32.cont [8/16] 0.0, 128
        %1924 = vxpose.xlu0.b32.cont [9/16] 0.0, 128
        %1925 = vxpose.xlu0.b32.cont [10/16] 0.0, 128
        %1926 = vxpose.xlu0.b32.cont [11/16] 0.0, 128
        %1927 = vxpose.xlu0.b32.cont [12/16] 0.0, 128
        %1928 = vxpose.xlu0.b32.cont [13/16] 0.0, 128
        %1929 = vxpose.xlu0.b32.cont [14/16] 0.0, 128
        %1930 = vxpose.xlu0.b32.cont [15/16] 0.0, 128
        %1931 = vxpose.xlu0.b32.end [16/16] 0.0, 128
        %v1932 = vpop.trf.xlu0
        %v1933 = vpop.trf.xlu0
        %v1934 = vpop.trf.xlu0
        %v1935 = vpop.trf.xlu0
        %v1936 = vpop.trf.xlu0
        %v1937 = vpop.trf.xlu0
        %v1938 = vpop.trf.xlu0
        %v1939 = vpop.trf.xlu0
        %v1940 = vpop.trf.xlu0
        %v1941 = vpop.trf.xlu0
        %v1942 = vpop.trf.xlu0
        %v1943 = vpop.trf.xlu0
        %v1944 = vpop.trf.xlu0
        %v1945 = vpop.trf.xlu0
        %v1946 = vpop.trf.xlu0
        %v1947 = vpop.trf.xlu0
        %v1949 = vsel %vm537, %v1900, 0
        %v1952 = vsel %vm537, %v1901, 0
        %v1955 = vsel %vm537, %v1902, 0
        %v1958 = vsel %vm537, %v1903, 0
        %v1961 = vsel %vm537, %v1904, 0
        %v1964 = vsel %vm537, %v1905, 0
        %v1967 = vsel %vm537, %v1906, 0
        %v1970 = vsel %vm537, %v1907, 0
        %v1973 = vsel %vm537, %v1908, 0
        %v1976 = vsel %vm537, %v1909, 0
        %v1979 = vsel %vm537, %v1910, 0
        %v1982 = vsel %vm537, %v1911, 0
        %v1985 = vsel %vm537, %v1912, 0
        %v1988 = vsel %vm537, %v1913, 0
        %v1991 = vsel %vm537, %v1914, 0
        %v1994 = vsel %vm537, %v1915, 0
        %v1997 = vsel %vm537, %v1932, 0
        %v2000 = vsel %vm537, %v1933, 0
        %v2003 = vsel %vm537, %v1934, 0
        %v2006 = vsel %vm537, %v1935, 0
        %v2009 = vsel %vm537, %v1936, 0
        %v2012 = vsel %vm537, %v1937, 0
        %v2015 = vsel %vm537, %v1938, 0
        %v2018 = vsel %vm537, %v1939, 0
        %v2021 = vsel %vm537, %v1940, 0
        %v2024 = vsel %vm537, %v1941, 0
        %v2027 = vsel %vm537, %v1942, 0
        %v2030 = vsel %vm537, %v1943, 0
        %v2033 = vsel %vm537, %v1944, 0
        %v2036 = vsel %vm537, %v1945, 0
        %v2039 = vsel %vm537, %v1946, 0
        %v2042 = vsel %vm537, %v1947, 0
        %v2045 = vsel %vm282, %v220, 0
        %2047 = vmatpush.msra.mxu0 0.0
        %2048 = vmatpush.msra.mxu0 0.0
        %2049 = vmatpush.msra.mxu0 0.0
        %2050 = vmatpush.msra.mxu0 0.0
        %2051 = vmatpush.msra.mxu0 0.0
        %2052 = vmatpush.msra.mxu0 0.0
        %2053 = vmatpush.msra.mxu0 0.0
        %2054 = vmatpush.msra.mxu0 0.0
        %2055 = vmatpush.msra.mxu0 0.0
        %2056 = vmatpush.msra.mxu0 0.0
        %2057 = vmatpush.msra.mxu0 0.0
        %2058 = vmatpush.msra.mxu0 0.0
        %2059 = vmatpush.msra.mxu0 0.0
        %2060 = vmatpush.msra.mxu0 0.0
        %2061 = vmatpush.msra.mxu0 0.0
        %2062 = vmatpush.msra.mxu0 %v2045
        %2063 = vmatmul.f32.gmra.mxu0 %v1949
        %v2064 = vpop.f32.mrf.mxu0
        %v2065 = vadd.f32 0.0, %v2064
        %2066 = vmatmul.f32.gmra.mxu0 %v1952
        %v2067 = vpop.f32.mrf.mxu0
        %v2068 = vadd.f32 0.0, %v2067
        %2069 = vmatmul.f32.gmra.mxu0 %v1955
        %v2070 = vpop.f32.mrf.mxu0
        %v2071 = vadd.f32 0.0, %v2070
        %2072 = vmatmul.f32.gmra.mxu0 %v1958
        %v2073 = vpop.f32.mrf.mxu0
        %v2074 = vadd.f32 0.0, %v2073
        %2075 = vmatmul.f32.gmra.mxu0 %v1961
        %v2076 = vpop.f32.mrf.mxu0
        %v2077 = vadd.f32 0.0, %v2076
        %2078 = vmatmul.f32.gmra.mxu0 %v1964
        %v2079 = vpop.f32.mrf.mxu0
        %v2080 = vadd.f32 0.0, %v2079
        %2081 = vmatmul.f32.gmra.mxu0 %v1967
        %v2082 = vpop.f32.mrf.mxu0
        %v2083 = vadd.f32 0.0, %v2082
        %2084 = vmatmul.f32.gmra.mxu0 %v1970
        %v2085 = vpop.f32.mrf.mxu0
        %v2086 = vadd.f32 0.0, %v2085
        %2087 = vmatmul.f32.gmra.mxu0 %v1973
        %v2088 = vpop.f32.mrf.mxu0
        %v2089 = vadd.f32 0.0, %v2088
        %2090 = vmatmul.f32.gmra.mxu0 %v1976
        %v2091 = vpop.f32.mrf.mxu0
        %v2092 = vadd.f32 0.0, %v2091
        %2093 = vmatmul.f32.gmra.mxu0 %v1979
        %v2094 = vpop.f32.mrf.mxu0
        %v2095 = vadd.f32 0.0, %v2094
        %2096 = vmatmul.f32.gmra.mxu0 %v1982
        %v2097 = vpop.f32.mrf.mxu0
        %v2098 = vadd.f32 0.0, %v2097
        %2099 = vmatmul.f32.gmra.mxu0 %v1985
        %v2100 = vpop.f32.mrf.mxu0
        %v2101 = vadd.f32 0.0, %v2100
        %2102 = vmatmul.f32.gmra.mxu0 %v1988
        %v2103 = vpop.f32.mrf.mxu0
        %v2104 = vadd.f32 0.0, %v2103
        %2105 = vmatmul.f32.gmra.mxu0 %v1991
        %v2106 = vpop.f32.mrf.mxu0
        %v2107 = vadd.f32 0.0, %v2106
        %2108 = vmatmul.f32.gmra.mxu0 %v1994
        %v2109 = vpop.f32.mrf.mxu0
        %v2110 = vadd.f32 0.0, %v2109
        %2111 = vmatmul.f32.gmra.mxu0 %v1997
        %v2112 = vpop.f32.mrf.mxu0
        %v2113 = vadd.f32 0.0, %v2112
        %2114 = vmatmul.f32.gmra.mxu0 %v2000
        %v2115 = vpop.f32.mrf.mxu0
        %v2116 = vadd.f32 0.0, %v2115
        %2117 = vmatmul.f32.gmra.mxu0 %v2003
        %v2118 = vpop.f32.mrf.mxu0
        %v2119 = vadd.f32 0.0, %v2118
        %2120 = vmatmul.f32.gmra.mxu0 %v2006
        %v2121 = vpop.f32.mrf.mxu0
        %v2122 = vadd.f32 0.0, %v2121
        %2123 = vmatmul.f32.gmra.mxu0 %v2009
        %v2124 = vpop.f32.mrf.mxu0
        %v2125 = vadd.f32 0.0, %v2124
        %2126 = vmatmul.f32.gmra.mxu0 %v2012
        %v2127 = vpop.f32.mrf.mxu0
        %v2128 = vadd.f32 0.0, %v2127
        %2129 = vmatmul.f32.gmra.mxu0 %v2015
        %v2130 = vpop.f32.mrf.mxu0
        %v2131 = vadd.f32 0.0, %v2130
        %2132 = vmatmul.f32.gmra.mxu0 %v2018
        %v2133 = vpop.f32.mrf.mxu0
        %v2134 = vadd.f32 0.0, %v2133
        %2135 = vmatmul.f32.gmra.mxu0 %v2021
        %v2136 = vpop.f32.mrf.mxu0
        %v2137 = vadd.f32 0.0, %v2136
        %2138 = vmatmul.f32.gmra.mxu0 %v2024
        %v2139 = vpop.f32.mrf.mxu0
        %v2140 = vadd.f32 0.0, %v2139
        %2141 = vmatmul.f32.gmra.mxu0 %v2027
        %v2142 = vpop.f32.mrf.mxu0
        %v2143 = vadd.f32 0.0, %v2142
        %2144 = vmatmul.f32.gmra.mxu0 %v2030
        %v2145 = vpop.f32.mrf.mxu0
        %v2146 = vadd.f32 0.0, %v2145
        %2147 = vmatmul.f32.gmra.mxu0 %v2033
        %v2148 = vpop.f32.mrf.mxu0
        %v2149 = vadd.f32 0.0, %v2148
        %2150 = vmatmul.f32.gmra.mxu0 %v2036
        %v2151 = vpop.f32.mrf.mxu0
        %v2152 = vadd.f32 0.0, %v2151
        %2153 = vmatmul.f32.gmra.mxu0 %v2039
        %v2154 = vpop.f32.mrf.mxu0
        %v2155 = vadd.f32 0.0, %v2154
        %2156 = vmatmul.f32.gmra.mxu0 %v2042
        %v2157 = vpop.f32.mrf.mxu0
        %v2158 = vadd.f32 0.0, %v2157
        %2159 = vdwg.mxu0
        %2161 = vst [vmem:[#allocation1] ss:$2 sm:$0xff] %v465
        %v2162 = vld.sshfl [vmem:[#allocation1] sm:$0xff pattern:$0x75316420]
        %v2163 = vld.sshfl [vmem:[#allocation1 + $0x8] sm:$0xff pattern:$0x75316420]
        %2166 = vxpose.xlu0.b32.start [1/16] %v2162, 128
        %2167 = vxpose.xlu0.b32.cont [2/16] 0.0, 128
        %2168 = vxpose.xlu0.b32.cont [3/16] 0.0, 128
        %2169 = vxpose.xlu0.b32.cont [4/16] 0.0, 128
        %2170 = vxpose.xlu0.b32.cont [5/16] 0.0, 128
        %2171 = vxpose.xlu0.b32.cont [6/16] 0.0, 128
        %2172 = vxpose.xlu0.b32.cont [7/16] 0.0, 128
        %2173 = vxpose.xlu0.b32.cont [8/16] 0.0, 128
        %2174 = vxpose.xlu0.b32.cont [9/16] 0.0, 128
        %2175 = vxpose.xlu0.b32.cont [10/16] 0.0, 128
        %2176 = vxpose.xlu0.b32.cont [11/16] 0.0, 128
        %2177 = vxpose.xlu0.b32.cont [12/16] 0.0, 128
        %2178 = vxpose.xlu0.b32.cont [13/16] 0.0, 128
        %2179 = vxpose.xlu0.b32.cont [14/16] 0.0, 128
        %2180 = vxpose.xlu0.b32.cont [15/16] 0.0, 128
        %2181 = vxpose.xlu0.b32.end [16/16] 0.0, 128
        %v2182 = vpop.trf.xlu0
        %v2183 = vpop.trf.xlu0
        %v2184 = vpop.trf.xlu0
        %v2185 = vpop.trf.xlu0
        %v2186 = vpop.trf.xlu0
        %v2187 = vpop.trf.xlu0
        %v2188 = vpop.trf.xlu0
        %v2189 = vpop.trf.xlu0
        %v2190 = vpop.trf.xlu0
        %v2191 = vpop.trf.xlu0
        %v2192 = vpop.trf.xlu0
        %v2193 = vpop.trf.xlu0
        %v2194 = vpop.trf.xlu0
        %v2195 = vpop.trf.xlu0
        %v2196 = vpop.trf.xlu0
        %v2197 = vpop.trf.xlu0
        %2198 = vxpose.xlu0.b32.start [1/16] %v2163, 128
        %2199 = vxpose.xlu0.b32.cont [2/16] 0.0, 128
        %2200 = vxpose.xlu0.b32.cont [3/16] 0.0, 128
        %2201 = vxpose.xlu0.b32.cont [4/16] 0.0, 128
        %2202 = vxpose.xlu0.b32.cont [5/16] 0.0, 128
        %2203 = vxpose.xlu0.b32.cont [6/16] 0.0, 128
        %2204 = vxpose.xlu0.b32.cont [7/16] 0.0, 128
        %2205 = vxpose.xlu0.b32.cont [8/16] 0.0, 128
        %2206 = vxpose.xlu0.b32.cont [9/16] 0.0, 128
        %2207 = vxpose.xlu0.b32.cont [10/16] 0.0, 128
        %2208 = vxpose.xlu0.b32.cont [11/16] 0.0, 128
        %2209 = vxpose.xlu0.b32.cont [12/16] 0.0, 128
        %2210 = vxpose.xlu0.b32.cont [13/16] 0.0, 128
        %2211 = vxpose.xlu0.b32.cont [14/16] 0.0, 128
        %2212 = vxpose.xlu0.b32.cont [15/16] 0.0, 128
        %2213 = vxpose.xlu0.b32.end [16/16] 0.0, 128
        %v2214 = vpop.trf.xlu0
        %v2215 = vpop.trf.xlu0
        %v2216 = vpop.trf.xlu0
        %v2217 = vpop.trf.xlu0
        %v2218 = vpop.trf.xlu0
        %v2219 = vpop.trf.xlu0
        %v2220 = vpop.trf.xlu0
        %v2221 = vpop.trf.xlu0
        %v2222 = vpop.trf.xlu0
        %v2223 = vpop.trf.xlu0
        %v2224 = vpop.trf.xlu0
        %v2225 = vpop.trf.xlu0
        %v2226 = vpop.trf.xlu0
        %v2227 = vpop.trf.xlu0
        %v2228 = vpop.trf.xlu0
        %v2229 = vpop.trf.xlu0
        %v2231 = vsel %vm537, %v2182, 0
        %v2234 = vsel %vm537, %v2183, 0
        %v2237 = vsel %vm537, %v2184, 0
        %v2240 = vsel %vm537, %v2185, 0
        %v2243 = vsel %vm537, %v2186, 0
        %v2246 = vsel %vm537, %v2187, 0
        %v2249 = vsel %vm537, %v2188, 0
        %v2252 = vsel %vm537, %v2189, 0
        %v2255 = vsel %vm537, %v2190, 0
        %v2258 = vsel %vm537, %v2191, 0
        %v2261 = vsel %vm537, %v2192, 0
        %v2264 = vsel %vm537, %v2193, 0
        %v2267 = vsel %vm537, %v2194, 0
        %v2270 = vsel %vm537, %v2195, 0
        %v2273 = vsel %vm537, %v2196, 0
        %v2276 = vsel %vm537, %v2197, 0
        %v2279 = vsel %vm537, %v2214, 0
        %v2282 = vsel %vm537, %v2215, 0
        %v2285 = vsel %vm537, %v2216, 0
        %v2288 = vsel %vm537, %v2217, 0
        %v2291 = vsel %vm537, %v2218, 0
        %v2294 = vsel %vm537, %v2219, 0
        %v2297 = vsel %vm537, %v2220, 0
        %v2300 = vsel %vm537, %v2221, 0
        %v2303 = vsel %vm537, %v2222, 0
        %v2306 = vsel %vm537, %v2223, 0
        %v2309 = vsel %vm537, %v2224, 0
        %v2312 = vsel %vm537, %v2225, 0
        %v2315 = vsel %vm537, %v2226, 0
        %v2318 = vsel %vm537, %v2227, 0
        %v2321 = vsel %vm537, %v2228, 0
        %v2324 = vsel %vm537, %v2229, 0
        %v2327 = vsel %vm282, %v221, 0
        %2329 = vmatpush.msra.mxu0 0.0
        %2330 = vmatpush.msra.mxu0 0.0
        %2331 = vmatpush.msra.mxu0 0.0
        %2332 = vmatpush.msra.mxu0 0.0
        %2333 = vmatpush.msra.mxu0 0.0
        %2334 = vmatpush.msra.mxu0 0.0
        %2335 = vmatpush.msra.mxu0 0.0
        %2336 = vmatpush.msra.mxu0 0.0
        %2337 = vmatpush.msra.mxu0 0.0
        %2338 = vmatpush.msra.mxu0 0.0
        %2339 = vmatpush.msra.mxu0 0.0
        %2340 = vmatpush.msra.mxu0 0.0
        %2341 = vmatpush.msra.mxu0 0.0
        %2342 = vmatpush.msra.mxu0 0.0
        %2343 = vmatpush.msra.mxu0 0.0
        %2344 = vmatpush.msra.mxu0 %v2327
        %2345 = vmatmul.f32.gmra.mxu0 %v2231
        %v2346 = vpop.f32.mrf.mxu0
        %v2347 = vadd.f32 0.0, %v2346
        %2348 = vmatmul.f32.gmra.mxu0 %v2234
        %v2349 = vpop.f32.mrf.mxu0
        %v2350 = vadd.f32 0.0, %v2349
        %2351 = vmatmul.f32.gmra.mxu0 %v2237
        %v2352 = vpop.f32.mrf.mxu0
        %v2353 = vadd.f32 0.0, %v2352
        %2354 = vmatmul.f32.gmra.mxu0 %v2240
        %v2355 = vpop.f32.mrf.mxu0
        %v2356 = vadd.f32 0.0, %v2355
        %2357 = vmatmul.f32.gmra.mxu0 %v2243
        %v2358 = vpop.f32.mrf.mxu0
        %v2359 = vadd.f32 0.0, %v2358
        %2360 = vmatmul.f32.gmra.mxu0 %v2246
        %v2361 = vpop.f32.mrf.mxu0
        %v2362 = vadd.f32 0.0, %v2361
        %2363 = vmatmul.f32.gmra.mxu0 %v2249
        %v2364 = vpop.f32.mrf.mxu0
        %v2365 = vadd.f32 0.0, %v2364
        %2366 = vmatmul.f32.gmra.mxu0 %v2252
        %v2367 = vpop.f32.mrf.mxu0
        %v2368 = vadd.f32 0.0, %v2367
        %2369 = vmatmul.f32.gmra.mxu0 %v2255
        %v2370 = vpop.f32.mrf.mxu0
        %v2371 = vadd.f32 0.0, %v2370
        %2372 = vmatmul.f32.gmra.mxu0 %v2258
        %v2373 = vpop.f32.mrf.mxu0
        %v2374 = vadd.f32 0.0, %v2373
        %2375 = vmatmul.f32.gmra.mxu0 %v2261
        %v2376 = vpop.f32.mrf.mxu0
        %v2377 = vadd.f32 0.0, %v2376
        %2378 = vmatmul.f32.gmra.mxu0 %v2264
        %v2379 = vpop.f32.mrf.mxu0
        %v2380 = vadd.f32 0.0, %v2379
        %2381 = vmatmul.f32.gmra.mxu0 %v2267
        %v2382 = vpop.f32.mrf.mxu0
        %v2383 = vadd.f32 0.0, %v2382
        %2384 = vmatmul.f32.gmra.mxu0 %v2270
        %v2385 = vpop.f32.mrf.mxu0
        %v2386 = vadd.f32 0.0, %v2385
        %2387 = vmatmul.f32.gmra.mxu0 %v2273
        %v2388 = vpop.f32.mrf.mxu0
        %v2389 = vadd.f32 0.0, %v2388
        %2390 = vmatmul.f32.gmra.mxu0 %v2276
        %v2391 = vpop.f32.mrf.mxu0
        %v2392 = vadd.f32 0.0, %v2391
        %2393 = vmatmul.f32.gmra.mxu0 %v2279
        %v2394 = vpop.f32.mrf.mxu0
        %v2395 = vadd.f32 0.0, %v2394
        %2396 = vmatmul.f32.gmra.mxu0 %v2282
        %v2397 = vpop.f32.mrf.mxu0
        %v2398 = vadd.f32 0.0, %v2397
        %2399 = vmatmul.f32.gmra.mxu0 %v2285
        %v2400 = vpop.f32.mrf.mxu0
        %v2401 = vadd.f32 0.0, %v2400
        %2402 = vmatmul.f32.gmra.mxu0 %v2288
        %v2403 = vpop.f32.mrf.mxu0
        %v2404 = vadd.f32 0.0, %v2403
        %2405 = vmatmul.f32.gmra.mxu0 %v2291
        %v2406 = vpop.f32.mrf.mxu0
        %v2407 = vadd.f32 0.0, %v2406
        %2408 = vmatmul.f32.gmra.mxu0 %v2294
        %v2409 = vpop.f32.mrf.mxu0
        %v2410 = vadd.f32 0.0, %v2409
        %2411 = vmatmul.f32.gmra.mxu0 %v2297
        %v2412 = vpop.f32.mrf.mxu0
        %v2413 = vadd.f32 0.0, %v2412
        %2414 = vmatmul.f32.gmra.mxu0 %v2300
        %v2415 = vpop.f32.mrf.mxu0
        %v2416 = vadd.f32 0.0, %v2415
        %2417 = vmatmul.f32.gmra.mxu0 %v2303
        %v2418 = vpop.f32.mrf.mxu0
        %v2419 = vadd.f32 0.0, %v2418
        %2420 = vmatmul.f32.gmra.mxu0 %v2306
        %v2421 = vpop.f32.mrf.mxu0
        %v2422 = vadd.f32 0.0, %v2421
        %2423 = vmatmul.f32.gmra.mxu0 %v2309
        %v2424 = vpop.f32.mrf.mxu0
        %v2425 = vadd.f32 0.0, %v2424
        %2426 = vmatmul.f32.gmra.mxu0 %v2312
        %v2427 = vpop.f32.mrf.mxu0
        %v2428 = vadd.f32 0.0, %v2427
        %2429 = vmatmul.f32.gmra.mxu0 %v2315
        %v2430 = vpop.f32.mrf.mxu0
        %v2431 = vadd.f32 0.0, %v2430
        %2432 = vmatmul.f32.gmra.mxu0 %v2318
        %v2433 = vpop.f32.mrf.mxu0
        %v2434 = vadd.f32 0.0, %v2433
        %2435 = vmatmul.f32.gmra.mxu0 %v2321
        %v2436 = vpop.f32.mrf.mxu0
        %v2437 = vadd.f32 0.0, %v2436
        %2438 = vmatmul.f32.gmra.mxu0 %v2324
        %v2439 = vpop.f32.mrf.mxu0
        %v2440 = vadd.f32 0.0, %v2439
        %2441 = vdwg.mxu0
        %2443 = vst [vmem:[#allocation1] ss:$2 sm:$0xff] %v466
        %v2444 = vld.sshfl [vmem:[#allocation1] sm:$0xff pattern:$0x75316420]
        %v2445 = vld.sshfl [vmem:[#allocation1 + $0x8] sm:$0xff pattern:$0x75316420]
        %2448 = vxpose.xlu0.b32.start [1/16] %v2444, 128
        %2449 = vxpose.xlu0.b32.cont [2/16] 0.0, 128
        %2450 = vxpose.xlu0.b32.cont [3/16] 0.0, 128
        %2451 = vxpose.xlu0.b32.cont [4/16] 0.0, 128
        %2452 = vxpose.xlu0.b32.cont [5/16] 0.0, 128
        %2453 = vxpose.xlu0.b32.cont [6/16] 0.0, 128
        %2454 = vxpose.xlu0.b32.cont [7/16] 0.0, 128
        %2455 = vxpose.xlu0.b32.cont [8/16] 0.0, 128
        %2456 = vxpose.xlu0.b32.cont [9/16] 0.0, 128
        %2457 = vxpose.xlu0.b32.cont [10/16] 0.0, 128
        %2458 = vxpose.xlu0.b32.cont [11/16] 0.0, 128
        %2459 = vxpose.xlu0.b32.cont [12/16] 0.0, 128
        %2460 = vxpose.xlu0.b32.cont [13/16] 0.0, 128
        %2461 = vxpose.xlu0.b32.cont [14/16] 0.0, 128
        %2462 = vxpose.xlu0.b32.cont [15/16] 0.0, 128
        %2463 = vxpose.xlu0.b32.end [16/16] 0.0, 128
        %v2464 = vpop.trf.xlu0
        %v2465 = vpop.trf.xlu0
        %v2466 = vpop.trf.xlu0
        %v2467 = vpop.trf.xlu0
        %v2468 = vpop.trf.xlu0
        %v2469 = vpop.trf.xlu0
        %v2470 = vpop.trf.xlu0
        %v2471 = vpop.trf.xlu0
        %v2472 = vpop.trf.xlu0
        %v2473 = vpop.trf.xlu0
        %v2474 = vpop.trf.xlu0
        %v2475 = vpop.trf.xlu0
        %v2476 = vpop.trf.xlu0
        %v2477 = vpop.trf.xlu0
        %v2478 = vpop.trf.xlu0
        %v2479 = vpop.trf.xlu0
        %2480 = vxpose.xlu0.b32.start [1/16] %v2445, 128
        %2481 = vxpose.xlu0.b32.cont [2/16] 0.0, 128
        %2482 = vxpose.xlu0.b32.cont [3/16] 0.0, 128
        %2483 = vxpose.xlu0.b32.cont [4/16] 0.0, 128
        %2484 = vxpose.xlu0.b32.cont [5/16] 0.0, 128
        %2485 = vxpose.xlu0.b32.cont [6/16] 0.0, 128
        %2486 = vxpose.xlu0.b32.cont [7/16] 0.0, 128
        %2487 = vxpose.xlu0.b32.cont [8/16] 0.0, 128
        %2488 = vxpose.xlu0.b32.cont [9/16] 0.0, 128
        %2489 = vxpose.xlu0.b32.cont [10/16] 0.0, 128
        %2490 = vxpose.xlu0.b32.cont [11/16] 0.0, 128
        %2491 = vxpose.xlu0.b32.cont [12/16] 0.0, 128
        %2492 = vxpose.xlu0.b32.cont [13/16] 0.0, 128
        %2493 = vxpose.xlu0.b32.cont [14/16] 0.0, 128
        %2494 = vxpose.xlu0.b32.cont [15/16] 0.0, 128
        %2495 = vxpose.xlu0.b32.end [16/16] 0.0, 128
        %v2496 = vpop.trf.xlu0
        %v2497 = vpop.trf.xlu0
        %v2498 = vpop.trf.xlu0
        %v2499 = vpop.trf.xlu0
        %v2500 = vpop.trf.xlu0
        %v2501 = vpop.trf.xlu0
        %v2502 = vpop.trf.xlu0
        %v2503 = vpop.trf.xlu0
        %v2504 = vpop.trf.xlu0
        %v2505 = vpop.trf.xlu0
        %v2506 = vpop.trf.xlu0
        %v2507 = vpop.trf.xlu0
        %v2508 = vpop.trf.xlu0
        %v2509 = vpop.trf.xlu0
        %v2510 = vpop.trf.xlu0
        %v2511 = vpop.trf.xlu0
        %v2513 = vsel %vm537, %v2464, 0
        %v2516 = vsel %vm537, %v2465, 0
        %v2519 = vsel %vm537, %v2466, 0
        %v2522 = vsel %vm537, %v2467, 0
        %v2525 = vsel %vm537, %v2468, 0
        %v2528 = vsel %vm537, %v2469, 0
        %v2531 = vsel %vm537, %v2470, 0
        %v2534 = vsel %vm537, %v2471, 0
        %v2537 = vsel %vm537, %v2472, 0
        %v2540 = vsel %vm537, %v2473, 0
        %v2543 = vsel %vm537, %v2474, 0
        %v2546 = vsel %vm537, %v2475, 0
        %v2549 = vsel %vm537, %v2476, 0
        %v2552 = vsel %vm537, %v2477, 0
        %v2555 = vsel %vm537, %v2478, 0
        %v2558 = vsel %vm537, %v2479, 0
        %v2561 = vsel %vm537, %v2496, 0
        %v2564 = vsel %vm537, %v2497, 0
        %v2567 = vsel %vm537, %v2498, 0
        %v2570 = vsel %vm537, %v2499, 0
        %v2573 = vsel %vm537, %v2500, 0
        %v2576 = vsel %vm537, %v2501, 0
        %v2579 = vsel %vm537, %v2502, 0
        %v2582 = vsel %vm537, %v2503, 0
        %v2585 = vsel %vm537, %v2504, 0
        %v2588 = vsel %vm537, %v2505, 0
        %v2591 = vsel %vm537, %v2506, 0
        %v2594 = vsel %vm537, %v2507, 0
        %v2597 = vsel %vm537, %v2508, 0
        %v2600 = vsel %vm537, %v2509, 0
        %v2603 = vsel %vm537, %v2510, 0
        %v2606 = vsel %vm537, %v2511, 0
        %v2609 = vsel %vm282, %v222, 0
        %2611 = vmatpush.msra.mxu0 0.0
        %2612 = vmatpush.msra.mxu0 0.0
        %2613 = vmatpush.msra.mxu0 0.0
        %2614 = vmatpush.msra.mxu0 0.0
        %2615 = vmatpush.msra.mxu0 0.0
        %2616 = vmatpush.msra.mxu0 0.0
        %2617 = vmatpush.msra.mxu0 0.0
        %2618 = vmatpush.msra.mxu0 0.0
        %2619 = vmatpush.msra.mxu0 0.0
        %2620 = vmatpush.msra.mxu0 0.0
        %2621 = vmatpush.msra.mxu0 0.0
        %2622 = vmatpush.msra.mxu0 0.0
        %2623 = vmatpush.msra.mxu0 0.0
        %2624 = vmatpush.msra.mxu0 0.0
        %2625 = vmatpush.msra.mxu0 0.0
        %2626 = vmatpush.msra.mxu0 %v2609
        %2627 = vmatmul.f32.gmra.mxu0 %v2513
        %v2628 = vpop.f32.mrf.mxu0
        %v2629 = vadd.f32 0.0, %v2628
        %2630 = vmatmul.f32.gmra.mxu0 %v2516
        %v2631 = vpop.f32.mrf.mxu0
        %v2632 = vadd.f32 0.0, %v2631
        %2633 = vmatmul.f32.gmra.mxu0 %v2519
        %v2634 = vpop.f32.mrf.mxu0
        %v2635 = vadd.f32 0.0, %v2634
        %2636 = vmatmul.f32.gmra.mxu0 %v2522
        %v2637 = vpop.f32.mrf.mxu0
        %v2638 = vadd.f32 0.0, %v2637
        %2639 = vmatmul.f32.gmra.mxu0 %v2525
        %v2640 = vpop.f32.mrf.mxu0
        %v2641 = vadd.f32 0.0, %v2640
        %2642 = vmatmul.f32.gmra.mxu0 %v2528
        %v2643 = vpop.f32.mrf.mxu0
        %v2644 = vadd.f32 0.0, %v2643
        %2645 = vmatmul.f32.gmra.mxu0 %v2531
        %v2646 = vpop.f32.mrf.mxu0
        %v2647 = vadd.f32 0.0, %v2646
        %2648 = vmatmul.f32.gmra.mxu0 %v2534
        %v2649 = vpop.f32.mrf.mxu0
        %v2650 = vadd.f32 0.0, %v2649
        %2651 = vmatmul.f32.gmra.mxu0 %v2537
        %v2652 = vpop.f32.mrf.mxu0
        %v2653 = vadd.f32 0.0, %v2652
        %2654 = vmatmul.f32.gmra.mxu0 %v2540
        %v2655 = vpop.f32.mrf.mxu0
        %v2656 = vadd.f32 0.0, %v2655
        %2657 = vmatmul.f32.gmra.mxu0 %v2543
        %v2658 = vpop.f32.mrf.mxu0
        %v2659 = vadd.f32 0.0, %v2658
        %2660 = vmatmul.f32.gmra.mxu0 %v2546
        %v2661 = vpop.f32.mrf.mxu0
        %v2662 = vadd.f32 0.0, %v2661
        %2663 = vmatmul.f32.gmra.mxu0 %v2549
        %v2664 = vpop.f32.mrf.mxu0
        %v2665 = vadd.f32 0.0, %v2664
        %2666 = vmatmul.f32.gmra.mxu0 %v2552
        %v2667 = vpop.f32.mrf.mxu0
        %v2668 = vadd.f32 0.0, %v2667
        %2669 = vmatmul.f32.gmra.mxu0 %v2555
        %v2670 = vpop.f32.mrf.mxu0
        %v2671 = vadd.f32 0.0, %v2670
        %2672 = vmatmul.f32.gmra.mxu0 %v2558
        %v2673 = vpop.f32.mrf.mxu0
        %v2674 = vadd.f32 0.0, %v2673
        %2675 = vmatmul.f32.gmra.mxu0 %v2561
        %v2676 = vpop.f32.mrf.mxu0
        %v2677 = vadd.f32 0.0, %v2676
        %2678 = vmatmul.f32.gmra.mxu0 %v2564
        %v2679 = vpop.f32.mrf.mxu0
        %v2680 = vadd.f32 0.0, %v2679
        %2681 = vmatmul.f32.gmra.mxu0 %v2567
        %v2682 = vpop.f32.mrf.mxu0
        %v2683 = vadd.f32 0.0, %v2682
        %2684 = vmatmul.f32.gmra.mxu0 %v2570
        %v2685 = vpop.f32.mrf.mxu0
        %v2686 = vadd.f32 0.0, %v2685
        %2687 = vmatmul.f32.gmra.mxu0 %v2573
        %v2688 = vpop.f32.mrf.mxu0
        %v2689 = vadd.f32 0.0, %v2688
        %2690 = vmatmul.f32.gmra.mxu0 %v2576
        %v2691 = vpop.f32.mrf.mxu0
        %v2692 = vadd.f32 0.0, %v2691
        %2693 = vmatmul.f32.gmra.mxu0 %v2579
        %v2694 = vpop.f32.mrf.mxu0
        %v2695 = vadd.f32 0.0, %v2694
        %2696 = vmatmul.f32.gmra.mxu0 %v2582
        %v2697 = vpop.f32.mrf.mxu0
        %v2698 = vadd.f32 0.0, %v2697
        %2699 = vmatmul.f32.gmra.mxu0 %v2585
        %v2700 = vpop.f32.mrf.mxu0
        %v2701 = vadd.f32 0.0, %v2700
        %2702 = vmatmul.f32.gmra.mxu0 %v2588
        %v2703 = vpop.f32.mrf.mxu0
        %v2704 = vadd.f32 0.0, %v2703
        %2705 = vmatmul.f32.gmra.mxu0 %v2591
        %v2706 = vpop.f32.mrf.mxu0
        %v2707 = vadd.f32 0.0, %v2706
        %2708 = vmatmul.f32.gmra.mxu0 %v2594
        %v2709 = vpop.f32.mrf.mxu0
        %v2710 = vadd.f32 0.0, %v2709
        %2711 = vmatmul.f32.gmra.mxu0 %v2597
        %v2712 = vpop.f32.mrf.mxu0
        %v2713 = vadd.f32 0.0, %v2712
        %2714 = vmatmul.f32.gmra.mxu0 %v2600
        %v2715 = vpop.f32.mrf.mxu0
        %v2716 = vadd.f32 0.0, %v2715
        %2717 = vmatmul.f32.gmra.mxu0 %v2603
        %v2718 = vpop.f32.mrf.mxu0
        %v2719 = vadd.f32 0.0, %v2718
        %2720 = vmatmul.f32.gmra.mxu0 %v2606
        %v2721 = vpop.f32.mrf.mxu0
        %v2722 = vadd.f32 0.0, %v2721
        %2723 = vdwg.mxu0
        %v2724 = vadd.f32 %v655, %v409
        %v2725 = vadd.f32 %v658, %v409
        %v2726 = vadd.f32 %v661, %v409
        %v2727 = vadd.f32 %v664, %v409
        %v2728 = vadd.f32 %v667, %v409
        %v2729 = vadd.f32 %v670, %v409
        %v2730 = vadd.f32 %v673, %v409
        %v2731 = vadd.f32 %v676, %v409
        %v2732 = vadd.f32 %v679, %v409
        %v2733 = vadd.f32 %v682, %v409
        %v2734 = vadd.f32 %v685, %v409
        %v2735 = vadd.f32 %v688, %v409
        %v2736 = vadd.f32 %v691, %v409
        %v2737 = vadd.f32 %v694, %v409
        %v2738 = vadd.f32 %v697, %v409
        %v2739 = vadd.f32 %v700, %v409
        %v2740 = vadd.f32 %v703, %v409
        %v2741 = vadd.f32 %v706, %v409
        %v2742 = vadd.f32 %v709, %v409
        %v2743 = vadd.f32 %v712, %v409
        %v2744 = vadd.f32 %v715, %v409
        %v2745 = vadd.f32 %v718, %v409
        %v2746 = vadd.f32 %v721, %v409
        %v2747 = vadd.f32 %v724, %v409
        %v2748 = vadd.f32 %v727, %v409
        %v2749 = vadd.f32 %v730, %v409
        %v2750 = vadd.f32 %v733, %v409
        %v2751 = vadd.f32 %v736, %v409
        %v2752 = vadd.f32 %v739, %v409
        %v2753 = vadd.f32 %v742, %v409
        %v2754 = vadd.f32 %v745, %v409
        %v2755 = vadd.f32 %v748, %v409
        %v2756 = vadd.f32 %v937, %v416
        %v2757 = vadd.f32 %v940, %v416
        %v2758 = vadd.f32 %v943, %v416
        %v2759 = vadd.f32 %v946, %v416
        %v2760 = vadd.f32 %v949, %v416
        %v2761 = vadd.f32 %v952, %v416
        %v2762 = vadd.f32 %v955, %v416
        %v2763 = vadd.f32 %v958, %v416
        %v2764 = vadd.f32 %v961, %v416
        %v2765 = vadd.f32 %v964, %v416
        %v2766 = vadd.f32 %v967, %v416
        %v2767 = vadd.f32 %v970, %v416
        %v2768 = vadd.f32 %v973, %v416
        %v2769 = vadd.f32 %v976, %v416
        %v2770 = vadd.f32 %v979, %v416
        %v2771 = vadd.f32 %v982, %v416
        %v2772 = vadd.f32 %v985, %v416
        %v2773 = vadd.f32 %v988, %v416
        %v2774 = vadd.f32 %v991, %v416
        %v2775 = vadd.f32 %v994, %v416
        %v2776 = vadd.f32 %v997, %v416
        %v2777 = vadd.f32 %v1000, %v416
        %v2778 = vadd.f32 %v1003, %v416
        %v2779 = vadd.f32 %v1006, %v416
        %v2780 = vadd.f32 %v1009, %v416
        %v2781 = vadd.f32 %v1012, %v416
        %v2782 = vadd.f32 %v1015, %v416
        %v2783 = vadd.f32 %v1018, %v416
        %v2784 = vadd.f32 %v1021, %v416
        %v2785 = vadd.f32 %v1024, %v416
        %v2786 = vadd.f32 %v1027, %v416
        %v2787 = vadd.f32 %v1030, %v416
        %v2788 = vadd.f32 %v1219, %v423
        %v2789 = vadd.f32 %v1222, %v423
        %v2790 = vadd.f32 %v1225, %v423
        %v2791 = vadd.f32 %v1228, %v423
        %v2792 = vadd.f32 %v1231, %v423
        %v2793 = vadd.f32 %v1234, %v423
        %v2794 = vadd.f32 %v1237, %v423
        %v2795 = vadd.f32 %v1240, %v423
        %v2796 = vadd.f32 %v1243, %v423
        %v2797 = vadd.f32 %v1246, %v423
        %v2798 = vadd.f32 %v1249, %v423
        %v2799 = vadd.f32 %v1252, %v423
        %v2800 = vadd.f32 %v1255, %v423
        %v2801 = vadd.f32 %v1258, %v423
        %v2802 = vadd.f32 %v1261, %v423
        %v2803 = vadd.f32 %v1264, %v423
        %v2804 = vadd.f32 %v1267, %v423
        %v2805 = vadd.f32 %v1270, %v423
        %v2806 = vadd.f32 %v1273, %v423
        %v2807 = vadd.f32 %v1276, %v423
        %v2808 = vadd.f32 %v1279, %v423
        %v2809 = vadd.f32 %v1282, %v423
        %v2810 = vadd.f32 %v1285, %v423
        %v2811 = vadd.f32 %v1288, %v423
        %v2812 = vadd.f32 %v1291, %v423
        %v2813 = vadd.f32 %v1294, %v423
        %v2814 = vadd.f32 %v1297, %v423
        %v2815 = vadd.f32 %v1300, %v423
        %v2816 = vadd.f32 %v1303, %v423
        %v2817 = vadd.f32 %v1306, %v423
        %v2818 = vadd.f32 %v1309, %v423
        %v2819 = vadd.f32 %v1312, %v423
        %v2820 = vadd.f32 %v1501, %v430
        %v2821 = vadd.f32 %v1504, %v430
        %v2822 = vadd.f32 %v1507, %v430
        %v2823 = vadd.f32 %v1510, %v430
        %v2824 = vadd.f32 %v1513, %v430
        %v2825 = vadd.f32 %v1516, %v430
        %v2826 = vadd.f32 %v1519, %v430
        %v2827 = vadd.f32 %v1522, %v430
        %v2828 = vadd.f32 %v1525, %v430
        %v2829 = vadd.f32 %v1528, %v430
        %v2830 = vadd.f32 %v1531, %v430
        %v2831 = vadd.f32 %v1534, %v430
        %v2832 = vadd.f32 %v1537, %v430
        %v2833 = vadd.f32 %v1540, %v430
        %v2834 = vadd.f32 %v1543, %v430
        %v2835 = vadd.f32 %v1546, %v430
        %v2836 = vadd.f32 %v1549, %v430
        %v2837 = vadd.f32 %v1552, %v430
        %v2838 = vadd.f32 %v1555, %v430
        %v2839 = vadd.f32 %v1558, %v430
        %v2840 = vadd.f32 %v1561, %v430
        %v2841 = vadd.f32 %v1564, %v430
        %v2842 = vadd.f32 %v1567, %v430
        %v2843 = vadd.f32 %v1570, %v430
        %v2844 = vadd.f32 %v1573, %v430
        %v2845 = vadd.f32 %v1576, %v430
        %v2846 = vadd.f32 %v1579, %v430
        %v2847 = vadd.f32 %v1582, %v430
        %v2848 = vadd.f32 %v1585, %v430
        %v2849 = vadd.f32 %v1588, %v430
        %v2850 = vadd.f32 %v1591, %v430
        %v2851 = vadd.f32 %v1594, %v430
        %v2852 = vadd.f32 %v1783, %v437
        %v2853 = vadd.f32 %v1786, %v437
        %v2854 = vadd.f32 %v1789, %v437
        %v2855 = vadd.f32 %v1792, %v437
        %v2856 = vadd.f32 %v1795, %v437
        %v2857 = vadd.f32 %v1798, %v437
        %v2858 = vadd.f32 %v1801, %v437
        %v2859 = vadd.f32 %v1804, %v437
        %v2860 = vadd.f32 %v1807, %v437
        %v2861 = vadd.f32 %v1810, %v437
        %v2862 = vadd.f32 %v1813, %v437
        %v2863 = vadd.f32 %v1816, %v437
        %v2864 = vadd.f32 %v1819, %v437
        %v2865 = vadd.f32 %v1822, %v437
        %v2866 = vadd.f32 %v1825, %v437
        %v2867 = vadd.f32 %v1828, %v437
        %v2868 = vadd.f32 %v1831, %v437
        %v2869 = vadd.f32 %v1834, %v437
        %v2870 = vadd.f32 %v1837, %v437
        %v2871 = vadd.f32 %v1840, %v437
        %v2872 = vadd.f32 %v1843, %v437
        %v2873 = vadd.f32 %v1846, %v437
        %v2874 = vadd.f32 %v1849, %v437
        %v2875 = vadd.f32 %v1852, %v437
        %v2876 = vadd.f32 %v1855, %v437
        %v2877 = vadd.f32 %v1858, %v437
        %v2878 = vadd.f32 %v1861, %v437
        %v2879 = vadd.f32 %v1864, %v437
        %v2880 = vadd.f32 %v1867, %v437
        %v2881 = vadd.f32 %v1870, %v437
        %v2882 = vadd.f32 %v1873, %v437
        %v2883 = vadd.f32 %v1876, %v437
        %v2884 = vadd.f32 %v2065, %v444
        %v2885 = vadd.f32 %v2068, %v444
        %v2886 = vadd.f32 %v2071, %v444
        %v2887 = vadd.f32 %v2074, %v444
        %v2888 = vadd.f32 %v2077, %v444
        %v2889 = vadd.f32 %v2080, %v444
        %v2890 = vadd.f32 %v2083, %v444
        %v2891 = vadd.f32 %v2086, %v444
        %v2892 = vadd.f32 %v2089, %v444
        %v2893 = vadd.f32 %v2092, %v444
        %v2894 = vadd.f32 %v2095, %v444
        %v2895 = vadd.f32 %v2098, %v444
        %v2896 = vadd.f32 %v2101, %v444
        %v2897 = vadd.f32 %v2104, %v444
        %v2898 = vadd.f32 %v2107, %v444
        %v2899 = vadd.f32 %v2110, %v444
        %v2900 = vadd.f32 %v2113, %v444
        %v2901 = vadd.f32 %v2116, %v444
        %v2902 = vadd.f32 %v2119, %v444
        %v2903 = vadd.f32 %v2122, %v444
        %v2904 = vadd.f32 %v2125, %v444
        %v2905 = vadd.f32 %v2128, %v444
        %v2906 = vadd.f32 %v2131, %v444
        %v2907 = vadd.f32 %v2134, %v444
        %v2908 = vadd.f32 %v2137, %v444
        %v2909 = vadd.f32 %v2140, %v444
        %v2910 = vadd.f32 %v2143, %v444
        %v2911 = vadd.f32 %v2146, %v444
        %v2912 = vadd.f32 %v2149, %v444
        %v2913 = vadd.f32 %v2152, %v444
        %v2914 = vadd.f32 %v2155, %v444
        %v2915 = vadd.f32 %v2158, %v444
        %v2916 = vadd.f32 %v2347, %v451
        %v2917 = vadd.f32 %v2350, %v451
        %v2918 = vadd.f32 %v2353, %v451
        %v2919 = vadd.f32 %v2356, %v451
        %v2920 = vadd.f32 %v2359, %v451
        %v2921 = vadd.f32 %v2362, %v451
        %v2922 = vadd.f32 %v2365, %v451
        %v2923 = vadd.f32 %v2368, %v451
        %v2924 = vadd.f32 %v2371, %v451
        %v2925 = vadd.f32 %v2374, %v451
        %v2926 = vadd.f32 %v2377, %v451
        %v2927 = vadd.f32 %v2380, %v451
        %v2928 = vadd.f32 %v2383, %v451
        %v2929 = vadd.f32 %v2386, %v451
        %v2930 = vadd.f32 %v2389, %v451
        %v2931 = vadd.f32 %v2392, %v451
        %v2932 = vadd.f32 %v2395, %v451
        %v2933 = vadd.f32 %v2398, %v451
        %v2934 = vadd.f32 %v2401, %v451
        %v2935 = vadd.f32 %v2404, %v451
        %v2936 = vadd.f32 %v2407, %v451
        %v2937 = vadd.f32 %v2410, %v451
        %v2938 = vadd.f32 %v2413, %v451
        %v2939 = vadd.f32 %v2416, %v451
        %v2940 = vadd.f32 %v2419, %v451
        %v2941 = vadd.f32 %v2422, %v451
        %v2942 = vadd.f32 %v2425, %v451
        %v2943 = vadd.f32 %v2428, %v451
        %v2944 = vadd.f32 %v2431, %v451
        %v2945 = vadd.f32 %v2434, %v451
        %v2946 = vadd.f32 %v2437, %v451
        %v2947 = vadd.f32 %v2440, %v451
        %v2948 = vadd.f32 %v2629, %v458
        %v2949 = vadd.f32 %v2632, %v458
        %v2950 = vadd.f32 %v2635, %v458
        %v2951 = vadd.f32 %v2638, %v458
        %v2952 = vadd.f32 %v2641, %v458
        %v2953 = vadd.f32 %v2644, %v458
        %v2954 = vadd.f32 %v2647, %v458
        %v2955 = vadd.f32 %v2650, %v458
        %v2956 = vadd.f32 %v2653, %v458
        %v2957 = vadd.f32 %v2656, %v458
        %v2958 = vadd.f32 %v2659, %v458
        %v2959 = vadd.f32 %v2662, %v458
        %v2960 = vadd.f32 %v2665, %v458
        %v2961 = vadd.f32 %v2668, %v458
        %v2962 = vadd.f32 %v2671, %v458
        %v2963 = vadd.f32 %v2674, %v458
        %v2964 = vadd.f32 %v2677, %v458
        %v2965 = vadd.f32 %v2680, %v458
        %v2966 = vadd.f32 %v2683, %v458
        %v2967 = vadd.f32 %v2686, %v458
        %v2968 = vadd.f32 %v2689, %v458
        %v2969 = vadd.f32 %v2692, %v458
        %v2970 = vadd.f32 %v2695, %v458
        %v2971 = vadd.f32 %v2698, %v458
        %v2972 = vadd.f32 %v2701, %v458
        %v2973 = vadd.f32 %v2704, %v458
        %v2974 = vadd.f32 %v2707, %v458
        %v2975 = vadd.f32 %v2710, %v458
        %v2976 = vadd.f32 %v2713, %v458
        %v2977 = vadd.f32 %v2716, %v458
        %v2978 = vadd.f32 %v2719, %v458
        %v2979 = vadd.f32 %v2722, %v458
        %2980 = vmin.xlane.f32.xlu0 %v2724
        %v2981 = vpop.xlane.xlu0 %2980
        %2982 = vmin.xlane.f32.xlu0 %v2725
        %v2983 = vpop.xlane.xlu0 %2982
        %2984 = vmin.xlane.f32.xlu0 %v2726
        %v2985 = vpop.xlane.xlu0 %2984
        %2986 = vmin.xlane.f32.xlu0 %v2727
        %v2987 = vpop.xlane.xlu0 %2986
        %2988 = vmin.xlane.f32.xlu0 %v2728
        %v2989 = vpop.xlane.xlu0 %2988
        %2990 = vmin.xlane.f32.xlu0 %v2729
        %v2991 = vpop.xlane.xlu0 %2990
        %2992 = vmin.xlane.f32.xlu0 %v2730
        %v2993 = vpop.xlane.xlu0 %2992
        %2994 = vmin.xlane.f32.xlu0 %v2731
        %v2995 = vpop.xlane.xlu0 %2994
        %2996 = vmin.xlane.f32.xlu0 %v2732
        %v2997 = vpop.xlane.xlu0 %2996
        %2998 = vmin.xlane.f32.xlu0 %v2733
        %v2999 = vpop.xlane.xlu0 %2998
        %3000 = vmin.xlane.f32.xlu0 %v2734
        %v3001 = vpop.xlane.xlu0 %3000
        %3002 = vmin.xlane.f32.xlu0 %v2735
        %v3003 = vpop.xlane.xlu0 %3002
        %3004 = vmin.xlane.f32.xlu0 %v2736
        %v3005 = vpop.xlane.xlu0 %3004
        %3006 = vmin.xlane.f32.xlu0 %v2737
        %v3007 = vpop.xlane.xlu0 %3006
        %3008 = vmin.xlane.f32.xlu0 %v2738
        %v3009 = vpop.xlane.xlu0 %3008
        %3010 = vmin.xlane.f32.xlu0 %v2739
        %v3011 = vpop.xlane.xlu0 %3010
        %3012 = vmin.xlane.f32.xlu0 %v2740
        %v3013 = vpop.xlane.xlu0 %3012
        %3014 = vmin.xlane.f32.xlu0 %v2741
        %v3015 = vpop.xlane.xlu0 %3014
        %3016 = vmin.xlane.f32.xlu0 %v2742
        %v3017 = vpop.xlane.xlu0 %3016
        %3018 = vmin.xlane.f32.xlu0 %v2743
        %v3019 = vpop.xlane.xlu0 %3018
        %3020 = vmin.xlane.f32.xlu0 %v2744
        %v3021 = vpop.xlane.xlu0 %3020
        %3022 = vmin.xlane.f32.xlu0 %v2745
        %v3023 = vpop.xlane.xlu0 %3022
        %3024 = vmin.xlane.f32.xlu0 %v2746
        %v3025 = vpop.xlane.xlu0 %3024
        %3026 = vmin.xlane.f32.xlu0 %v2747
        %v3027 = vpop.xlane.xlu0 %3026
        %3028 = vmin.xlane.f32.xlu0 %v2748
        %v3029 = vpop.xlane.xlu0 %3028
        %3030 = vmin.xlane.f32.xlu0 %v2749
        %v3031 = vpop.xlane.xlu0 %3030
        %3032 = vmin.xlane.f32.xlu0 %v2750
        %v3033 = vpop.xlane.xlu0 %3032
        %3034 = vmin.xlane.f32.xlu0 %v2751
        %v3035 = vpop.xlane.xlu0 %3034
        %3036 = vmin.xlane.f32.xlu0 %v2752
        %v3037 = vpop.xlane.xlu0 %3036
        %3038 = vmin.xlane.f32.xlu0 %v2753
        %v3039 = vpop.xlane.xlu0 %3038
        %3040 = vmin.xlane.f32.xlu0 %v2754
        %v3041 = vpop.xlane.xlu0 %3040
        %3042 = vmin.xlane.f32.xlu0 %v2755
        %v3043 = vpop.xlane.xlu0 %3042
        %3044 = vmin.xlane.f32.xlu0 %v2756
        %v3045 = vpop.xlane.xlu0 %3044
        %3046 = vmin.xlane.f32.xlu0 %v2757
        %v3047 = vpop.xlane.xlu0 %3046
        %3048 = vmin.xlane.f32.xlu0 %v2758
        %v3049 = vpop.xlane.xlu0 %3048
        %3050 = vmin.xlane.f32.xlu0 %v2759
        %v3051 = vpop.xlane.xlu0 %3050
        %3052 = vmin.xlane.f32.xlu0 %v2760
        %v3053 = vpop.xlane.xlu0 %3052
        %3054 = vmin.xlane.f32.xlu0 %v2761
        %v3055 = vpop.xlane.xlu0 %3054
        %3056 = vmin.xlane.f32.xlu0 %v2762
        %v3057 = vpop.xlane.xlu0 %3056
        %3058 = vmin.xlane.f32.xlu0 %v2763
        %v3059 = vpop.xlane.xlu0 %3058
        %3060 = vmin.xlane.f32.xlu0 %v2764
        %v3061 = vpop.xlane.xlu0 %3060
        %3062 = vmin.xlane.f32.xlu0 %v2765
        %v3063 = vpop.xlane.xlu0 %3062
        %3064 = vmin.xlane.f32.xlu0 %v2766
        %v3065 = vpop.xlane.xlu0 %3064
        %3066 = vmin.xlane.f32.xlu0 %v2767
        %v3067 = vpop.xlane.xlu0 %3066
        %3068 = vmin.xlane.f32.xlu0 %v2768
        %v3069 = vpop.xlane.xlu0 %3068
        %3070 = vmin.xlane.f32.xlu0 %v2769
        %v3071 = vpop.xlane.xlu0 %3070
        %3072 = vmin.xlane.f32.xlu0 %v2770
        %v3073 = vpop.xlane.xlu0 %3072
        %3074 = vmin.xlane.f32.xlu0 %v2771
        %v3075 = vpop.xlane.xlu0 %3074
        %3076 = vmin.xlane.f32.xlu0 %v2772
        %v3077 = vpop.xlane.xlu0 %3076
        %3078 = vmin.xlane.f32.xlu0 %v2773
        %v3079 = vpop.xlane.xlu0 %3078
        %3080 = vmin.xlane.f32.xlu0 %v2774
        %v3081 = vpop.xlane.xlu0 %3080
        %3082 = vmin.xlane.f32.xlu0 %v2775
        %v3083 = vpop.xlane.xlu0 %3082
        %3084 = vmin.xlane.f32.xlu0 %v2776
        %v3085 = vpop.xlane.xlu0 %3084
        %3086 = vmin.xlane.f32.xlu0 %v2777
        %v3087 = vpop.xlane.xlu0 %3086
        %3088 = vmin.xlane.f32.xlu0 %v2778
        %v3089 = vpop.xlane.xlu0 %3088
        %3090 = vmin.xlane.f32.xlu0 %v2779
        %v3091 = vpop.xlane.xlu0 %3090
        %3092 = vmin.xlane.f32.xlu0 %v2780
        %v3093 = vpop.xlane.xlu0 %3092
        %3094 = vmin.xlane.f32.xlu0 %v2781
        %v3095 = vpop.xlane.xlu0 %3094
        %3096 = vmin.xlane.f32.xlu0 %v2782
        %v3097 = vpop.xlane.xlu0 %3096
        %3098 = vmin.xlane.f32.xlu0 %v2783
        %v3099 = vpop.xlane.xlu0 %3098
        %3100 = vmin.xlane.f32.xlu0 %v2784
        %v3101 = vpop.xlane.xlu0 %3100
        %3102 = vmin.xlane.f32.xlu0 %v2785
        %v3103 = vpop.xlane.xlu0 %3102
        %3104 = vmin.xlane.f32.xlu0 %v2786
        %v3105 = vpop.xlane.xlu0 %3104
        %3106 = vmin.xlane.f32.xlu0 %v2787
        %v3107 = vpop.xlane.xlu0 %3106
        %3108 = vmin.xlane.f32.xlu0 %v2788
        %v3109 = vpop.xlane.xlu0 %3108
        %3110 = vmin.xlane.f32.xlu0 %v2789
        %v3111 = vpop.xlane.xlu0 %3110
        %3112 = vmin.xlane.f32.xlu0 %v2790
        %v3113 = vpop.xlane.xlu0 %3112
        %3114 = vmin.xlane.f32.xlu0 %v2791
        %v3115 = vpop.xlane.xlu0 %3114
        %3116 = vmin.xlane.f32.xlu0 %v2792
        %v3117 = vpop.xlane.xlu0 %3116
        %3118 = vmin.xlane.f32.xlu0 %v2793
        %v3119 = vpop.xlane.xlu0 %3118
        %3120 = vmin.xlane.f32.xlu0 %v2794
        %v3121 = vpop.xlane.xlu0 %3120
        %3122 = vmin.xlane.f32.xlu0 %v2795
        %v3123 = vpop.xlane.xlu0 %3122
        %3124 = vmin.xlane.f32.xlu0 %v2796
        %v3125 = vpop.xlane.xlu0 %3124
        %3126 = vmin.xlane.f32.xlu0 %v2797
        %v3127 = vpop.xlane.xlu0 %3126
        %3128 = vmin.xlane.f32.xlu0 %v2798
        %v3129 = vpop.xlane.xlu0 %3128
        %3130 = vmin.xlane.f32.xlu0 %v2799
        %v3131 = vpop.xlane.xlu0 %3130
        %3132 = vmin.xlane.f32.xlu0 %v2800
        %v3133 = vpop.xlane.xlu0 %3132
        %3134 = vmin.xlane.f32.xlu0 %v2801
        %v3135 = vpop.xlane.xlu0 %3134
        %3136 = vmin.xlane.f32.xlu0 %v2802
        %v3137 = vpop.xlane.xlu0 %3136
        %3138 = vmin.xlane.f32.xlu0 %v2803
        %v3139 = vpop.xlane.xlu0 %3138
        %3140 = vmin.xlane.f32.xlu0 %v2804
        %v3141 = vpop.xlane.xlu0 %3140
        %3142 = vmin.xlane.f32.xlu0 %v2805
        %v3143 = vpop.xlane.xlu0 %3142
        %3144 = vmin.xlane.f32.xlu0 %v2806
        %v3145 = vpop.xlane.xlu0 %3144
        %3146 = vmin.xlane.f32.xlu0 %v2807
        %v3147 = vpop.xlane.xlu0 %3146
        %3148 = vmin.xlane.f32.xlu0 %v2808
        %v3149 = vpop.xlane.xlu0 %3148
        %3150 = vmin.xlane.f32.xlu0 %v2809
        %v3151 = vpop.xlane.xlu0 %3150
        %3152 = vmin.xlane.f32.xlu0 %v2810
        %v3153 = vpop.xlane.xlu0 %3152
        %3154 = vmin.xlane.f32.xlu0 %v2811
        %v3155 = vpop.xlane.xlu0 %3154
        %3156 = vmin.xlane.f32.xlu0 %v2812
        %v3157 = vpop.xlane.xlu0 %3156
        %3158 = vmin.xlane.f32.xlu0 %v2813
        %v3159 = vpop.xlane.xlu0 %3158
        %3160 = vmin.xlane.f32.xlu0 %v2814
        %v3161 = vpop.xlane.xlu0 %3160
        %3162 = vmin.xlane.f32.xlu0 %v2815
        %v3163 = vpop.xlane.xlu0 %3162
        %3164 = vmin.xlane.f32.xlu0 %v2816
        %v3165 = vpop.xlane.xlu0 %3164
        %3166 = vmin.xlane.f32.xlu0 %v2817
        %v3167 = vpop.xlane.xlu0 %3166
        %3168 = vmin.xlane.f32.xlu0 %v2818
        %v3169 = vpop.xlane.xlu0 %3168
        %3170 = vmin.xlane.f32.xlu0 %v2819
        %v3171 = vpop.xlane.xlu0 %3170
        %3172 = vmin.xlane.f32.xlu0 %v2820
        %v3173 = vpop.xlane.xlu0 %3172
        %3174 = vmin.xlane.f32.xlu0 %v2821
        %v3175 = vpop.xlane.xlu0 %3174
        %3176 = vmin.xlane.f32.xlu0 %v2822
        %v3177 = vpop.xlane.xlu0 %3176
        %3178 = vmin.xlane.f32.xlu0 %v2823
        %v3179 = vpop.xlane.xlu0 %3178
        %3180 = vmin.xlane.f32.xlu0 %v2824
        %v3181 = vpop.xlane.xlu0 %3180
        %3182 = vmin.xlane.f32.xlu0 %v2825
        %v3183 = vpop.xlane.xlu0 %3182
        %3184 = vmin.xlane.f32.xlu0 %v2826
        %v3185 = vpop.xlane.xlu0 %3184
        %3186 = vmin.xlane.f32.xlu0 %v2827
        %v3187 = vpop.xlane.xlu0 %3186
        %3188 = vmin.xlane.f32.xlu0 %v2828
        %v3189 = vpop.xlane.xlu0 %3188
        %3190 = vmin.xlane.f32.xlu0 %v2829
        %v3191 = vpop.xlane.xlu0 %3190
        %3192 = vmin.xlane.f32.xlu0 %v2830
        %v3193 = vpop.xlane.xlu0 %3192
        %3194 = vmin.xlane.f32.xlu0 %v2831
        %v3195 = vpop.xlane.xlu0 %3194
        %3196 = vmin.xlane.f32.xlu0 %v2832
        %v3197 = vpop.xlane.xlu0 %3196
        %3198 = vmin.xlane.f32.xlu0 %v2833
        %v3199 = vpop.xlane.xlu0 %3198
        %3200 = vmin.xlane.f32.xlu0 %v2834
        %v3201 = vpop.xlane.xlu0 %3200
        %3202 = vmin.xlane.f32.xlu0 %v2835
        %v3203 = vpop.xlane.xlu0 %3202
        %3204 = vmin.xlane.f32.xlu0 %v2836
        %v3205 = vpop.xlane.xlu0 %3204
        %3206 = vmin.xlane.f32.xlu0 %v2837
        %v3207 = vpop.xlane.xlu0 %3206
        %3208 = vmin.xlane.f32.xlu0 %v2838
        %v3209 = vpop.xlane.xlu0 %3208
        %3210 = vmin.xlane.f32.xlu0 %v2839
        %v3211 = vpop.xlane.xlu0 %3210
        %3212 = vmin.xlane.f32.xlu0 %v2840
        %v3213 = vpop.xlane.xlu0 %3212
        %3214 = vmin.xlane.f32.xlu0 %v2841
        %v3215 = vpop.xlane.xlu0 %3214
        %3216 = vmin.xlane.f32.xlu0 %v2842
        %v3217 = vpop.xlane.xlu0 %3216
        %3218 = vmin.xlane.f32.xlu0 %v2843
        %v3219 = vpop.xlane.xlu0 %3218
        %3220 = vmin.xlane.f32.xlu0 %v2844
        %v3221 = vpop.xlane.xlu0 %3220
        %3222 = vmin.xlane.f32.xlu0 %v2845
        %v3223 = vpop.xlane.xlu0 %3222
        %3224 = vmin.xlane.f32.xlu0 %v2846
        %v3225 = vpop.xlane.xlu0 %3224
        %3226 = vmin.xlane.f32.xlu0 %v2847
        %v3227 = vpop.xlane.xlu0 %3226
        %3228 = vmin.xlane.f32.xlu0 %v2848
        %v3229 = vpop.xlane.xlu0 %3228
        %3230 = vmin.xlane.f32.xlu0 %v2849
        %v3231 = vpop.xlane.xlu0 %3230
        %3232 = vmin.xlane.f32.xlu0 %v2850
        %v3233 = vpop.xlane.xlu0 %3232
        %3234 = vmin.xlane.f32.xlu0 %v2851
        %v3235 = vpop.xlane.xlu0 %3234
        %3236 = vmin.xlane.f32.xlu0 %v2852
        %v3237 = vpop.xlane.xlu0 %3236
        %3238 = vmin.xlane.f32.xlu0 %v2853
        %v3239 = vpop.xlane.xlu0 %3238
        %3240 = vmin.xlane.f32.xlu0 %v2854
        %v3241 = vpop.xlane.xlu0 %3240
        %3242 = vmin.xlane.f32.xlu0 %v2855
        %v3243 = vpop.xlane.xlu0 %3242
        %3244 = vmin.xlane.f32.xlu0 %v2856
        %v3245 = vpop.xlane.xlu0 %3244
        %3246 = vmin.xlane.f32.xlu0 %v2857
        %v3247 = vpop.xlane.xlu0 %3246
        %3248 = vmin.xlane.f32.xlu0 %v2858
        %v3249 = vpop.xlane.xlu0 %3248
        %3250 = vmin.xlane.f32.xlu0 %v2859
        %v3251 = vpop.xlane.xlu0 %3250
        %3252 = vmin.xlane.f32.xlu0 %v2860
        %v3253 = vpop.xlane.xlu0 %3252
        %3254 = vmin.xlane.f32.xlu0 %v2861
        %v3255 = vpop.xlane.xlu0 %3254
        %3256 = vmin.xlane.f32.xlu0 %v2862
        %v3257 = vpop.xlane.xlu0 %3256
        %3258 = vmin.xlane.f32.xlu0 %v2863
        %v3259 = vpop.xlane.xlu0 %3258
        %3260 = vmin.xlane.f32.xlu0 %v2864
        %v3261 = vpop.xlane.xlu0 %3260
        %3262 = vmin.xlane.f32.xlu0 %v2865
        %v3263 = vpop.xlane.xlu0 %3262
        %3264 = vmin.xlane.f32.xlu0 %v2866
        %v3265 = vpop.xlane.xlu0 %3264
        %3266 = vmin.xlane.f32.xlu0 %v2867
        %v3267 = vpop.xlane.xlu0 %3266
        %3268 = vmin.xlane.f32.xlu0 %v2868
        %v3269 = vpop.xlane.xlu0 %3268
        %3270 = vmin.xlane.f32.xlu0 %v2869
        %v3271 = vpop.xlane.xlu0 %3270
        %3272 = vmin.xlane.f32.xlu0 %v2870
        %v3273 = vpop.xlane.xlu0 %3272
        %3274 = vmin.xlane.f32.xlu0 %v2871
        %v3275 = vpop.xlane.xlu0 %3274
        %3276 = vmin.xlane.f32.xlu0 %v2872
        %v3277 = vpop.xlane.xlu0 %3276
        %3278 = vmin.xlane.f32.xlu0 %v2873
        %v3279 = vpop.xlane.xlu0 %3278
        %3280 = vmin.xlane.f32.xlu0 %v2874
        %v3281 = vpop.xlane.xlu0 %3280
        %3282 = vmin.xlane.f32.xlu0 %v2875
        %v3283 = vpop.xlane.xlu0 %3282
        %3284 = vmin.xlane.f32.xlu0 %v2876
        %v3285 = vpop.xlane.xlu0 %3284
        %3286 = vmin.xlane.f32.xlu0 %v2877
        %v3287 = vpop.xlane.xlu0 %3286
        %3288 = vmin.xlane.f32.xlu0 %v2878
        %v3289 = vpop.xlane.xlu0 %3288
        %3290 = vmin.xlane.f32.xlu0 %v2879
        %v3291 = vpop.xlane.xlu0 %3290
        %3292 = vmin.xlane.f32.xlu0 %v2880
        %v3293 = vpop.xlane.xlu0 %3292
        %3294 = vmin.xlane.f32.xlu0 %v2881
        %v3295 = vpop.xlane.xlu0 %3294
        %3296 = vmin.xlane.f32.xlu0 %v2882
        %v3297 = vpop.xlane.xlu0 %3296
        %3298 = vmin.xlane.f32.xlu0 %v2883
        %v3299 = vpop.xlane.xlu0 %3298
        %3300 = vmin.xlane.f32.xlu0 %v2884
        %v3301 = vpop.xlane.xlu0 %3300
        %3302 = vmin.xlane.f32.xlu0 %v2885
        %v3303 = vpop.xlane.xlu0 %3302
        %3304 = vmin.xlane.f32.xlu0 %v2886
        %v3305 = vpop.xlane.xlu0 %3304
        %3306 = vmin.xlane.f32.xlu0 %v2887
        %v3307 = vpop.xlane.xlu0 %3306
        %3308 = vmin.xlane.f32.xlu0 %v2888
        %v3309 = vpop.xlane.xlu0 %3308
        %3310 = vmin.xlane.f32.xlu0 %v2889
        %v3311 = vpop.xlane.xlu0 %3310
        %3312 = vmin.xlane.f32.xlu0 %v2890
        %v3313 = vpop.xlane.xlu0 %3312
        %3314 = vmin.xlane.f32.xlu0 %v2891
        %v3315 = vpop.xlane.xlu0 %3314
        %3316 = vmin.xlane.f32.xlu0 %v2892
        %v3317 = vpop.xlane.xlu0 %3316
        %3318 = vmin.xlane.f32.xlu0 %v2893
        %v3319 = vpop.xlane.xlu0 %3318
        %3320 = vmin.xlane.f32.xlu0 %v2894
        %v3321 = vpop.xlane.xlu0 %3320
        %3322 = vmin.xlane.f32.xlu0 %v2895
        %v3323 = vpop.xlane.xlu0 %3322
        %3324 = vmin.xlane.f32.xlu0 %v2896
        %v3325 = vpop.xlane.xlu0 %3324
        %3326 = vmin.xlane.f32.xlu0 %v2897
        %v3327 = vpop.xlane.xlu0 %3326
        %3328 = vmin.xlane.f32.xlu0 %v2898
        %v3329 = vpop.xlane.xlu0 %3328
        %3330 = vmin.xlane.f32.xlu0 %v2899
        %v3331 = vpop.xlane.xlu0 %3330
        %3332 = vmin.xlane.f32.xlu0 %v2900
        %v3333 = vpop.xlane.xlu0 %3332
        %3334 = vmin.xlane.f32.xlu0 %v2901
        %v3335 = vpop.xlane.xlu0 %3334
        %3336 = vmin.xlane.f32.xlu0 %v2902
        %v3337 = vpop.xlane.xlu0 %3336
        %3338 = vmin.xlane.f32.xlu0 %v2903
        %v3339 = vpop.xlane.xlu0 %3338
        %3340 = vmin.xlane.f32.xlu0 %v2904
        %v3341 = vpop.xlane.xlu0 %3340
        %3342 = vmin.xlane.f32.xlu0 %v2905
        %v3343 = vpop.xlane.xlu0 %3342
        %3344 = vmin.xlane.f32.xlu0 %v2906
        %v3345 = vpop.xlane.xlu0 %3344
        %3346 = vmin.xlane.f32.xlu0 %v2907
        %v3347 = vpop.xlane.xlu0 %3346
        %3348 = vmin.xlane.f32.xlu0 %v2908
        %v3349 = vpop.xlane.xlu0 %3348
        %3350 = vmin.xlane.f32.xlu0 %v2909
        %v3351 = vpop.xlane.xlu0 %3350
        %3352 = vmin.xlane.f32.xlu0 %v2910
        %v3353 = vpop.xlane.xlu0 %3352
        %3354 = vmin.xlane.f32.xlu0 %v2911
        %v3355 = vpop.xlane.xlu0 %3354
        %3356 = vmin.xlane.f32.xlu0 %v2912
        %v3357 = vpop.xlane.xlu0 %3356
        %3358 = vmin.xlane.f32.xlu0 %v2913
        %v3359 = vpop.xlane.xlu0 %3358
        %3360 = vmin.xlane.f32.xlu0 %v2914
        %v3361 = vpop.xlane.xlu0 %3360
        %3362 = vmin.xlane.f32.xlu0 %v2915
        %v3363 = vpop.xlane.xlu0 %3362
        %3364 = vmin.xlane.f32.xlu0 %v2916
        %v3365 = vpop.xlane.xlu0 %3364
        %3366 = vmin.xlane.f32.xlu0 %v2917
        %v3367 = vpop.xlane.xlu0 %3366
        %3368 = vmin.xlane.f32.xlu0 %v2918
        %v3369 = vpop.xlane.xlu0 %3368
        %3370 = vmin.xlane.f32.xlu0 %v2919
        %v3371 = vpop.xlane.xlu0 %3370
        %3372 = vmin.xlane.f32.xlu0 %v2920
        %v3373 = vpop.xlane.xlu0 %3372
        %3374 = vmin.xlane.f32.xlu0 %v2921
        %v3375 = vpop.xlane.xlu0 %3374
        %3376 = vmin.xlane.f32.xlu0 %v2922
        %v3377 = vpop.xlane.xlu0 %3376
        %3378 = vmin.xlane.f32.xlu0 %v2923
        %v3379 = vpop.xlane.xlu0 %3378
        %3380 = vmin.xlane.f32.xlu0 %v2924
        %v3381 = vpop.xlane.xlu0 %3380
        %3382 = vmin.xlane.f32.xlu0 %v2925
        %v3383 = vpop.xlane.xlu0 %3382
        %3384 = vmin.xlane.f32.xlu0 %v2926
        %v3385 = vpop.xlane.xlu0 %3384
        %3386 = vmin.xlane.f32.xlu0 %v2927
        %v3387 = vpop.xlane.xlu0 %3386
        %3388 = vmin.xlane.f32.xlu0 %v2928
        %v3389 = vpop.xlane.xlu0 %3388
        %3390 = vmin.xlane.f32.xlu0 %v2929
        %v3391 = vpop.xlane.xlu0 %3390
        %3392 = vmin.xlane.f32.xlu0 %v2930
        %v3393 = vpop.xlane.xlu0 %3392
        %3394 = vmin.xlane.f32.xlu0 %v2931
        %v3395 = vpop.xlane.xlu0 %3394
        %3396 = vmin.xlane.f32.xlu0 %v2932
        %v3397 = vpop.xlane.xlu0 %3396
        %3398 = vmin.xlane.f32.xlu0 %v2933
        %v3399 = vpop.xlane.xlu0 %3398
        %3400 = vmin.xlane.f32.xlu0 %v2934
        %v3401 = vpop.xlane.xlu0 %3400
        %3402 = vmin.xlane.f32.xlu0 %v2935
        %v3403 = vpop.xlane.xlu0 %3402
        %3404 = vmin.xlane.f32.xlu0 %v2936
        %v3405 = vpop.xlane.xlu0 %3404
        %3406 = vmin.xlane.f32.xlu0 %v2937
        %v3407 = vpop.xlane.xlu0 %3406
        %3408 = vmin.xlane.f32.xlu0 %v2938
        %v3409 = vpop.xlane.xlu0 %3408
        %3410 = vmin.xlane.f32.xlu0 %v2939
        %v3411 = vpop.xlane.xlu0 %3410
        %3412 = vmin.xlane.f32.xlu0 %v2940
        %v3413 = vpop.xlane.xlu0 %3412
        %3414 = vmin.xlane.f32.xlu0 %v2941
        %v3415 = vpop.xlane.xlu0 %3414
        %3416 = vmin.xlane.f32.xlu0 %v2942
        %v3417 = vpop.xlane.xlu0 %3416
        %3418 = vmin.xlane.f32.xlu0 %v2943
        %v3419 = vpop.xlane.xlu0 %3418
        %3420 = vmin.xlane.f32.xlu0 %v2944
        %v3421 = vpop.xlane.xlu0 %3420
        %3422 = vmin.xlane.f32.xlu0 %v2945
        %v3423 = vpop.xlane.xlu0 %3422
        %3424 = vmin.xlane.f32.xlu0 %v2946
        %v3425 = vpop.xlane.xlu0 %3424
        %3426 = vmin.xlane.f32.xlu0 %v2947
        %v3427 = vpop.xlane.xlu0 %3426
        %3428 = vmin.xlane.f32.xlu0 %v2948
        %v3429 = vpop.xlane.xlu0 %3428
        %3430 = vmin.xlane.f32.xlu0 %v2949
        %v3431 = vpop.xlane.xlu0 %3430
        %3432 = vmin.xlane.f32.xlu0 %v2950
        %v3433 = vpop.xlane.xlu0 %3432
        %3434 = vmin.xlane.f32.xlu0 %v2951
        %v3435 = vpop.xlane.xlu0 %3434
        %3436 = vmin.xlane.f32.xlu0 %v2952
        %v3437 = vpop.xlane.xlu0 %3436
        %3438 = vmin.xlane.f32.xlu0 %v2953
        %v3439 = vpop.xlane.xlu0 %3438
        %3440 = vmin.xlane.f32.xlu0 %v2954
        %v3441 = vpop.xlane.xlu0 %3440
        %3442 = vmin.xlane.f32.xlu0 %v2955
        %v3443 = vpop.xlane.xlu0 %3442
        %3444 = vmin.xlane.f32.xlu0 %v2956
        %v3445 = vpop.xlane.xlu0 %3444
        %3446 = vmin.xlane.f32.xlu0 %v2957
        %v3447 = vpop.xlane.xlu0 %3446
        %3448 = vmin.xlane.f32.xlu0 %v2958
        %v3449 = vpop.xlane.xlu0 %3448
        %3450 = vmin.xlane.f32.xlu0 %v2959
        %v3451 = vpop.xlane.xlu0 %3450
        %3452 = vmin.xlane.f32.xlu0 %v2960
        %v3453 = vpop.xlane.xlu0 %3452
        %3454 = vmin.xlane.f32.xlu0 %v2961
        %v3455 = vpop.xlane.xlu0 %3454
        %3456 = vmin.xlane.f32.xlu0 %v2962
        %v3457 = vpop.xlane.xlu0 %3456
        %3458 = vmin.xlane.f32.xlu0 %v2963
        %v3459 = vpop.xlane.xlu0 %3458
        %3460 = vmin.xlane.f32.xlu0 %v2964
        %v3461 = vpop.xlane.xlu0 %3460
        %3462 = vmin.xlane.f32.xlu0 %v2965
        %v3463 = vpop.xlane.xlu0 %3462
        %3464 = vmin.xlane.f32.xlu0 %v2966
        %v3465 = vpop.xlane.xlu0 %3464
        %3466 = vmin.xlane.f32.xlu0 %v2967
        %v3467 = vpop.xlane.xlu0 %3466
        %3468 = vmin.xlane.f32.xlu0 %v2968
        %v3469 = vpop.xlane.xlu0 %3468
        %3470 = vmin.xlane.f32.xlu0 %v2969
        %v3471 = vpop.xlane.xlu0 %3470
        %3472 = vmin.xlane.f32.xlu0 %v2970
        %v3473 = vpop.xlane.xlu0 %3472
        %3474 = vmin.xlane.f32.xlu0 %v2971
        %v3475 = vpop.xlane.xlu0 %3474
        %3476 = vmin.xlane.f32.xlu0 %v2972
        %v3477 = vpop.xlane.xlu0 %3476
        %3478 = vmin.xlane.f32.xlu0 %v2973
        %v3479 = vpop.xlane.xlu0 %3478
        %3480 = vmin.xlane.f32.xlu0 %v2974
        %v3481 = vpop.xlane.xlu0 %3480
        %3482 = vmin.xlane.f32.xlu0 %v2975
        %v3483 = vpop.xlane.xlu0 %3482
        %3484 = vmin.xlane.f32.xlu0 %v2976
        %v3485 = vpop.xlane.xlu0 %3484
        %3486 = vmin.xlane.f32.xlu0 %v2977
        %v3487 = vpop.xlane.xlu0 %3486
        %3488 = vmin.xlane.f32.xlu0 %v2978
        %v3489 = vpop.xlane.xlu0 %3488
        %3490 = vmin.xlane.f32.xlu0 %v2979
        %v3491 = vpop.xlane.xlu0 %3490
        %v3748 = vlaneseq
        %v3749 = vand.u32 %v3748, 127
        %v3750 = vperm.slane %v2981, %v3749
        %v3751 = vadd.s32 %v3749, 4294967288
        %v3752 = vperm.slane %v2983, %v3751
        %vm3753 = vcmask 130112
        %v3754 = vsel %vm3753, %v3752, %v3750
        %v3755 = vadd.s32 %v3749, 4294967280
        %v3756 = vperm.slane %v2985, %v3755
        %vm3757 = vcmask 195712
        %v3758 = vsel %vm3757, %v3756, %v3754
        %v3759 = vadd.s32 %v3749, 4294967272
        %v3760 = vperm.slane %v2987, %v3759
        %vm3761 = vcmask 261312
        %v3762 = vsel %vm3761, %v3760, %v3758
        %v3763 = vadd.s32 %v3749, 4294967264
        %v3764 = vperm.slane %v2989, %v3763
        %vm3765 = vcmask 326912
        %v3766 = vsel %vm3765, %v3764, %v3762
        %v3767 = vadd.s32 %v3749, 4294967256
        %v3768 = vperm.slane %v2991, %v3767
        %vm3769 = vcmask 392512
        %v3770 = vsel %vm3769, %v3768, %v3766
        %v3771 = vadd.s32 %v3749, 4294967248
        %v3772 = vperm.slane %v2993, %v3771
        %vm3773 = vcmask 458112
        %v3774 = vsel %vm3773, %v3772, %v3770
        %v3775 = vadd.s32 %v3749, 4294967240
        %v3776 = vperm.slane %v2995, %v3775
        %vm3777 = vcmask 523712
        %v3778 = vsel %vm3777, %v3776, %v3774
        %v3779 = vadd.s32 %v3749, 4294967232
        %v3780 = vperm.slane %v2997, %v3779
        %vm3781 = vcmask 589312
        %v3782 = vsel %vm3781, %v3780, %v3778
        %v3783 = vadd.s32 %v3749, 4294967224
        %v3784 = vperm.slane %v2999, %v3783
        %vm3785 = vcmask 654912
        %v3786 = vsel %vm3785, %v3784, %v3782
        %v3787 = vadd.s32 %v3749, 4294967216
        %v3788 = vperm.slane %v3001, %v3787
        %vm3789 = vcmask 720512
        %v3790 = vsel %vm3789, %v3788, %v3786
        %v3791 = vadd.s32 %v3749, 4294967208
        %v3792 = vperm.slane %v3003, %v3791
        %vm3793 = vcmask 786112
        %v3794 = vsel %vm3793, %v3792, %v3790
        %v3795 = vadd.s32 %v3749, 4294967200
        %v3796 = vperm.slane %v3005, %v3795
        %vm3797 = vcmask 851712
        %v3798 = vsel %vm3797, %v3796, %v3794
        %v3799 = vadd.s32 %v3749, 4294967192
        %v3800 = vperm.slane %v3007, %v3799
        %vm3801 = vcmask 917312
        %v3802 = vsel %vm3801, %v3800, %v3798
        %v3803 = vadd.s32 %v3749, 4294967184
        %v3804 = vperm.slane %v3009, %v3803
        %vm3805 = vcmask 982912
        %v3806 = vsel %vm3805, %v3804, %v3802
        %v3807 = vadd.s32 %v3749, 4294967176
        %v3808 = vperm.slane %v3011, %v3807
        %vm3809 = vcmask 1048512
        %v3810 = vsel %vm3809, %v3808, %v3806
        %v3811 = vperm.slane %v3013, %v3749
        %v3812 = vperm.slane %v3015, %v3751
        %v3813 = vsel %vm3753, %v3812, %v3811
        %v3814 = vperm.slane %v3017, %v3755
        %v3815 = vsel %vm3757, %v3814, %v3813
        %v3816 = vperm.slane %v3019, %v3759
        %v3817 = vsel %vm3761, %v3816, %v3815
        %v3818 = vperm.slane %v3021, %v3763
        %v3819 = vsel %vm3765, %v3818, %v3817
        %v3820 = vperm.slane %v3023, %v3767
        %v3821 = vsel %vm3769, %v3820, %v3819
        %v3822 = vperm.slane %v3025, %v3771
        %v3823 = vsel %vm3773, %v3822, %v3821
        %v3824 = vperm.slane %v3027, %v3775
        %v3825 = vsel %vm3777, %v3824, %v3823
        %v3826 = vperm.slane %v3029, %v3779
        %v3827 = vsel %vm3781, %v3826, %v3825
        %v3828 = vperm.slane %v3031, %v3783
        %v3829 = vsel %vm3785, %v3828, %v3827
        %v3830 = vperm.slane %v3033, %v3787
        %v3831 = vsel %vm3789, %v3830, %v3829
        %v3832 = vperm.slane %v3035, %v3791
        %v3833 = vsel %vm3793, %v3832, %v3831
        %v3834 = vperm.slane %v3037, %v3795
        %v3835 = vsel %vm3797, %v3834, %v3833
        %v3836 = vperm.slane %v3039, %v3799
        %v3837 = vsel %vm3801, %v3836, %v3835
        %v3838 = vperm.slane %v3041, %v3803
        %v3839 = vsel %vm3805, %v3838, %v3837
        %v3840 = vperm.slane %v3043, %v3807
        %v3841 = vsel %vm3809, %v3840, %v3839
        %v3842 = vperm.slane %v3045, %v3749
        %v3843 = vperm.slane %v3047, %v3751
        %v3844 = vsel %vm3753, %v3843, %v3842
        %v3845 = vperm.slane %v3049, %v3755
        %v3846 = vsel %vm3757, %v3845, %v3844
        %v3847 = vperm.slane %v3051, %v3759
        %v3848 = vsel %vm3761, %v3847, %v3846
        %v3849 = vperm.slane %v3053, %v3763
        %v3850 = vsel %vm3765, %v3849, %v3848
        %v3851 = vperm.slane %v3055, %v3767
        %v3852 = vsel %vm3769, %v3851, %v3850
        %v3853 = vperm.slane %v3057, %v3771
        %v3854 = vsel %vm3773, %v3853, %v3852
        %v3855 = vperm.slane %v3059, %v3775
        %v3856 = vsel %vm3777, %v3855, %v3854
        %v3857 = vperm.slane %v3061, %v3779
        %v3858 = vsel %vm3781, %v3857, %v3856
        %v3859 = vperm.slane %v3063, %v3783
        %v3860 = vsel %vm3785, %v3859, %v3858
        %v3861 = vperm.slane %v3065, %v3787
        %v3862 = vsel %vm3789, %v3861, %v3860
        %v3863 = vperm.slane %v3067, %v3791
        %v3864 = vsel %vm3793, %v3863, %v3862
        %v3865 = vperm.slane %v3069, %v3795
        %v3866 = vsel %vm3797, %v3865, %v3864
        %v3867 = vperm.slane %v3071, %v3799
        %v3868 = vsel %vm3801, %v3867, %v3866
        %v3869 = vperm.slane %v3073, %v3803
        %v3870 = vsel %vm3805, %v3869, %v3868
        %v3871 = vperm.slane %v3075, %v3807
        %v3872 = vsel %vm3809, %v3871, %v3870
        %v3873 = vperm.slane %v3077, %v3749
        %v3874 = vperm.slane %v3079, %v3751
        %v3875 = vsel %vm3753, %v3874, %v3873
        %v3876 = vperm.slane %v3081, %v3755
        %v3877 = vsel %vm3757, %v3876, %v3875
        %v3878 = vperm.slane %v3083, %v3759
        %v3879 = vsel %vm3761, %v3878, %v3877
        %v3880 = vperm.slane %v3085, %v3763
        %v3881 = vsel %vm3765, %v3880, %v3879
        %v3882 = vperm.slane %v3087, %v3767
        %v3883 = vsel %vm3769, %v3882, %v3881
        %v3884 = vperm.slane %v3089, %v3771
        %v3885 = vsel %vm3773, %v3884, %v3883
        %v3886 = vperm.slane %v3091, %v3775
        %v3887 = vsel %vm3777, %v3886, %v3885
        %v3888 = vperm.slane %v3093, %v3779
        %v3889 = vsel %vm3781, %v3888, %v3887
        %v3890 = vperm.slane %v3095, %v3783
        %v3891 = vsel %vm3785, %v3890, %v3889
        %v3892 = vperm.slane %v3097, %v3787
        %v3893 = vsel %vm3789, %v3892, %v3891
        %v3894 = vperm.slane %v3099, %v3791
        %v3895 = vsel %vm3793, %v3894, %v3893
        %v3896 = vperm.slane %v3101, %v3795
        %v3897 = vsel %vm3797, %v3896, %v3895
        %v3898 = vperm.slane %v3103, %v3799
        %v3899 = vsel %vm3801, %v3898, %v3897
        %v3900 = vperm.slane %v3105, %v3803
        %v3901 = vsel %vm3805, %v3900, %v3899
        %v3902 = vperm.slane %v3107, %v3807
        %v3903 = vsel %vm3809, %v3902, %v3901
        %v3904 = vperm.slane %v3109, %v3749
        %v3905 = vperm.slane %v3111, %v3751
        %v3906 = vsel %vm3753, %v3905, %v3904
        %v3907 = vperm.slane %v3113, %v3755
        %v3908 = vsel %vm3757, %v3907, %v3906
        %v3909 = vperm.slane %v3115, %v3759
        %v3910 = vsel %vm3761, %v3909, %v3908
        %v3911 = vperm.slane %v3117, %v3763
        %v3912 = vsel %vm3765, %v3911, %v3910
        %v3913 = vperm.slane %v3119, %v3767
        %v3914 = vsel %vm3769, %v3913, %v3912
        %v3915 = vperm.slane %v3121, %v3771
        %v3916 = vsel %vm3773, %v3915, %v3914
        %v3917 = vperm.slane %v3123, %v3775
        %v3918 = vsel %vm3777, %v3917, %v3916
        %v3919 = vperm.slane %v3125, %v3779
        %v3920 = vsel %vm3781, %v3919, %v3918
        %v3921 = vperm.slane %v3127, %v3783
        %v3922 = vsel %vm3785, %v3921, %v3920
        %v3923 = vperm.slane %v3129, %v3787
        %v3924 = vsel %vm3789, %v3923, %v3922
        %v3925 = vperm.slane %v3131, %v3791
        %v3926 = vsel %vm3793, %v3925, %v3924
        %v3927 = vperm.slane %v3133, %v3795
        %v3928 = vsel %vm3797, %v3927, %v3926
        %v3929 = vperm.slane %v3135, %v3799
        %v3930 = vsel %vm3801, %v3929, %v3928
        %v3931 = vperm.slane %v3137, %v3803
        %v3932 = vsel %vm3805, %v3931, %v3930
        %v3933 = vperm.slane %v3139, %v3807
        %v3934 = vsel %vm3809, %v3933, %v3932
        %v3935 = vperm.slane %v3141, %v3749
        %v3936 = vperm.slane %v3143, %v3751
        %v3937 = vsel %vm3753, %v3936, %v3935
        %v3938 = vperm.slane %v3145, %v3755
        %v3939 = vsel %vm3757, %v3938, %v3937
        %v3940 = vperm.slane %v3147, %v3759
        %v3941 = vsel %vm3761, %v3940, %v3939
        %v3942 = vperm.slane %v3149, %v3763
        %v3943 = vsel %vm3765, %v3942, %v3941
        %v3944 = vperm.slane %v3151, %v3767
        %v3945 = vsel %vm3769, %v3944, %v3943
        %v3946 = vperm.slane %v3153, %v3771
        %v3947 = vsel %vm3773, %v3946, %v3945
        %v3948 = vperm.slane %v3155, %v3775
        %v3949 = vsel %vm3777, %v3948, %v3947
        %v3950 = vperm.slane %v3157, %v3779
        %v3951 = vsel %vm3781, %v3950, %v3949
        %v3952 = vperm.slane %v3159, %v3783
        %v3953 = vsel %vm3785, %v3952, %v3951
        %v3954 = vperm.slane %v3161, %v3787
        %v3955 = vsel %vm3789, %v3954, %v3953
        %v3956 = vperm.slane %v3163, %v3791
        %v3957 = vsel %vm3793, %v3956, %v3955
        %v3958 = vperm.slane %v3165, %v3795
        %v3959 = vsel %vm3797, %v3958, %v3957
        %v3960 = vperm.slane %v3167, %v3799
        %v3961 = vsel %vm3801, %v3960, %v3959
        %v3962 = vperm.slane %v3169, %v3803
        %v3963 = vsel %vm3805, %v3962, %v3961
        %v3964 = vperm.slane %v3171, %v3807
        %v3965 = vsel %vm3809, %v3964, %v3963
        %v3966 = vperm.slane %v3173, %v3749
        %v3967 = vperm.slane %v3175, %v3751
        %v3968 = vsel %vm3753, %v3967, %v3966
        %v3969 = vperm.slane %v3177, %v3755
        %v3970 = vsel %vm3757, %v3969, %v3968
        %v3971 = vperm.slane %v3179, %v3759
        %v3972 = vsel %vm3761, %v3971, %v3970
        %v3973 = vperm.slane %v3181, %v3763
        %v3974 = vsel %vm3765, %v3973, %v3972
        %v3975 = vperm.slane %v3183, %v3767
        %v3976 = vsel %vm3769, %v3975, %v3974
        %v3977 = vperm.slane %v3185, %v3771
        %v3978 = vsel %vm3773, %v3977, %v3976
        %v3979 = vperm.slane %v3187, %v3775
        %v3980 = vsel %vm3777, %v3979, %v3978
        %v3981 = vperm.slane %v3189, %v3779
        %v3982 = vsel %vm3781, %v3981, %v3980
        %v3983 = vperm.slane %v3191, %v3783
        %v3984 = vsel %vm3785, %v3983, %v3982
        %v3985 = vperm.slane %v3193, %v3787
        %v3986 = vsel %vm3789, %v3985, %v3984
        %v3987 = vperm.slane %v3195, %v3791
        %v3988 = vsel %vm3793, %v3987, %v3986
        %v3989 = vperm.slane %v3197, %v3795
        %v3990 = vsel %vm3797, %v3989, %v3988
        %v3991 = vperm.slane %v3199, %v3799
        %v3992 = vsel %vm3801, %v3991, %v3990
        %v3993 = vperm.slane %v3201, %v3803
        %v3994 = vsel %vm3805, %v3993, %v3992
        %v3995 = vperm.slane %v3203, %v3807
        %v3996 = vsel %vm3809, %v3995, %v3994
        %v3997 = vperm.slane %v3205, %v3749
        %v3998 = vperm.slane %v3207, %v3751
        %v3999 = vsel %vm3753, %v3998, %v3997
        %v4000 = vperm.slane %v3209, %v3755
        %v4001 = vsel %vm3757, %v4000, %v3999
        %v4002 = vperm.slane %v3211, %v3759
        %v4003 = vsel %vm3761, %v4002, %v4001
        %v4004 = vperm.slane %v3213, %v3763
        %v4005 = vsel %vm3765, %v4004, %v4003
        %v4006 = vperm.slane %v3215, %v3767
        %v4007 = vsel %vm3769, %v4006, %v4005
        %v4008 = vperm.slane %v3217, %v3771
        %v4009 = vsel %vm3773, %v4008, %v4007
        %v4010 = vperm.slane %v3219, %v3775
        %v4011 = vsel %vm3777, %v4010, %v4009
        %v4012 = vperm.slane %v3221, %v3779
        %v4013 = vsel %vm3781, %v4012, %v4011
        %v4014 = vperm.slane %v3223, %v3783
        %v4015 = vsel %vm3785, %v4014, %v4013
        %v4016 = vperm.slane %v3225, %v3787
        %v4017 = vsel %vm3789, %v4016, %v4015
        %v4018 = vperm.slane %v3227, %v3791
        %v4019 = vsel %vm3793, %v4018, %v4017
        %v4020 = vperm.slane %v3229, %v3795
        %v4021 = vsel %vm3797, %v4020, %v4019
        %v4022 = vperm.slane %v3231, %v3799
        %v4023 = vsel %vm3801, %v4022, %v4021
        %v4024 = vperm.slane %v3233, %v3803
        %v4025 = vsel %vm3805, %v4024, %v4023
        %v4026 = vperm.slane %v3235, %v3807
        %v4027 = vsel %vm3809, %v4026, %v4025
        %v4028 = vperm.slane %v3237, %v3749
        %v4029 = vperm.slane %v3239, %v3751
        %v4030 = vsel %vm3753, %v4029, %v4028
        %v4031 = vperm.slane %v3241, %v3755
        %v4032 = vsel %vm3757, %v4031, %v4030
        %v4033 = vperm.slane %v3243, %v3759
        %v4034 = vsel %vm3761, %v4033, %v4032
        %v4035 = vperm.slane %v3245, %v3763
        %v4036 = vsel %vm3765, %v4035, %v4034
        %v4037 = vperm.slane %v3247, %v3767
        %v4038 = vsel %vm3769, %v4037, %v4036
        %v4039 = vperm.slane %v3249, %v3771
        %v4040 = vsel %vm3773, %v4039, %v4038
        %v4041 = vperm.slane %v3251, %v3775
        %v4042 = vsel %vm3777, %v4041, %v4040
        %v4043 = vperm.slane %v3253, %v3779
        %v4044 = vsel %vm3781, %v4043, %v4042
        %v4045 = vperm.slane %v3255, %v3783
        %v4046 = vsel %vm3785, %v4045, %v4044
        %v4047 = vperm.slane %v3257, %v3787
        %v4048 = vsel %vm3789, %v4047, %v4046
        %v4049 = vperm.slane %v3259, %v3791
        %v4050 = vsel %vm3793, %v4049, %v4048
        %v4051 = vperm.slane %v3261, %v3795
        %v4052 = vsel %vm3797, %v4051, %v4050
        %v4053 = vperm.slane %v3263, %v3799
        %v4054 = vsel %vm3801, %v4053, %v4052
        %v4055 = vperm.slane %v3265, %v3803
        %v4056 = vsel %vm3805, %v4055, %v4054
        %v4057 = vperm.slane %v3267, %v3807
        %v4058 = vsel %vm3809, %v4057, %v4056
        %v4059 = vperm.slane %v3269, %v3749
        %v4060 = vperm.slane %v3271, %v3751
        %v4061 = vsel %vm3753, %v4060, %v4059
        %v4062 = vperm.slane %v3273, %v3755
        %v4063 = vsel %vm3757, %v4062, %v4061
        %v4064 = vperm.slane %v3275, %v3759
        %v4065 = vsel %vm3761, %v4064, %v4063
        %v4066 = vperm.slane %v3277, %v3763
        %v4067 = vsel %vm3765, %v4066, %v4065
        %v4068 = vperm.slane %v3279, %v3767
        %v4069 = vsel %vm3769, %v4068, %v4067
        %v4070 = vperm.slane %v3281, %v3771
        %v4071 = vsel %vm3773, %v4070, %v4069
        %v4072 = vperm.slane %v3283, %v3775
        %v4073 = vsel %vm3777, %v4072, %v4071
        %v4074 = vperm.slane %v3285, %v3779
        %v4075 = vsel %vm3781, %v4074, %v4073
        %v4076 = vperm.slane %v3287, %v3783
        %v4077 = vsel %vm3785, %v4076, %v4075
        %v4078 = vperm.slane %v3289, %v3787
        %v4079 = vsel %vm3789, %v4078, %v4077
        %v4080 = vperm.slane %v3291, %v3791
        %v4081 = vsel %vm3793, %v4080, %v4079
        %v4082 = vperm.slane %v3293, %v3795
        %v4083 = vsel %vm3797, %v4082, %v4081
        %v4084 = vperm.slane %v3295, %v3799
        %v4085 = vsel %vm3801, %v4084, %v4083
        %v4086 = vperm.slane %v3297, %v3803
        %v4087 = vsel %vm3805, %v4086, %v4085
        %v4088 = vperm.slane %v3299, %v3807
        %v4089 = vsel %vm3809, %v4088, %v4087
        %v4090 = vperm.slane %v3301, %v3749
        %v4091 = vperm.slane %v3303, %v3751
        %v4092 = vsel %vm3753, %v4091, %v4090
        %v4093 = vperm.slane %v3305, %v3755
        %v4094 = vsel %vm3757, %v4093, %v4092
        %v4095 = vperm.slane %v3307, %v3759
        %v4096 = vsel %vm3761, %v4095, %v4094
        %v4097 = vperm.slane %v3309, %v3763
        %v4098 = vsel %vm3765, %v4097, %v4096
        %v4099 = vperm.slane %v3311, %v3767
        %v4100 = vsel %vm3769, %v4099, %v4098
        %v4101 = vperm.slane %v3313, %v3771
        %v4102 = vsel %vm3773, %v4101, %v4100
        %v4103 = vperm.slane %v3315, %v3775
        %v4104 = vsel %vm3777, %v4103, %v4102
        %v4105 = vperm.slane %v3317, %v3779
        %v4106 = vsel %vm3781, %v4105, %v4104
        %v4107 = vperm.slane %v3319, %v3783
        %v4108 = vsel %vm3785, %v4107, %v4106
        %v4109 = vperm.slane %v3321, %v3787
        %v4110 = vsel %vm3789, %v4109, %v4108
        %v4111 = vperm.slane %v3323, %v3791
        %v4112 = vsel %vm3793, %v4111, %v4110
        %v4113 = vperm.slane %v3325, %v3795
        %v4114 = vsel %vm3797, %v4113, %v4112
        %v4115 = vperm.slane %v3327, %v3799
        %v4116 = vsel %vm3801, %v4115, %v4114
        %v4117 = vperm.slane %v3329, %v3803
        %v4118 = vsel %vm3805, %v4117, %v4116
        %v4119 = vperm.slane %v3331, %v3807
        %v4120 = vsel %vm3809, %v4119, %v4118
        %v4121 = vperm.slane %v3333, %v3749
        %v4122 = vperm.slane %v3335, %v3751
        %v4123 = vsel %vm3753, %v4122, %v4121
        %v4124 = vperm.slane %v3337, %v3755
        %v4125 = vsel %vm3757, %v4124, %v4123
        %v4126 = vperm.slane %v3339, %v3759
        %v4127 = vsel %vm3761, %v4126, %v4125
        %v4128 = vperm.slane %v3341, %v3763
        %v4129 = vsel %vm3765, %v4128, %v4127
        %v4130 = vperm.slane %v3343, %v3767
        %v4131 = vsel %vm3769, %v4130, %v4129
        %v4132 = vperm.slane %v3345, %v3771
        %v4133 = vsel %vm3773, %v4132, %v4131
        %v4134 = vperm.slane %v3347, %v3775
        %v4135 = vsel %vm3777, %v4134, %v4133
        %v4136 = vperm.slane %v3349, %v3779
        %v4137 = vsel %vm3781, %v4136, %v4135
        %v4138 = vperm.slane %v3351, %v3783
        %v4139 = vsel %vm3785, %v4138, %v4137
        %v4140 = vperm.slane %v3353, %v3787
        %v4141 = vsel %vm3789, %v4140, %v4139
        %v4142 = vperm.slane %v3355, %v3791
        %v4143 = vsel %vm3793, %v4142, %v4141
        %v4144 = vperm.slane %v3357, %v3795
        %v4145 = vsel %vm3797, %v4144, %v4143
        %v4146 = vperm.slane %v3359, %v3799
        %v4147 = vsel %vm3801, %v4146, %v4145
        %v4148 = vperm.slane %v3361, %v3803
        %v4149 = vsel %vm3805, %v4148, %v4147
        %v4150 = vperm.slane %v3363, %v3807
        %v4151 = vsel %vm3809, %v4150, %v4149
        %v4152 = vperm.slane %v3365, %v3749
        %v4153 = vperm.slane %v3367, %v3751
        %v4154 = vsel %vm3753, %v4153, %v4152
        %v4155 = vperm.slane %v3369, %v3755
        %v4156 = vsel %vm3757, %v4155, %v4154
        %v4157 = vperm.slane %v3371, %v3759
        %v4158 = vsel %vm3761, %v4157, %v4156
        %v4159 = vperm.slane %v3373, %v3763
        %v4160 = vsel %vm3765, %v4159, %v4158
        %v4161 = vperm.slane %v3375, %v3767
        %v4162 = vsel %vm3769, %v4161, %v4160
        %v4163 = vperm.slane %v3377, %v3771
        %v4164 = vsel %vm3773, %v4163, %v4162
        %v4165 = vperm.slane %v3379, %v3775
        %v4166 = vsel %vm3777, %v4165, %v4164
        %v4167 = vperm.slane %v3381, %v3779
        %v4168 = vsel %vm3781, %v4167, %v4166
        %v4169 = vperm.slane %v3383, %v3783
        %v4170 = vsel %vm3785, %v4169, %v4168
        %v4171 = vperm.slane %v3385, %v3787
        %v4172 = vsel %vm3789, %v4171, %v4170
        %v4173 = vperm.slane %v3387, %v3791
        %v4174 = vsel %vm3793, %v4173, %v4172
        %v4175 = vperm.slane %v3389, %v3795
        %v4176 = vsel %vm3797, %v4175, %v4174
        %v4177 = vperm.slane %v3391, %v3799
        %v4178 = vsel %vm3801, %v4177, %v4176
        %v4179 = vperm.slane %v3393, %v3803
        %v4180 = vsel %vm3805, %v4179, %v4178
        %v4181 = vperm.slane %v3395, %v3807
        %v4182 = vsel %vm3809, %v4181, %v4180
        %v4183 = vperm.slane %v3397, %v3749
        %v4184 = vperm.slane %v3399, %v3751
        %v4185 = vsel %vm3753, %v4184, %v4183
        %v4186 = vperm.slane %v3401, %v3755
        %v4187 = vsel %vm3757, %v4186, %v4185
        %v4188 = vperm.slane %v3403, %v3759
        %v4189 = vsel %vm3761, %v4188, %v4187
        %v4190 = vperm.slane %v3405, %v3763
        %v4191 = vsel %vm3765, %v4190, %v4189
        %v4192 = vperm.slane %v3407, %v3767
        %v4193 = vsel %vm3769, %v4192, %v4191
        %v4194 = vperm.slane %v3409, %v3771
        %v4195 = vsel %vm3773, %v4194, %v4193
        %v4196 = vperm.slane %v3411, %v3775
        %v4197 = vsel %vm3777, %v4196, %v4195
        %v4198 = vperm.slane %v3413, %v3779
        %v4199 = vsel %vm3781, %v4198, %v4197
        %v4200 = vperm.slane %v3415, %v3783
        %v4201 = vsel %vm3785, %v4200, %v4199
        %v4202 = vperm.slane %v3417, %v3787
        %v4203 = vsel %vm3789, %v4202, %v4201
        %v4204 = vperm.slane %v3419, %v3791
        %v4205 = vsel %vm3793, %v4204, %v4203
        %v4206 = vperm.slane %v3421, %v3795
        %v4207 = vsel %vm3797, %v4206, %v4205
        %v4208 = vperm.slane %v3423, %v3799
        %v4209 = vsel %vm3801, %v4208, %v4207
        %v4210 = vperm.slane %v3425, %v3803
        %v4211 = vsel %vm3805, %v4210, %v4209
        %v4212 = vperm.slane %v3427, %v3807
        %v4213 = vsel %vm3809, %v4212, %v4211
        %v4214 = vperm.slane %v3429, %v3749
        %v4215 = vperm.slane %v3431, %v3751
        %v4216 = vsel %vm3753, %v4215, %v4214
        %v4217 = vperm.slane %v3433, %v3755
        %v4218 = vsel %vm3757, %v4217, %v4216
        %v4219 = vperm.slane %v3435, %v3759
        %v4220 = vsel %vm3761, %v4219, %v4218
        %v4221 = vperm.slane %v3437, %v3763
        %v4222 = vsel %vm3765, %v4221, %v4220
        %v4223 = vperm.slane %v3439, %v3767
        %v4224 = vsel %vm3769, %v4223, %v4222
        %v4225 = vperm.slane %v3441, %v3771
        %v4226 = vsel %vm3773, %v4225, %v4224
        %v4227 = vperm.slane %v3443, %v3775
        %v4228 = vsel %vm3777, %v4227, %v4226
        %v4229 = vperm.slane %v3445, %v3779
        %v4230 = vsel %vm3781, %v4229, %v4228
        %v4231 = vperm.slane %v3447, %v3783
        %v4232 = vsel %vm3785, %v4231, %v4230
        %v4233 = vperm.slane %v3449, %v3787
        %v4234 = vsel %vm3789, %v4233, %v4232
        %v4235 = vperm.slane %v3451, %v3791
        %v4236 = vsel %vm3793, %v4235, %v4234
        %v4237 = vperm.slane %v3453, %v3795
        %v4238 = vsel %vm3797, %v4237, %v4236
        %v4239 = vperm.slane %v3455, %v3799
        %v4240 = vsel %vm3801, %v4239, %v4238
        %v4241 = vperm.slane %v3457, %v3803
        %v4242 = vsel %vm3805, %v4241, %v4240
        %v4243 = vperm.slane %v3459, %v3807
        %v4244 = vsel %vm3809, %v4243, %v4242
        %v4245 = vperm.slane %v3461, %v3749
        %v4246 = vperm.slane %v3463, %v3751
        %v4247 = vsel %vm3753, %v4246, %v4245
        %v4248 = vperm.slane %v3465, %v3755
        %v4249 = vsel %vm3757, %v4248, %v4247
        %v4250 = vperm.slane %v3467, %v3759
        %v4251 = vsel %vm3761, %v4250, %v4249
        %v4252 = vperm.slane %v3469, %v3763
        %v4253 = vsel %vm3765, %v4252, %v4251
        %v4254 = vperm.slane %v3471, %v3767
        %v4255 = vsel %vm3769, %v4254, %v4253
        %v4256 = vperm.slane %v3473, %v3771
        %v4257 = vsel %vm3773, %v4256, %v4255
        %v4258 = vperm.slane %v3475, %v3775
        %v4259 = vsel %vm3777, %v4258, %v4257
        %v4260 = vperm.slane %v3477, %v3779
        %v4261 = vsel %vm3781, %v4260, %v4259
        %v4262 = vperm.slane %v3479, %v3783
        %v4263 = vsel %vm3785, %v4262, %v4261
        %v4264 = vperm.slane %v3481, %v3787
        %v4265 = vsel %vm3789, %v4264, %v4263
        %v4266 = vperm.slane %v3483, %v3791
        %v4267 = vsel %vm3793, %v4266, %v4265
        %v4268 = vperm.slane %v3485, %v3795
        %v4269 = vsel %vm3797, %v4268, %v4267
        %v4270 = vperm.slane %v3487, %v3799
        %v4271 = vsel %vm3801, %v4270, %v4269
        %v4272 = vperm.slane %v3489, %v3803
        %v4273 = vsel %vm3805, %v4272, %v4271
        %v4274 = vperm.slane %v3491, %v3807
        %v4275 = vsel %vm3809, %v4274, %v4273
        %v4292 = vadd.f32 %v289, %v3810
        %v4293 = vadd.f32 %v296, %v3841
        %v4294 = vadd.f32 %v303, %v3872
        %v4295 = vadd.f32 %v310, %v3903
        %v4296 = vadd.f32 %v317, %v3934
        %v4297 = vadd.f32 %v324, %v3965
        %v4298 = vadd.f32 %v331, %v3996
        %v4299 = vadd.f32 %v338, %v4027
        %v4300 = vadd.f32 %v345, %v4058
        %v4301 = vadd.f32 %v352, %v4089
        %v4302 = vadd.f32 %v359, %v4120
        %v4303 = vadd.f32 %v366, %v4151
        %v4304 = vadd.f32 %v373, %v4182
        %v4305 = vadd.f32 %v380, %v4213
        %v4306 = vadd.f32 %v387, %v4244
        %v4307 = vadd.f32 %v394, %v4275
        %v4308 = vmax.f32 %v4292, 0.0
        %v4309 = vmax.f32 %v4293, 0.0
        %v4310 = vmax.f32 %v4294, 0.0
        %v4311 = vmax.f32 %v4295, 0.0
        %v4312 = vmax.f32 %v4296, 0.0
        %v4313 = vmax.f32 %v4297, 0.0
        %v4314 = vmax.f32 %v4298, 0.0
        %v4315 = vmax.f32 %v4299, 0.0
        %v4316 = vmax.f32 %v4300, 0.0
        %v4317 = vmax.f32 %v4301, 0.0
        %v4318 = vmax.f32 %v4302, 0.0
        %v4319 = vmax.f32 %v4303, 0.0
        %v4320 = vmax.f32 %v4304, 0.0
        %v4321 = vmax.f32 %v4305, 0.0
        %v4322 = vmax.f32 %v4306, 0.0
        %v4323 = vmax.f32 %v4307, 0.0
        %v4340 = vrot.slane %v4310, 7
        %vm4341 = vcmask 1041409
        %v4342 = vsel %vm4341, %v4340, %v4308
        %v4343 = vrot.slane %v4312, 6
        %vm4344 = vcmask 1042434
        %v4345 = vsel %vm4344, %v4343, %v4342
        %v4346 = vrot.slane %v4314, 5
        %vm4347 = vcmask 1043459
        %v4348 = vsel %vm4347, %v4346, %v4345
        %v4349 = vrot.slane %v4316, 4
        %vm4350 = vcmask 1044484
        %v4351 = vsel %vm4350, %v4349, %v4348
        %v4352 = vrot.slane %v4318, 3
        %vm4353 = vcmask 1045509
        %v4354 = vsel %vm4353, %v4352, %v4351
        %v4355 = vrot.slane %v4320, 2
        %vm4356 = vcmask 1046534
        %v4357 = vsel %vm4356, %v4355, %v4354
        %v4358 = vrot.slane %v4322, 1
        %vm4359 = vcmask 1047559
        %v4360 = vsel %vm4359, %v4358, %v4357
        %v4361 = vrot.slane %v4311, 7
        %v4362 = vsel %vm4341, %v4361, %v4309
        %v4363 = vrot.slane %v4313, 6
        %v4364 = vsel %vm4344, %v4363, %v4362
        %v4365 = vrot.slane %v4315, 5
        %v4366 = vsel %vm4347, %v4365, %v4364
        %v4367 = vrot.slane %v4317, 4
        %v4368 = vsel %vm4350, %v4367, %v4366
        %v4369 = vrot.slane %v4319, 3
        %v4370 = vsel %vm4353, %v4369, %v4368
        %v4371 = vrot.slane %v4321, 2
        %v4372 = vsel %vm4356, %v4371, %v4370
        %v4373 = vrot.slane %v4323, 1
        %v4374 = vsel %vm4359, %v4373, %v4372
        %4377 = vst [vmem:[%s186] sm:$0xff] %v4360
        %4378 = vst [vmem:[%s186 + $0x8] sm:$0xff] %v4374
        %v4379 = vlaneseq
        %v4380 = vshrl.u32 %v4379, 7
        %4382 = vset.pattern.permute.xlu0 %v4380
        %4383 = vperm.xlu0 %4382, %v289
        %v4384 = vpop.permute.xlu0 %4383
        %v4385 = vlaneseq
        %v4386 = vshrl.u32 %v4385, 7
        %v4387 = vadd.s32 %v4386, 8
        %4388 = vset.pattern.permute.xlu0 %v4387
        %4389 = vperm.xlu0 %4388, %v289
        %v4390 = vpop.permute.xlu0 %4389
        %v4391 = vlaneseq
        %v4392 = vshrl.u32 %v4391, 7
        %v4393 = vadd.s32 %v4392, 16
        %4394 = vset.pattern.permute.xlu0 %v4393
        %4395 = vperm.xlu0 %4394, %v289
        %v4396 = vpop.permute.xlu0 %4395
        %v4397 = vlaneseq
        %v4398 = vshrl.u32 %v4397, 7
        %v4399 = vadd.s32 %v4398, 24
        %4400 = vset.pattern.permute.xlu0 %v4399
        %4401 = vperm.xlu0 %4400, %v289
        %v4402 = vpop.permute.xlu0 %4401
        %v4403 = vlaneseq
        %v4404 = vshrl.u32 %v4403, 7
        %v4405 = vadd.s32 %v4404, 32
        %4406 = vset.pattern.permute.xlu0 %v4405
        %4407 = vperm.xlu0 %4406, %v289
        %v4408 = vpop.permute.xlu0 %4407
        %v4409 = vlaneseq
        %v4410 = vshrl.u32 %v4409, 7
        %v4411 = vadd.s32 %v4410, 40
        %4412 = vset.pattern.permute.xlu0 %v4411
        %4413 = vperm.xlu0 %4412, %v289
        %v4414 = vpop.permute.xlu0 %4413
        %v4415 = vlaneseq
        %v4416 = vshrl.u32 %v4415, 7
        %v4417 = vadd.s32 %v4416, 48
        %4418 = vset.pattern.permute.xlu0 %v4417
        %4419 = vperm.xlu0 %4418, %v289
        %v4420 = vpop.permute.xlu0 %4419
        %v4421 = vlaneseq
        %v4422 = vshrl.u32 %v4421, 7
        %v4423 = vadd.s32 %v4422, 56
        %4424 = vset.pattern.permute.xlu0 %v4423
        %4425 = vperm.xlu0 %4424, %v289
        %v4426 = vpop.permute.xlu0 %4425
        %v4427 = vlaneseq
        %v4428 = vshrl.u32 %v4427, 7
        %v4429 = vadd.s32 %v4428, 64
        %4430 = vset.pattern.permute.xlu0 %v4429
        %4431 = vperm.xlu0 %4430, %v289
        %v4432 = vpop.permute.xlu0 %4431
        %v4433 = vlaneseq
        %v4434 = vshrl.u32 %v4433, 7
        %v4435 = vadd.s32 %v4434, 72
        %4436 = vset.pattern.permute.xlu0 %v4435
        %4437 = vperm.xlu0 %4436, %v289
        %v4438 = vpop.permute.xlu0 %4437
        %v4439 = vlaneseq
        %v4440 = vshrl.u32 %v4439, 7
        %v4441 = vadd.s32 %v4440, 80
        %4442 = vset.pattern.permute.xlu0 %v4441
        %4443 = vperm.xlu0 %4442, %v289
        %v4444 = vpop.permute.xlu0 %4443
        %v4445 = vlaneseq
        %v4446 = vshrl.u32 %v4445, 7
        %v4447 = vadd.s32 %v4446, 88
        %4448 = vset.pattern.permute.xlu0 %v4447
        %4449 = vperm.xlu0 %4448, %v289
        %v4450 = vpop.permute.xlu0 %4449
        %v4451 = vlaneseq
        %v4452 = vshrl.u32 %v4451, 7
        %v4453 = vadd.s32 %v4452, 96
        %4454 = vset.pattern.permute.xlu0 %v4453
        %4455 = vperm.xlu0 %4454, %v289
        %v4456 = vpop.permute.xlu0 %4455
        %v4457 = vlaneseq
        %v4458 = vshrl.u32 %v4457, 7
        %v4459 = vadd.s32 %v4458, 104
        %4460 = vset.pattern.permute.xlu0 %v4459
        %4461 = vperm.xlu0 %4460, %v289
        %v4462 = vpop.permute.xlu0 %4461
        %v4463 = vlaneseq
        %v4464 = vshrl.u32 %v4463, 7
        %v4465 = vadd.s32 %v4464, 112
        %4466 = vset.pattern.permute.xlu0 %v4465
        %4467 = vperm.xlu0 %4466, %v289
        %v4468 = vpop.permute.xlu0 %4467
        %v4469 = vlaneseq
        %v4470 = vshrl.u32 %v4469, 7
        %v4471 = vadd.s32 %v4470, 120
        %4472 = vset.pattern.permute.xlu0 %v4471
        %4473 = vperm.xlu0 %4472, %v289
        %v4474 = vpop.permute.xlu0 %4473
        %v4475 = vlaneseq
        %v4476 = vshrl.u32 %v4475, 7
        %4478 = vset.pattern.permute.xlu0 %v4476
        %4479 = vperm.xlu0 %4478, %v296
        %v4480 = vpop.permute.xlu0 %4479
        %v4481 = vlaneseq
        %v4482 = vshrl.u32 %v4481, 7
        %v4483 = vadd.s32 %v4482, 8
        %4484 = vset.pattern.permute.xlu0 %v4483
        %4485 = vperm.xlu0 %4484, %v296
        %v4486 = vpop.permute.xlu0 %4485
        %v4487 = vlaneseq
        %v4488 = vshrl.u32 %v4487, 7
        %v4489 = vadd.s32 %v4488, 16
        %4490 = vset.pattern.permute.xlu0 %v4489
        %4491 = vperm.xlu0 %4490, %v296
        %v4492 = vpop.permute.xlu0 %4491
        %v4493 = vlaneseq
        %v4494 = vshrl.u32 %v4493, 7
        %v4495 = vadd.s32 %v4494, 24
        %4496 = vset.pattern.permute.xlu0 %v4495
        %4497 = vperm.xlu0 %4496, %v296
        %v4498 = vpop.permute.xlu0 %4497
        %v4499 = vlaneseq
        %v4500 = vshrl.u32 %v4499, 7
        %v4501 = vadd.s32 %v4500, 32
        %4502 = vset.pattern.permute.xlu0 %v4501
        %4503 = vperm.xlu0 %4502, %v296
        %v4504 = vpop.permute.xlu0 %4503
        %v4505 = vlaneseq
        %v4506 = vshrl.u32 %v4505, 7
        %v4507 = vadd.s32 %v4506, 40
        %4508 = vset.pattern.permute.xlu0 %v4507
        %4509 = vperm.xlu0 %4508, %v296
        %v4510 = vpop.permute.xlu0 %4509
        %v4511 = vlaneseq
        %v4512 = vshrl.u32 %v4511, 7
        %v4513 = vadd.s32 %v4512, 48
        %4514 = vset.pattern.permute.xlu0 %v4513
        %4515 = vperm.xlu0 %4514, %v296
        %v4516 = vpop.permute.xlu0 %4515
        %v4517 = vlaneseq
        %v4518 = vshrl.u32 %v4517, 7
        %v4519 = vadd.s32 %v4518, 56
        %4520 = vset.pattern.permute.xlu0 %v4519
        %4521 = vperm.xlu0 %4520, %v296
        %v4522 = vpop.permute.xlu0 %4521
        %v4523 = vlaneseq
        %v4524 = vshrl.u32 %v4523, 7
        %v4525 = vadd.s32 %v4524, 64
        %4526 = vset.pattern.permute.xlu0 %v4525
        %4527 = vperm.xlu0 %4526, %v296
        %v4528 = vpop.permute.xlu0 %4527
        %v4529 = vlaneseq
        %v4530 = vshrl.u32 %v4529, 7
        %v4531 = vadd.s32 %v4530, 72
        %4532 = vset.pattern.permute.xlu0 %v4531
        %4533 = vperm.xlu0 %4532, %v296
        %v4534 = vpop.permute.xlu0 %4533
        %v4535 = vlaneseq
        %v4536 = vshrl.u32 %v4535, 7
        %v4537 = vadd.s32 %v4536, 80
        %4538 = vset.pattern.permute.xlu0 %v4537
        %4539 = vperm.xlu0 %4538, %v296
        %v4540 = vpop.permute.xlu0 %4539
        %v4541 = vlaneseq
        %v4542 = vshrl.u32 %v4541, 7
        %v4543 = vadd.s32 %v4542, 88
        %4544 = vset.pattern.permute.xlu0 %v4543
        %4545 = vperm.xlu0 %4544, %v296
        %v4546 = vpop.permute.xlu0 %4545
        %v4547 = vlaneseq
        %v4548 = vshrl.u32 %v4547, 7
        %v4549 = vadd.s32 %v4548, 96
        %4550 = vset.pattern.permute.xlu0 %v4549
        %4551 = vperm.xlu0 %4550, %v296
        %v4552 = vpop.permute.xlu0 %4551
        %v4553 = vlaneseq
        %v4554 = vshrl.u32 %v4553, 7
        %v4555 = vadd.s32 %v4554, 104
        %4556 = vset.pattern.permute.xlu0 %v4555
        %4557 = vperm.xlu0 %4556, %v296
        %v4558 = vpop.permute.xlu0 %4557
        %v4559 = vlaneseq
        %v4560 = vshrl.u32 %v4559, 7
        %v4561 = vadd.s32 %v4560, 112
        %4562 = vset.pattern.permute.xlu0 %v4561
        %4563 = vperm.xlu0 %4562, %v296
        %v4564 = vpop.permute.xlu0 %4563
        %v4565 = vlaneseq
        %v4566 = vshrl.u32 %v4565, 7
        %v4567 = vadd.s32 %v4566, 120
        %4568 = vset.pattern.permute.xlu0 %v4567
        %4569 = vperm.xlu0 %4568, %v296
        %v4570 = vpop.permute.xlu0 %4569
        %v4571 = vlaneseq
        %v4572 = vshrl.u32 %v4571, 7
        %4574 = vset.pattern.permute.xlu0 %v4572
        %4575 = vperm.xlu0 %4574, %v303
        %v4576 = vpop.permute.xlu0 %4575
        %v4577 = vlaneseq
        %v4578 = vshrl.u32 %v4577, 7
        %v4579 = vadd.s32 %v4578, 8
        %4580 = vset.pattern.permute.xlu0 %v4579
        %4581 = vperm.xlu0 %4580, %v303
        %v4582 = vpop.permute.xlu0 %4581
        %v4583 = vlaneseq
        %v4584 = vshrl.u32 %v4583, 7
        %v4585 = vadd.s32 %v4584, 16
        %4586 = vset.pattern.permute.xlu0 %v4585
        %4587 = vperm.xlu0 %4586, %v303
        %v4588 = vpop.permute.xlu0 %4587
        %v4589 = vlaneseq
        %v4590 = vshrl.u32 %v4589, 7
        %v4591 = vadd.s32 %v4590, 24
        %4592 = vset.pattern.permute.xlu0 %v4591
        %4593 = vperm.xlu0 %4592, %v303
        %v4594 = vpop.permute.xlu0 %4593
        %v4595 = vlaneseq
        %v4596 = vshrl.u32 %v4595, 7
        %v4597 = vadd.s32 %v4596, 32
        %4598 = vset.pattern.permute.xlu0 %v4597
        %4599 = vperm.xlu0 %4598, %v303
        %v4600 = vpop.permute.xlu0 %4599
        %v4601 = vlaneseq
        %v4602 = vshrl.u32 %v4601, 7
        %v4603 = vadd.s32 %v4602, 40
        %4604 = vset.pattern.permute.xlu0 %v4603
        %4605 = vperm.xlu0 %4604, %v303
        %v4606 = vpop.permute.xlu0 %4605
        %v4607 = vlaneseq
        %v4608 = vshrl.u32 %v4607, 7
        %v4609 = vadd.s32 %v4608, 48
        %4610 = vset.pattern.permute.xlu0 %v4609
        %4611 = vperm.xlu0 %4610, %v303
        %v4612 = vpop.permute.xlu0 %4611
        %v4613 = vlaneseq
        %v4614 = vshrl.u32 %v4613, 7
        %v4615 = vadd.s32 %v4614, 56
        %4616 = vset.pattern.permute.xlu0 %v4615
        %4617 = vperm.xlu0 %4616, %v303
        %v4618 = vpop.permute.xlu0 %4617
        %v4619 = vlaneseq
        %v4620 = vshrl.u32 %v4619, 7
        %v4621 = vadd.s32 %v4620, 64
        %4622 = vset.pattern.permute.xlu0 %v4621
        %4623 = vperm.xlu0 %4622, %v303
        %v4624 = vpop.permute.xlu0 %4623
        %v4625 = vlaneseq
        %v4626 = vshrl.u32 %v4625, 7
        %v4627 = vadd.s32 %v4626, 72
        %4628 = vset.pattern.permute.xlu0 %v4627
        %4629 = vperm.xlu0 %4628, %v303
        %v4630 = vpop.permute.xlu0 %4629
        %v4631 = vlaneseq
        %v4632 = vshrl.u32 %v4631, 7
        %v4633 = vadd.s32 %v4632, 80
        %4634 = vset.pattern.permute.xlu0 %v4633
        %4635 = vperm.xlu0 %4634, %v303
        %v4636 = vpop.permute.xlu0 %4635
        %v4637 = vlaneseq
        %v4638 = vshrl.u32 %v4637, 7
        %v4639 = vadd.s32 %v4638, 88
        %4640 = vset.pattern.permute.xlu0 %v4639
        %4641 = vperm.xlu0 %4640, %v303
        %v4642 = vpop.permute.xlu0 %4641
        %v4643 = vlaneseq
        %v4644 = vshrl.u32 %v4643, 7
        %v4645 = vadd.s32 %v4644, 96
        %4646 = vset.pattern.permute.xlu0 %v4645
        %4647 = vperm.xlu0 %4646, %v303
        %v4648 = vpop.permute.xlu0 %4647
        %v4649 = vlaneseq
        %v4650 = vshrl.u32 %v4649, 7
        %v4651 = vadd.s32 %v4650, 104
        %4652 = vset.pattern.permute.xlu0 %v4651
        %4653 = vperm.xlu0 %4652, %v303
        %v4654 = vpop.permute.xlu0 %4653
        %v4655 = vlaneseq
        %v4656 = vshrl.u32 %v4655, 7
        %v4657 = vadd.s32 %v4656, 112
        %4658 = vset.pattern.permute.xlu0 %v4657
        %4659 = vperm.xlu0 %4658, %v303
        %v4660 = vpop.permute.xlu0 %4659
        %v4661 = vlaneseq
        %v4662 = vshrl.u32 %v4661, 7
        %v4663 = vadd.s32 %v4662, 120
        %4664 = vset.pattern.permute.xlu0 %v4663
        %4665 = vperm.xlu0 %4664, %v303
        %v4666 = vpop.permute.xlu0 %4665
        %v4667 = vlaneseq
        %v4668 = vshrl.u32 %v4667, 7
        %4670 = vset.pattern.permute.xlu0 %v4668
        %4671 = vperm.xlu0 %4670, %v310
        %v4672 = vpop.permute.xlu0 %4671
        %v4673 = vlaneseq
        %v4674 = vshrl.u32 %v4673, 7
        %v4675 = vadd.s32 %v4674, 8
        %4676 = vset.pattern.permute.xlu0 %v4675
        %4677 = vperm.xlu0 %4676, %v310
        %v4678 = vpop.permute.xlu0 %4677
        %v4679 = vlaneseq
        %v4680 = vshrl.u32 %v4679, 7
        %v4681 = vadd.s32 %v4680, 16
        %4682 = vset.pattern.permute.xlu0 %v4681
        %4683 = vperm.xlu0 %4682, %v310
        %v4684 = vpop.permute.xlu0 %4683
        %v4685 = vlaneseq
        %v4686 = vshrl.u32 %v4685, 7
        %v4687 = vadd.s32 %v4686, 24
        %4688 = vset.pattern.permute.xlu0 %v4687
        %4689 = vperm.xlu0 %4688, %v310
        %v4690 = vpop.permute.xlu0 %4689
        %v4691 = vlaneseq
        %v4692 = vshrl.u32 %v4691, 7
        %v4693 = vadd.s32 %v4692, 32
        %4694 = vset.pattern.permute.xlu0 %v4693
        %4695 = vperm.xlu0 %4694, %v310
        %v4696 = vpop.permute.xlu0 %4695
        %v4697 = vlaneseq
        %v4698 = vshrl.u32 %v4697, 7
        %v4699 = vadd.s32 %v4698, 40
        %4700 = vset.pattern.permute.xlu0 %v4699
        %4701 = vperm.xlu0 %4700, %v310
        %v4702 = vpop.permute.xlu0 %4701
        %v4703 = vlaneseq
        %v4704 = vshrl.u32 %v4703, 7
        %v4705 = vadd.s32 %v4704, 48
        %4706 = vset.pattern.permute.xlu0 %v4705
        %4707 = vperm.xlu0 %4706, %v310
        %v4708 = vpop.permute.xlu0 %4707
        %v4709 = vlaneseq
        %v4710 = vshrl.u32 %v4709, 7
        %v4711 = vadd.s32 %v4710, 56
        %4712 = vset.pattern.permute.xlu0 %v4711
        %4713 = vperm.xlu0 %4712, %v310
        %v4714 = vpop.permute.xlu0 %4713
        %v4715 = vlaneseq
        %v4716 = vshrl.u32 %v4715, 7
        %v4717 = vadd.s32 %v4716, 64
        %4718 = vset.pattern.permute.xlu0 %v4717
        %4719 = vperm.xlu0 %4718, %v310
        %v4720 = vpop.permute.xlu0 %4719
        %v4721 = vlaneseq
        %v4722 = vshrl.u32 %v4721, 7
        %v4723 = vadd.s32 %v4722, 72
        %4724 = vset.pattern.permute.xlu0 %v4723
        %4725 = vperm.xlu0 %4724, %v310
        %v4726 = vpop.permute.xlu0 %4725
        %v4727 = vlaneseq
        %v4728 = vshrl.u32 %v4727, 7
        %v4729 = vadd.s32 %v4728, 80
        %4730 = vset.pattern.permute.xlu0 %v4729
        %4731 = vperm.xlu0 %4730, %v310
        %v4732 = vpop.permute.xlu0 %4731
        %v4733 = vlaneseq
        %v4734 = vshrl.u32 %v4733, 7
        %v4735 = vadd.s32 %v4734, 88
        %4736 = vset.pattern.permute.xlu0 %v4735
        %4737 = vperm.xlu0 %4736, %v310
        %v4738 = vpop.permute.xlu0 %4737
        %v4739 = vlaneseq
        %v4740 = vshrl.u32 %v4739, 7
        %v4741 = vadd.s32 %v4740, 96
        %4742 = vset.pattern.permute.xlu0 %v4741
        %4743 = vperm.xlu0 %4742, %v310
        %v4744 = vpop.permute.xlu0 %4743
        %v4745 = vlaneseq
        %v4746 = vshrl.u32 %v4745, 7
        %v4747 = vadd.s32 %v4746, 104
        %4748 = vset.pattern.permute.xlu0 %v4747
        %4749 = vperm.xlu0 %4748, %v310
        %v4750 = vpop.permute.xlu0 %4749
        %v4751 = vlaneseq
        %v4752 = vshrl.u32 %v4751, 7
        %v4753 = vadd.s32 %v4752, 112
        %4754 = vset.pattern.permute.xlu0 %v4753
        %4755 = vperm.xlu0 %4754, %v310
        %v4756 = vpop.permute.xlu0 %4755
        %v4757 = vlaneseq
        %v4758 = vshrl.u32 %v4757, 7
        %v4759 = vadd.s32 %v4758, 120
        %4760 = vset.pattern.permute.xlu0 %v4759
        %4761 = vperm.xlu0 %4760, %v310
        %v4762 = vpop.permute.xlu0 %4761
        %v4763 = vlaneseq
        %v4764 = vshrl.u32 %v4763, 7
        %4766 = vset.pattern.permute.xlu0 %v4764
        %4767 = vperm.xlu0 %4766, %v317
        %v4768 = vpop.permute.xlu0 %4767
        %v4769 = vlaneseq
        %v4770 = vshrl.u32 %v4769, 7
        %v4771 = vadd.s32 %v4770, 8
        %4772 = vset.pattern.permute.xlu0 %v4771
        %4773 = vperm.xlu0 %4772, %v317
        %v4774 = vpop.permute.xlu0 %4773
        %v4775 = vlaneseq
        %v4776 = vshrl.u32 %v4775, 7
        %v4777 = vadd.s32 %v4776, 16
        %4778 = vset.pattern.permute.xlu0 %v4777
        %4779 = vperm.xlu0 %4778, %v317
        %v4780 = vpop.permute.xlu0 %4779
        %v4781 = vlaneseq
        %v4782 = vshrl.u32 %v4781, 7
        %v4783 = vadd.s32 %v4782, 24
        %4784 = vset.pattern.permute.xlu0 %v4783
        %4785 = vperm.xlu0 %4784, %v317
        %v4786 = vpop.permute.xlu0 %4785
        %v4787 = vlaneseq
        %v4788 = vshrl.u32 %v4787, 7
        %v4789 = vadd.s32 %v4788, 32
        %4790 = vset.pattern.permute.xlu0 %v4789
        %4791 = vperm.xlu0 %4790, %v317
        %v4792 = vpop.permute.xlu0 %4791
        %v4793 = vlaneseq
        %v4794 = vshrl.u32 %v4793, 7
        %v4795 = vadd.s32 %v4794, 40
        %4796 = vset.pattern.permute.xlu0 %v4795
        %4797 = vperm.xlu0 %4796, %v317
        %v4798 = vpop.permute.xlu0 %4797
        %v4799 = vlaneseq
        %v4800 = vshrl.u32 %v4799, 7
        %v4801 = vadd.s32 %v4800, 48
        %4802 = vset.pattern.permute.xlu0 %v4801
        %4803 = vperm.xlu0 %4802, %v317
        %v4804 = vpop.permute.xlu0 %4803
        %v4805 = vlaneseq
        %v4806 = vshrl.u32 %v4805, 7
        %v4807 = vadd.s32 %v4806, 56
        %4808 = vset.pattern.permute.xlu0 %v4807
        %4809 = vperm.xlu0 %4808, %v317
        %v4810 = vpop.permute.xlu0 %4809
        %v4811 = vlaneseq
        %v4812 = vshrl.u32 %v4811, 7
        %v4813 = vadd.s32 %v4812, 64
        %4814 = vset.pattern.permute.xlu0 %v4813
        %4815 = vperm.xlu0 %4814, %v317
        %v4816 = vpop.permute.xlu0 %4815
        %v4817 = vlaneseq
        %v4818 = vshrl.u32 %v4817, 7
        %v4819 = vadd.s32 %v4818, 72
        %4820 = vset.pattern.permute.xlu0 %v4819
        %4821 = vperm.xlu0 %4820, %v317
        %v4822 = vpop.permute.xlu0 %4821
        %v4823 = vlaneseq
        %v4824 = vshrl.u32 %v4823, 7
        %v4825 = vadd.s32 %v4824, 80
        %4826 = vset.pattern.permute.xlu0 %v4825
        %4827 = vperm.xlu0 %4826, %v317
        %v4828 = vpop.permute.xlu0 %4827
        %v4829 = vlaneseq
        %v4830 = vshrl.u32 %v4829, 7
        %v4831 = vadd.s32 %v4830, 88
        %4832 = vset.pattern.permute.xlu0 %v4831
        %4833 = vperm.xlu0 %4832, %v317
        %v4834 = vpop.permute.xlu0 %4833
        %v4835 = vlaneseq
        %v4836 = vshrl.u32 %v4835, 7
        %v4837 = vadd.s32 %v4836, 96
        %4838 = vset.pattern.permute.xlu0 %v4837
        %4839 = vperm.xlu0 %4838, %v317
        %v4840 = vpop.permute.xlu0 %4839
        %v4841 = vlaneseq
        %v4842 = vshrl.u32 %v4841, 7
        %v4843 = vadd.s32 %v4842, 104
        %4844 = vset.pattern.permute.xlu0 %v4843
        %4845 = vperm.xlu0 %4844, %v317
        %v4846 = vpop.permute.xlu0 %4845
        %v4847 = vlaneseq
        %v4848 = vshrl.u32 %v4847, 7
        %v4849 = vadd.s32 %v4848, 112
        %4850 = vset.pattern.permute.xlu0 %v4849
        %4851 = vperm.xlu0 %4850, %v317
        %v4852 = vpop.permute.xlu0 %4851
        %v4853 = vlaneseq
        %v4854 = vshrl.u32 %v4853, 7
        %v4855 = vadd.s32 %v4854, 120
        %4856 = vset.pattern.permute.xlu0 %v4855
        %4857 = vperm.xlu0 %4856, %v317
        %v4858 = vpop.permute.xlu0 %4857
        %v4859 = vlaneseq
        %v4860 = vshrl.u32 %v4859, 7
        %4862 = vset.pattern.permute.xlu0 %v4860
        %4863 = vperm.xlu0 %4862, %v324
        %v4864 = vpop.permute.xlu0 %4863
        %v4865 = vlaneseq
        %v4866 = vshrl.u32 %v4865, 7
        %v4867 = vadd.s32 %v4866, 8
        %4868 = vset.pattern.permute.xlu0 %v4867
        %4869 = vperm.xlu0 %4868, %v324
        %v4870 = vpop.permute.xlu0 %4869
        %v4871 = vlaneseq
        %v4872 = vshrl.u32 %v4871, 7
        %v4873 = vadd.s32 %v4872, 16
        %4874 = vset.pattern.permute.xlu0 %v4873
        %4875 = vperm.xlu0 %4874, %v324
        %v4876 = vpop.permute.xlu0 %4875
        %v4877 = vlaneseq
        %v4878 = vshrl.u32 %v4877, 7
        %v4879 = vadd.s32 %v4878, 24
        %4880 = vset.pattern.permute.xlu0 %v4879
        %4881 = vperm.xlu0 %4880, %v324
        %v4882 = vpop.permute.xlu0 %4881
        %v4883 = vlaneseq
        %v4884 = vshrl.u32 %v4883, 7
        %v4885 = vadd.s32 %v4884, 32
        %4886 = vset.pattern.permute.xlu0 %v4885
        %4887 = vperm.xlu0 %4886, %v324
        %v4888 = vpop.permute.xlu0 %4887
        %v4889 = vlaneseq
        %v4890 = vshrl.u32 %v4889, 7
        %v4891 = vadd.s32 %v4890, 40
        %4892 = vset.pattern.permute.xlu0 %v4891
        %4893 = vperm.xlu0 %4892, %v324
        %v4894 = vpop.permute.xlu0 %4893
        %v4895 = vlaneseq
        %v4896 = vshrl.u32 %v4895, 7
        %v4897 = vadd.s32 %v4896, 48
        %4898 = vset.pattern.permute.xlu0 %v4897
        %4899 = vperm.xlu0 %4898, %v324
        %v4900 = vpop.permute.xlu0 %4899
        %v4901 = vlaneseq
        %v4902 = vshrl.u32 %v4901, 7
        %v4903 = vadd.s32 %v4902, 56
        %4904 = vset.pattern.permute.xlu0 %v4903
        %4905 = vperm.xlu0 %4904, %v324
        %v4906 = vpop.permute.xlu0 %4905
        %v4907 = vlaneseq
        %v4908 = vshrl.u32 %v4907, 7
        %v4909 = vadd.s32 %v4908, 64
        %4910 = vset.pattern.permute.xlu0 %v4909
        %4911 = vperm.xlu0 %4910, %v324
        %v4912 = vpop.permute.xlu0 %4911
        %v4913 = vlaneseq
        %v4914 = vshrl.u32 %v4913, 7
        %v4915 = vadd.s32 %v4914, 72
        %4916 = vset.pattern.permute.xlu0 %v4915
        %4917 = vperm.xlu0 %4916, %v324
        %v4918 = vpop.permute.xlu0 %4917
        %v4919 = vlaneseq
        %v4920 = vshrl.u32 %v4919, 7
        %v4921 = vadd.s32 %v4920, 80
        %4922 = vset.pattern.permute.xlu0 %v4921
        %4923 = vperm.xlu0 %4922, %v324
        %v4924 = vpop.permute.xlu0 %4923
        %v4925 = vlaneseq
        %v4926 = vshrl.u32 %v4925, 7
        %v4927 = vadd.s32 %v4926, 88
        %4928 = vset.pattern.permute.xlu0 %v4927
        %4929 = vperm.xlu0 %4928, %v324
        %v4930 = vpop.permute.xlu0 %4929
        %v4931 = vlaneseq
        %v4932 = vshrl.u32 %v4931, 7
        %v4933 = vadd.s32 %v4932, 96
        %4934 = vset.pattern.permute.xlu0 %v4933
        %4935 = vperm.xlu0 %4934, %v324
        %v4936 = vpop.permute.xlu0 %4935
        %v4937 = vlaneseq
        %v4938 = vshrl.u32 %v4937, 7
        %v4939 = vadd.s32 %v4938, 104
        %4940 = vset.pattern.permute.xlu0 %v4939
        %4941 = vperm.xlu0 %4940, %v324
        %v4942 = vpop.permute.xlu0 %4941
        %v4943 = vlaneseq
        %v4944 = vshrl.u32 %v4943, 7
        %v4945 = vadd.s32 %v4944, 112
        %4946 = vset.pattern.permute.xlu0 %v4945
        %4947 = vperm.xlu0 %4946, %v324
        %v4948 = vpop.permute.xlu0 %4947
        %v4949 = vlaneseq
        %v4950 = vshrl.u32 %v4949, 7
        %v4951 = vadd.s32 %v4950, 120
        %4952 = vset.pattern.permute.xlu0 %v4951
        %4953 = vperm.xlu0 %4952, %v324
        %v4954 = vpop.permute.xlu0 %4953
        %v4955 = vlaneseq
        %v4956 = vshrl.u32 %v4955, 7
        %4958 = vset.pattern.permute.xlu0 %v4956
        %4959 = vperm.xlu0 %4958, %v331
        %v4960 = vpop.permute.xlu0 %4959
        %v4961 = vlaneseq
        %v4962 = vshrl.u32 %v4961, 7
        %v4963 = vadd.s32 %v4962, 8
        %4964 = vset.pattern.permute.xlu0 %v4963
        %4965 = vperm.xlu0 %4964, %v331
        %v4966 = vpop.permute.xlu0 %4965
        %v4967 = vlaneseq
        %v4968 = vshrl.u32 %v4967, 7
        %v4969 = vadd.s32 %v4968, 16
        %4970 = vset.pattern.permute.xlu0 %v4969
        %4971 = vperm.xlu0 %4970, %v331
        %v4972 = vpop.permute.xlu0 %4971
        %v4973 = vlaneseq
        %v4974 = vshrl.u32 %v4973, 7
        %v4975 = vadd.s32 %v4974, 24
        %4976 = vset.pattern.permute.xlu0 %v4975
        %4977 = vperm.xlu0 %4976, %v331
        %v4978 = vpop.permute.xlu0 %4977
        %v4979 = vlaneseq
        %v4980 = vshrl.u32 %v4979, 7
        %v4981 = vadd.s32 %v4980, 32
        %4982 = vset.pattern.permute.xlu0 %v4981
        %4983 = vperm.xlu0 %4982, %v331
        %v4984 = vpop.permute.xlu0 %4983
        %v4985 = vlaneseq
        %v4986 = vshrl.u32 %v4985, 7
        %v4987 = vadd.s32 %v4986, 40
        %4988 = vset.pattern.permute.xlu0 %v4987
        %4989 = vperm.xlu0 %4988, %v331
        %v4990 = vpop.permute.xlu0 %4989
        %v4991 = vlaneseq
        %v4992 = vshrl.u32 %v4991, 7
        %v4993 = vadd.s32 %v4992, 48
        %4994 = vset.pattern.permute.xlu0 %v4993
        %4995 = vperm.xlu0 %4994, %v331
        %v4996 = vpop.permute.xlu0 %4995
        %v4997 = vlaneseq
        %v4998 = vshrl.u32 %v4997, 7
        %v4999 = vadd.s32 %v4998, 56
        %5000 = vset.pattern.permute.xlu0 %v4999
        %5001 = vperm.xlu0 %5000, %v331
        %v5002 = vpop.permute.xlu0 %5001
        %v5003 = vlaneseq
        %v5004 = vshrl.u32 %v5003, 7
        %v5005 = vadd.s32 %v5004, 64
        %5006 = vset.pattern.permute.xlu0 %v5005
        %5007 = vperm.xlu0 %5006, %v331
        %v5008 = vpop.permute.xlu0 %5007
        %v5009 = vlaneseq
        %v5010 = vshrl.u32 %v5009, 7
        %v5011 = vadd.s32 %v5010, 72
        %5012 = vset.pattern.permute.xlu0 %v5011
        %5013 = vperm.xlu0 %5012, %v331
        %v5014 = vpop.permute.xlu0 %5013
        %v5015 = vlaneseq
        %v5016 = vshrl.u32 %v5015, 7
        %v5017 = vadd.s32 %v5016, 80
        %5018 = vset.pattern.permute.xlu0 %v5017
        %5019 = vperm.xlu0 %5018, %v331
        %v5020 = vpop.permute.xlu0 %5019
        %v5021 = vlaneseq
        %v5022 = vshrl.u32 %v5021, 7
        %v5023 = vadd.s32 %v5022, 88
        %5024 = vset.pattern.permute.xlu0 %v5023
        %5025 = vperm.xlu0 %5024, %v331
        %v5026 = vpop.permute.xlu0 %5025
        %v5027 = vlaneseq
        %v5028 = vshrl.u32 %v5027, 7
        %v5029 = vadd.s32 %v5028, 96
        %5030 = vset.pattern.permute.xlu0 %v5029
        %5031 = vperm.xlu0 %5030, %v331
        %v5032 = vpop.permute.xlu0 %5031
        %v5033 = vlaneseq
        %v5034 = vshrl.u32 %v5033, 7
        %v5035 = vadd.s32 %v5034, 104
        %5036 = vset.pattern.permute.xlu0 %v5035
        %5037 = vperm.xlu0 %5036, %v331
        %v5038 = vpop.permute.xlu0 %5037
        %v5039 = vlaneseq
        %v5040 = vshrl.u32 %v5039, 7
        %v5041 = vadd.s32 %v5040, 112
        %5042 = vset.pattern.permute.xlu0 %v5041
        %5043 = vperm.xlu0 %5042, %v331
        %v5044 = vpop.permute.xlu0 %5043
        %v5045 = vlaneseq
        %v5046 = vshrl.u32 %v5045, 7
        %v5047 = vadd.s32 %v5046, 120
        %5048 = vset.pattern.permute.xlu0 %v5047
        %5049 = vperm.xlu0 %5048, %v331
        %v5050 = vpop.permute.xlu0 %5049
        %v5051 = vlaneseq
        %v5052 = vshrl.u32 %v5051, 7
        %5054 = vset.pattern.permute.xlu0 %v5052
        %5055 = vperm.xlu0 %5054, %v338
        %v5056 = vpop.permute.xlu0 %5055
        %v5057 = vlaneseq
        %v5058 = vshrl.u32 %v5057, 7
        %v5059 = vadd.s32 %v5058, 8
        %5060 = vset.pattern.permute.xlu0 %v5059
        %5061 = vperm.xlu0 %5060, %v338
        %v5062 = vpop.permute.xlu0 %5061
        %v5063 = vlaneseq
        %v5064 = vshrl.u32 %v5063, 7
        %v5065 = vadd.s32 %v5064, 16
        %5066 = vset.pattern.permute.xlu0 %v5065
        %5067 = vperm.xlu0 %5066, %v338
        %v5068 = vpop.permute.xlu0 %5067
        %v5069 = vlaneseq
        %v5070 = vshrl.u32 %v5069, 7
        %v5071 = vadd.s32 %v5070, 24
        %5072 = vset.pattern.permute.xlu0 %v5071
        %5073 = vperm.xlu0 %5072, %v338
        %v5074 = vpop.permute.xlu0 %5073
        %v5075 = vlaneseq
        %v5076 = vshrl.u32 %v5075, 7
        %v5077 = vadd.s32 %v5076, 32
        %5078 = vset.pattern.permute.xlu0 %v5077
        %5079 = vperm.xlu0 %5078, %v338
        %v5080 = vpop.permute.xlu0 %5079
        %v5081 = vlaneseq
        %v5082 = vshrl.u32 %v5081, 7
        %v5083 = vadd.s32 %v5082, 40
        %5084 = vset.pattern.permute.xlu0 %v5083
        %5085 = vperm.xlu0 %5084, %v338
        %v5086 = vpop.permute.xlu0 %5085
        %v5087 = vlaneseq
        %v5088 = vshrl.u32 %v5087, 7
        %v5089 = vadd.s32 %v5088, 48
        %5090 = vset.pattern.permute.xlu0 %v5089
        %5091 = vperm.xlu0 %5090, %v338
        %v5092 = vpop.permute.xlu0 %5091
        %v5093 = vlaneseq
        %v5094 = vshrl.u32 %v5093, 7
        %v5095 = vadd.s32 %v5094, 56
        %5096 = vset.pattern.permute.xlu0 %v5095
        %5097 = vperm.xlu0 %5096, %v338
        %v5098 = vpop.permute.xlu0 %5097
        %v5099 = vlaneseq
        %v5100 = vshrl.u32 %v5099, 7
        %v5101 = vadd.s32 %v5100, 64
        %5102 = vset.pattern.permute.xlu0 %v5101
        %5103 = vperm.xlu0 %5102, %v338
        %v5104 = vpop.permute.xlu0 %5103
        %v5105 = vlaneseq
        %v5106 = vshrl.u32 %v5105, 7
        %v5107 = vadd.s32 %v5106, 72
        %5108 = vset.pattern.permute.xlu0 %v5107
        %5109 = vperm.xlu0 %5108, %v338
        %v5110 = vpop.permute.xlu0 %5109
        %v5111 = vlaneseq
        %v5112 = vshrl.u32 %v5111, 7
        %v5113 = vadd.s32 %v5112, 80
        %5114 = vset.pattern.permute.xlu0 %v5113
        %5115 = vperm.xlu0 %5114, %v338
        %v5116 = vpop.permute.xlu0 %5115
        %v5117 = vlaneseq
        %v5118 = vshrl.u32 %v5117, 7
        %v5119 = vadd.s32 %v5118, 88
        %5120 = vset.pattern.permute.xlu0 %v5119
        %5121 = vperm.xlu0 %5120, %v338
        %v5122 = vpop.permute.xlu0 %5121
        %v5123 = vlaneseq
        %v5124 = vshrl.u32 %v5123, 7
        %v5125 = vadd.s32 %v5124, 96
        %5126 = vset.pattern.permute.xlu0 %v5125
        %5127 = vperm.xlu0 %5126, %v338
        %v5128 = vpop.permute.xlu0 %5127
        %v5129 = vlaneseq
        %v5130 = vshrl.u32 %v5129, 7
        %v5131 = vadd.s32 %v5130, 104
        %5132 = vset.pattern.permute.xlu0 %v5131
        %5133 = vperm.xlu0 %5132, %v338
        %v5134 = vpop.permute.xlu0 %5133
        %v5135 = vlaneseq
        %v5136 = vshrl.u32 %v5135, 7
        %v5137 = vadd.s32 %v5136, 112
        %5138 = vset.pattern.permute.xlu0 %v5137
        %5139 = vperm.xlu0 %5138, %v338
        %v5140 = vpop.permute.xlu0 %5139
        %v5141 = vlaneseq
        %v5142 = vshrl.u32 %v5141, 7
        %v5143 = vadd.s32 %v5142, 120
        %5144 = vset.pattern.permute.xlu0 %v5143
        %5145 = vperm.xlu0 %5144, %v338
        %v5146 = vpop.permute.xlu0 %5145
        %v5147 = vlaneseq
        %v5148 = vshrl.u32 %v5147, 7
        %5150 = vset.pattern.permute.xlu0 %v5148
        %5151 = vperm.xlu0 %5150, %v345
        %v5152 = vpop.permute.xlu0 %5151
        %v5153 = vlaneseq
        %v5154 = vshrl.u32 %v5153, 7
        %v5155 = vadd.s32 %v5154, 8
        %5156 = vset.pattern.permute.xlu0 %v5155
        %5157 = vperm.xlu0 %5156, %v345
        %v5158 = vpop.permute.xlu0 %5157
        %v5159 = vlaneseq
        %v5160 = vshrl.u32 %v5159, 7
        %v5161 = vadd.s32 %v5160, 16
        %5162 = vset.pattern.permute.xlu0 %v5161
        %5163 = vperm.xlu0 %5162, %v345
        %v5164 = vpop.permute.xlu0 %5163
        %v5165 = vlaneseq
        %v5166 = vshrl.u32 %v5165, 7
        %v5167 = vadd.s32 %v5166, 24
        %5168 = vset.pattern.permute.xlu0 %v5167
        %5169 = vperm.xlu0 %5168, %v345
        %v5170 = vpop.permute.xlu0 %5169
        %v5171 = vlaneseq
        %v5172 = vshrl.u32 %v5171, 7
        %v5173 = vadd.s32 %v5172, 32
        %5174 = vset.pattern.permute.xlu0 %v5173
        %5175 = vperm.xlu0 %5174, %v345
        %v5176 = vpop.permute.xlu0 %5175
        %v5177 = vlaneseq
        %v5178 = vshrl.u32 %v5177, 7
        %v5179 = vadd.s32 %v5178, 40
        %5180 = vset.pattern.permute.xlu0 %v5179
        %5181 = vperm.xlu0 %5180, %v345
        %v5182 = vpop.permute.xlu0 %5181
        %v5183 = vlaneseq
        %v5184 = vshrl.u32 %v5183, 7
        %v5185 = vadd.s32 %v5184, 48
        %5186 = vset.pattern.permute.xlu0 %v5185
        %5187 = vperm.xlu0 %5186, %v345
        %v5188 = vpop.permute.xlu0 %5187
        %v5189 = vlaneseq
        %v5190 = vshrl.u32 %v5189, 7
        %v5191 = vadd.s32 %v5190, 56
        %5192 = vset.pattern.permute.xlu0 %v5191
        %5193 = vperm.xlu0 %5192, %v345
        %v5194 = vpop.permute.xlu0 %5193
        %v5195 = vlaneseq
        %v5196 = vshrl.u32 %v5195, 7
        %v5197 = vadd.s32 %v5196, 64
        %5198 = vset.pattern.permute.xlu0 %v5197
        %5199 = vperm.xlu0 %5198, %v345
        %v5200 = vpop.permute.xlu0 %5199
        %v5201 = vlaneseq
        %v5202 = vshrl.u32 %v5201, 7
        %v5203 = vadd.s32 %v5202, 72
        %5204 = vset.pattern.permute.xlu0 %v5203
        %5205 = vperm.xlu0 %5204, %v345
        %v5206 = vpop.permute.xlu0 %5205
        %v5207 = vlaneseq
        %v5208 = vshrl.u32 %v5207, 7
        %v5209 = vadd.s32 %v5208, 80
        %5210 = vset.pattern.permute.xlu0 %v5209
        %5211 = vperm.xlu0 %5210, %v345
        %v5212 = vpop.permute.xlu0 %5211
        %v5213 = vlaneseq
        %v5214 = vshrl.u32 %v5213, 7
        %v5215 = vadd.s32 %v5214, 88
        %5216 = vset.pattern.permute.xlu0 %v5215
        %5217 = vperm.xlu0 %5216, %v345
        %v5218 = vpop.permute.xlu0 %5217
        %v5219 = vlaneseq
        %v5220 = vshrl.u32 %v5219, 7
        %v5221 = vadd.s32 %v5220, 96
        %5222 = vset.pattern.permute.xlu0 %v5221
        %5223 = vperm.xlu0 %5222, %v345
        %v5224 = vpop.permute.xlu0 %5223
        %v5225 = vlaneseq
        %v5226 = vshrl.u32 %v5225, 7
        %v5227 = vadd.s32 %v5226, 104
        %5228 = vset.pattern.permute.xlu0 %v5227
        %5229 = vperm.xlu0 %5228, %v345
        %v5230 = vpop.permute.xlu0 %5229
        %v5231 = vlaneseq
        %v5232 = vshrl.u32 %v5231, 7
        %v5233 = vadd.s32 %v5232, 112
        %5234 = vset.pattern.permute.xlu0 %v5233
        %5235 = vperm.xlu0 %5234, %v345
        %v5236 = vpop.permute.xlu0 %5235
        %v5237 = vlaneseq
        %v5238 = vshrl.u32 %v5237, 7
        %v5239 = vadd.s32 %v5238, 120
        %5240 = vset.pattern.permute.xlu0 %v5239
        %5241 = vperm.xlu0 %5240, %v345
        %v5242 = vpop.permute.xlu0 %5241
        %v5243 = vlaneseq
        %v5244 = vshrl.u32 %v5243, 7
        %5246 = vset.pattern.permute.xlu0 %v5244
        %5247 = vperm.xlu0 %5246, %v352
        %v5248 = vpop.permute.xlu0 %5247
        %v5249 = vlaneseq
        %v5250 = vshrl.u32 %v5249, 7
        %v5251 = vadd.s32 %v5250, 8
        %5252 = vset.pattern.permute.xlu0 %v5251
        %5253 = vperm.xlu0 %5252, %v352
        %v5254 = vpop.permute.xlu0 %5253
        %v5255 = vlaneseq
        %v5256 = vshrl.u32 %v5255, 7
        %v5257 = vadd.s32 %v5256, 16
        %5258 = vset.pattern.permute.xlu0 %v5257
        %5259 = vperm.xlu0 %5258, %v352
        %v5260 = vpop.permute.xlu0 %5259
        %v5261 = vlaneseq
        %v5262 = vshrl.u32 %v5261, 7
        %v5263 = vadd.s32 %v5262, 24
        %5264 = vset.pattern.permute.xlu0 %v5263
        %5265 = vperm.xlu0 %5264, %v352
        %v5266 = vpop.permute.xlu0 %5265
        %v5267 = vlaneseq
        %v5268 = vshrl.u32 %v5267, 7
        %v5269 = vadd.s32 %v5268, 32
        %5270 = vset.pattern.permute.xlu0 %v5269
        %5271 = vperm.xlu0 %5270, %v352
        %v5272 = vpop.permute.xlu0 %5271
        %v5273 = vlaneseq
        %v5274 = vshrl.u32 %v5273, 7
        %v5275 = vadd.s32 %v5274, 40
        %5276 = vset.pattern.permute.xlu0 %v5275
        %5277 = vperm.xlu0 %5276, %v352
        %v5278 = vpop.permute.xlu0 %5277
        %v5279 = vlaneseq
        %v5280 = vshrl.u32 %v5279, 7
        %v5281 = vadd.s32 %v5280, 48
        %5282 = vset.pattern.permute.xlu0 %v5281
        %5283 = vperm.xlu0 %5282, %v352
        %v5284 = vpop.permute.xlu0 %5283
        %v5285 = vlaneseq
        %v5286 = vshrl.u32 %v5285, 7
        %v5287 = vadd.s32 %v5286, 56
        %5288 = vset.pattern.permute.xlu0 %v5287
        %5289 = vperm.xlu0 %5288, %v352
        %v5290 = vpop.permute.xlu0 %5289
        %v5291 = vlaneseq
        %v5292 = vshrl.u32 %v5291, 7
        %v5293 = vadd.s32 %v5292, 64
        %5294 = vset.pattern.permute.xlu0 %v5293
        %5295 = vperm.xlu0 %5294, %v352
        %v5296 = vpop.permute.xlu0 %5295
        %v5297 = vlaneseq
        %v5298 = vshrl.u32 %v5297, 7
        %v5299 = vadd.s32 %v5298, 72
        %5300 = vset.pattern.permute.xlu0 %v5299
        %5301 = vperm.xlu0 %5300, %v352
        %v5302 = vpop.permute.xlu0 %5301
        %v5303 = vlaneseq
        %v5304 = vshrl.u32 %v5303, 7
        %v5305 = vadd.s32 %v5304, 80
        %5306 = vset.pattern.permute.xlu0 %v5305
        %5307 = vperm.xlu0 %5306, %v352
        %v5308 = vpop.permute.xlu0 %5307
        %v5309 = vlaneseq
        %v5310 = vshrl.u32 %v5309, 7
        %v5311 = vadd.s32 %v5310, 88
        %5312 = vset.pattern.permute.xlu0 %v5311
        %5313 = vperm.xlu0 %5312, %v352
        %v5314 = vpop.permute.xlu0 %5313
        %v5315 = vlaneseq
        %v5316 = vshrl.u32 %v5315, 7
        %v5317 = vadd.s32 %v5316, 96
        %5318 = vset.pattern.permute.xlu0 %v5317
        %5319 = vperm.xlu0 %5318, %v352
        %v5320 = vpop.permute.xlu0 %5319
        %v5321 = vlaneseq
        %v5322 = vshrl.u32 %v5321, 7
        %v5323 = vadd.s32 %v5322, 104
        %5324 = vset.pattern.permute.xlu0 %v5323
        %5325 = vperm.xlu0 %5324, %v352
        %v5326 = vpop.permute.xlu0 %5325
        %v5327 = vlaneseq
        %v5328 = vshrl.u32 %v5327, 7
        %v5329 = vadd.s32 %v5328, 112
        %5330 = vset.pattern.permute.xlu0 %v5329
        %5331 = vperm.xlu0 %5330, %v352
        %v5332 = vpop.permute.xlu0 %5331
        %v5333 = vlaneseq
        %v5334 = vshrl.u32 %v5333, 7
        %v5335 = vadd.s32 %v5334, 120
        %5336 = vset.pattern.permute.xlu0 %v5335
        %5337 = vperm.xlu0 %5336, %v352
        %v5338 = vpop.permute.xlu0 %5337
        %v5339 = vlaneseq
        %v5340 = vshrl.u32 %v5339, 7
        %5342 = vset.pattern.permute.xlu0 %v5340
        %5343 = vperm.xlu0 %5342, %v359
        %v5344 = vpop.permute.xlu0 %5343
        %v5345 = vlaneseq
        %v5346 = vshrl.u32 %v5345, 7
        %v5347 = vadd.s32 %v5346, 8
        %5348 = vset.pattern.permute.xlu0 %v5347
        %5349 = vperm.xlu0 %5348, %v359
        %v5350 = vpop.permute.xlu0 %5349
        %v5351 = vlaneseq
        %v5352 = vshrl.u32 %v5351, 7
        %v5353 = vadd.s32 %v5352, 16
        %5354 = vset.pattern.permute.xlu0 %v5353
        %5355 = vperm.xlu0 %5354, %v359
        %v5356 = vpop.permute.xlu0 %5355
        %v5357 = vlaneseq
        %v5358 = vshrl.u32 %v5357, 7
        %v5359 = vadd.s32 %v5358, 24
        %5360 = vset.pattern.permute.xlu0 %v5359
        %5361 = vperm.xlu0 %5360, %v359
        %v5362 = vpop.permute.xlu0 %5361
        %v5363 = vlaneseq
        %v5364 = vshrl.u32 %v5363, 7
        %v5365 = vadd.s32 %v5364, 32
        %5366 = vset.pattern.permute.xlu0 %v5365
        %5367 = vperm.xlu0 %5366, %v359
        %v5368 = vpop.permute.xlu0 %5367
        %v5369 = vlaneseq
        %v5370 = vshrl.u32 %v5369, 7
        %v5371 = vadd.s32 %v5370, 40
        %5372 = vset.pattern.permute.xlu0 %v5371
        %5373 = vperm.xlu0 %5372, %v359
        %v5374 = vpop.permute.xlu0 %5373
        %v5375 = vlaneseq
        %v5376 = vshrl.u32 %v5375, 7
        %v5377 = vadd.s32 %v5376, 48
        %5378 = vset.pattern.permute.xlu0 %v5377
        %5379 = vperm.xlu0 %5378, %v359
        %v5380 = vpop.permute.xlu0 %5379
        %v5381 = vlaneseq
        %v5382 = vshrl.u32 %v5381, 7
        %v5383 = vadd.s32 %v5382, 56
        %5384 = vset.pattern.permute.xlu0 %v5383
        %5385 = vperm.xlu0 %5384, %v359
        %v5386 = vpop.permute.xlu0 %5385
        %v5387 = vlaneseq
        %v5388 = vshrl.u32 %v5387, 7
        %v5389 = vadd.s32 %v5388, 64
        %5390 = vset.pattern.permute.xlu0 %v5389
        %5391 = vperm.xlu0 %5390, %v359
        %v5392 = vpop.permute.xlu0 %5391
        %v5393 = vlaneseq
        %v5394 = vshrl.u32 %v5393, 7
        %v5395 = vadd.s32 %v5394, 72
        %5396 = vset.pattern.permute.xlu0 %v5395
        %5397 = vperm.xlu0 %5396, %v359
        %v5398 = vpop.permute.xlu0 %5397
        %v5399 = vlaneseq
        %v5400 = vshrl.u32 %v5399, 7
        %v5401 = vadd.s32 %v5400, 80
        %5402 = vset.pattern.permute.xlu0 %v5401
        %5403 = vperm.xlu0 %5402, %v359
        %v5404 = vpop.permute.xlu0 %5403
        %v5405 = vlaneseq
        %v5406 = vshrl.u32 %v5405, 7
        %v5407 = vadd.s32 %v5406, 88
        %5408 = vset.pattern.permute.xlu0 %v5407
        %5409 = vperm.xlu0 %5408, %v359
        %v5410 = vpop.permute.xlu0 %5409
        %v5411 = vlaneseq
        %v5412 = vshrl.u32 %v5411, 7
        %v5413 = vadd.s32 %v5412, 96
        %5414 = vset.pattern.permute.xlu0 %v5413
        %5415 = vperm.xlu0 %5414, %v359
        %v5416 = vpop.permute.xlu0 %5415
        %v5417 = vlaneseq
        %v5418 = vshrl.u32 %v5417, 7
        %v5419 = vadd.s32 %v5418, 104
        %5420 = vset.pattern.permute.xlu0 %v5419
        %5421 = vperm.xlu0 %5420, %v359
        %v5422 = vpop.permute.xlu0 %5421
        %v5423 = vlaneseq
        %v5424 = vshrl.u32 %v5423, 7
        %v5425 = vadd.s32 %v5424, 112
        %5426 = vset.pattern.permute.xlu0 %v5425
        %5427 = vperm.xlu0 %5426, %v359
        %v5428 = vpop.permute.xlu0 %5427
        %v5429 = vlaneseq
        %v5430 = vshrl.u32 %v5429, 7
        %v5431 = vadd.s32 %v5430, 120
        %5432 = vset.pattern.permute.xlu0 %v5431
        %5433 = vperm.xlu0 %5432, %v359
        %v5434 = vpop.permute.xlu0 %5433
        %v5435 = vlaneseq
        %v5436 = vshrl.u32 %v5435, 7
        %5438 = vset.pattern.permute.xlu0 %v5436
        %5439 = vperm.xlu0 %5438, %v366
        %v5440 = vpop.permute.xlu0 %5439
        %v5441 = vlaneseq
        %v5442 = vshrl.u32 %v5441, 7
        %v5443 = vadd.s32 %v5442, 8
        %5444 = vset.pattern.permute.xlu0 %v5443
        %5445 = vperm.xlu0 %5444, %v366
        %v5446 = vpop.permute.xlu0 %5445
        %v5447 = vlaneseq
        %v5448 = vshrl.u32 %v5447, 7
        %v5449 = vadd.s32 %v5448, 16
        %5450 = vset.pattern.permute.xlu0 %v5449
        %5451 = vperm.xlu0 %5450, %v366
        %v5452 = vpop.permute.xlu0 %5451
        %v5453 = vlaneseq
        %v5454 = vshrl.u32 %v5453, 7
        %v5455 = vadd.s32 %v5454, 24
        %5456 = vset.pattern.permute.xlu0 %v5455
        %5457 = vperm.xlu0 %5456, %v366
        %v5458 = vpop.permute.xlu0 %5457
        %v5459 = vlaneseq
        %v5460 = vshrl.u32 %v5459, 7
        %v5461 = vadd.s32 %v5460, 32
        %5462 = vset.pattern.permute.xlu0 %v5461
        %5463 = vperm.xlu0 %5462, %v366
        %v5464 = vpop.permute.xlu0 %5463
        %v5465 = vlaneseq
        %v5466 = vshrl.u32 %v5465, 7
        %v5467 = vadd.s32 %v5466, 40
        %5468 = vset.pattern.permute.xlu0 %v5467
        %5469 = vperm.xlu0 %5468, %v366
        %v5470 = vpop.permute.xlu0 %5469
        %v5471 = vlaneseq
        %v5472 = vshrl.u32 %v5471, 7
        %v5473 = vadd.s32 %v5472, 48
        %5474 = vset.pattern.permute.xlu0 %v5473
        %5475 = vperm.xlu0 %5474, %v366
        %v5476 = vpop.permute.xlu0 %5475
        %v5477 = vlaneseq
        %v5478 = vshrl.u32 %v5477, 7
        %v5479 = vadd.s32 %v5478, 56
        %5480 = vset.pattern.permute.xlu0 %v5479
        %5481 = vperm.xlu0 %5480, %v366
        %v5482 = vpop.permute.xlu0 %5481
        %v5483 = vlaneseq
        %v5484 = vshrl.u32 %v5483, 7
        %v5485 = vadd.s32 %v5484, 64
        %5486 = vset.pattern.permute.xlu0 %v5485
        %5487 = vperm.xlu0 %5486, %v366
        %v5488 = vpop.permute.xlu0 %5487
        %v5489 = vlaneseq
        %v5490 = vshrl.u32 %v5489, 7
        %v5491 = vadd.s32 %v5490, 72
        %5492 = vset.pattern.permute.xlu0 %v5491
        %5493 = vperm.xlu0 %5492, %v366
        %v5494 = vpop.permute.xlu0 %5493
        %v5495 = vlaneseq
        %v5496 = vshrl.u32 %v5495, 7
        %v5497 = vadd.s32 %v5496, 80
        %5498 = vset.pattern.permute.xlu0 %v5497
        %5499 = vperm.xlu0 %5498, %v366
        %v5500 = vpop.permute.xlu0 %5499
        %v5501 = vlaneseq
        %v5502 = vshrl.u32 %v5501, 7
        %v5503 = vadd.s32 %v5502, 88
        %5504 = vset.pattern.permute.xlu0 %v5503
        %5505 = vperm.xlu0 %5504, %v366
        %v5506 = vpop.permute.xlu0 %5505
        %v5507 = vlaneseq
        %v5508 = vshrl.u32 %v5507, 7
        %v5509 = vadd.s32 %v5508, 96
        %5510 = vset.pattern.permute.xlu0 %v5509
        %5511 = vperm.xlu0 %5510, %v366
        %v5512 = vpop.permute.xlu0 %5511
        %v5513 = vlaneseq
        %v5514 = vshrl.u32 %v5513, 7
        %v5515 = vadd.s32 %v5514, 104
        %5516 = vset.pattern.permute.xlu0 %v5515
        %5517 = vperm.xlu0 %5516, %v366
        %v5518 = vpop.permute.xlu0 %5517
        %v5519 = vlaneseq
        %v5520 = vshrl.u32 %v5519, 7
        %v5521 = vadd.s32 %v5520, 112
        %5522 = vset.pattern.permute.xlu0 %v5521
        %5523 = vperm.xlu0 %5522, %v366
        %v5524 = vpop.permute.xlu0 %5523
        %v5525 = vlaneseq
        %v5526 = vshrl.u32 %v5525, 7
        %v5527 = vadd.s32 %v5526, 120
        %5528 = vset.pattern.permute.xlu0 %v5527
        %5529 = vperm.xlu0 %5528, %v366
        %v5530 = vpop.permute.xlu0 %5529
        %v5531 = vlaneseq
        %v5532 = vshrl.u32 %v5531, 7
        %5534 = vset.pattern.permute.xlu0 %v5532
        %5535 = vperm.xlu0 %5534, %v373
        %v5536 = vpop.permute.xlu0 %5535
        %v5537 = vlaneseq
        %v5538 = vshrl.u32 %v5537, 7
        %v5539 = vadd.s32 %v5538, 8
        %5540 = vset.pattern.permute.xlu0 %v5539
        %5541 = vperm.xlu0 %5540, %v373
        %v5542 = vpop.permute.xlu0 %5541
        %v5543 = vlaneseq
        %v5544 = vshrl.u32 %v5543, 7
        %v5545 = vadd.s32 %v5544, 16
        %5546 = vset.pattern.permute.xlu0 %v5545
        %5547 = vperm.xlu0 %5546, %v373
        %v5548 = vpop.permute.xlu0 %5547
        %v5549 = vlaneseq
        %v5550 = vshrl.u32 %v5549, 7
        %v5551 = vadd.s32 %v5550, 24
        %5552 = vset.pattern.permute.xlu0 %v5551
        %5553 = vperm.xlu0 %5552, %v373
        %v5554 = vpop.permute.xlu0 %5553
        %v5555 = vlaneseq
        %v5556 = vshrl.u32 %v5555, 7
        %v5557 = vadd.s32 %v5556, 32
        %5558 = vset.pattern.permute.xlu0 %v5557
        %5559 = vperm.xlu0 %5558, %v373
        %v5560 = vpop.permute.xlu0 %5559
        %v5561 = vlaneseq
        %v5562 = vshrl.u32 %v5561, 7
        %v5563 = vadd.s32 %v5562, 40
        %5564 = vset.pattern.permute.xlu0 %v5563
        %5565 = vperm.xlu0 %5564, %v373
        %v5566 = vpop.permute.xlu0 %5565
        %v5567 = vlaneseq
        %v5568 = vshrl.u32 %v5567, 7
        %v5569 = vadd.s32 %v5568, 48
        %5570 = vset.pattern.permute.xlu0 %v5569
        %5571 = vperm.xlu0 %5570, %v373
        %v5572 = vpop.permute.xlu0 %5571
        %v5573 = vlaneseq
        %v5574 = vshrl.u32 %v5573, 7
        %v5575 = vadd.s32 %v5574, 56
        %5576 = vset.pattern.permute.xlu0 %v5575
        %5577 = vperm.xlu0 %5576, %v373
        %v5578 = vpop.permute.xlu0 %5577
        %v5579 = vlaneseq
        %v5580 = vshrl.u32 %v5579, 7
        %v5581 = vadd.s32 %v5580, 64
        %5582 = vset.pattern.permute.xlu0 %v5581
        %5583 = vperm.xlu0 %5582, %v373
        %v5584 = vpop.permute.xlu0 %5583
        %v5585 = vlaneseq
        %v5586 = vshrl.u32 %v5585, 7
        %v5587 = vadd.s32 %v5586, 72
        %5588 = vset.pattern.permute.xlu0 %v5587
        %5589 = vperm.xlu0 %5588, %v373
        %v5590 = vpop.permute.xlu0 %5589
        %v5591 = vlaneseq
        %v5592 = vshrl.u32 %v5591, 7
        %v5593 = vadd.s32 %v5592, 80
        %5594 = vset.pattern.permute.xlu0 %v5593
        %5595 = vperm.xlu0 %5594, %v373
        %v5596 = vpop.permute.xlu0 %5595
        %v5597 = vlaneseq
        %v5598 = vshrl.u32 %v5597, 7
        %v5599 = vadd.s32 %v5598, 88
        %5600 = vset.pattern.permute.xlu0 %v5599
        %5601 = vperm.xlu0 %5600, %v373
        %v5602 = vpop.permute.xlu0 %5601
        %v5603 = vlaneseq
        %v5604 = vshrl.u32 %v5603, 7
        %v5605 = vadd.s32 %v5604, 96
        %5606 = vset.pattern.permute.xlu0 %v5605
        %5607 = vperm.xlu0 %5606, %v373
        %v5608 = vpop.permute.xlu0 %5607
        %v5609 = vlaneseq
        %v5610 = vshrl.u32 %v5609, 7
        %v5611 = vadd.s32 %v5610, 104
        %5612 = vset.pattern.permute.xlu0 %v5611
        %5613 = vperm.xlu0 %5612, %v373
        %v5614 = vpop.permute.xlu0 %5613
        %v5615 = vlaneseq
        %v5616 = vshrl.u32 %v5615, 7
        %v5617 = vadd.s32 %v5616, 112
        %5618 = vset.pattern.permute.xlu0 %v5617
        %5619 = vperm.xlu0 %5618, %v373
        %v5620 = vpop.permute.xlu0 %5619
        %v5621 = vlaneseq
        %v5622 = vshrl.u32 %v5621, 7
        %v5623 = vadd.s32 %v5622, 120
        %5624 = vset.pattern.permute.xlu0 %v5623
        %5625 = vperm.xlu0 %5624, %v373
        %v5626 = vpop.permute.xlu0 %5625
        %v5627 = vlaneseq
        %v5628 = vshrl.u32 %v5627, 7
        %5630 = vset.pattern.permute.xlu0 %v5628
        %5631 = vperm.xlu0 %5630, %v380
        %v5632 = vpop.permute.xlu0 %5631
        %v5633 = vlaneseq
        %v5634 = vshrl.u32 %v5633, 7
        %v5635 = vadd.s32 %v5634, 8
        %5636 = vset.pattern.permute.xlu0 %v5635
        %5637 = vperm.xlu0 %5636, %v380
        %v5638 = vpop.permute.xlu0 %5637
        %v5639 = vlaneseq
        %v5640 = vshrl.u32 %v5639, 7
        %v5641 = vadd.s32 %v5640, 16
        %5642 = vset.pattern.permute.xlu0 %v5641
        %5643 = vperm.xlu0 %5642, %v380
        %v5644 = vpop.permute.xlu0 %5643
        %v5645 = vlaneseq
        %v5646 = vshrl.u32 %v5645, 7
        %v5647 = vadd.s32 %v5646, 24
        %5648 = vset.pattern.permute.xlu0 %v5647
        %5649 = vperm.xlu0 %5648, %v380
        %v5650 = vpop.permute.xlu0 %5649
        %v5651 = vlaneseq
        %v5652 = vshrl.u32 %v5651, 7
        %v5653 = vadd.s32 %v5652, 32
        %5654 = vset.pattern.permute.xlu0 %v5653
        %5655 = vperm.xlu0 %5654, %v380
        %v5656 = vpop.permute.xlu0 %5655
        %v5657 = vlaneseq
        %v5658 = vshrl.u32 %v5657, 7
        %v5659 = vadd.s32 %v5658, 40
        %5660 = vset.pattern.permute.xlu0 %v5659
        %5661 = vperm.xlu0 %5660, %v380
        %v5662 = vpop.permute.xlu0 %5661
        %v5663 = vlaneseq
        %v5664 = vshrl.u32 %v5663, 7
        %v5665 = vadd.s32 %v5664, 48
        %5666 = vset.pattern.permute.xlu0 %v5665
        %5667 = vperm.xlu0 %5666, %v380
        %v5668 = vpop.permute.xlu0 %5667
        %v5669 = vlaneseq
        %v5670 = vshrl.u32 %v5669, 7
        %v5671 = vadd.s32 %v5670, 56
        %5672 = vset.pattern.permute.xlu0 %v5671
        %5673 = vperm.xlu0 %5672, %v380
        %v5674 = vpop.permute.xlu0 %5673
        %v5675 = vlaneseq
        %v5676 = vshrl.u32 %v5675, 7
        %v5677 = vadd.s32 %v5676, 64
        %5678 = vset.pattern.permute.xlu0 %v5677
        %5679 = vperm.xlu0 %5678, %v380
        %v5680 = vpop.permute.xlu0 %5679
        %v5681 = vlaneseq
        %v5682 = vshrl.u32 %v5681, 7
        %v5683 = vadd.s32 %v5682, 72
        %5684 = vset.pattern.permute.xlu0 %v5683
        %5685 = vperm.xlu0 %5684, %v380
        %v5686 = vpop.permute.xlu0 %5685
        %v5687 = vlaneseq
        %v5688 = vshrl.u32 %v5687, 7
        %v5689 = vadd.s32 %v5688, 80
        %5690 = vset.pattern.permute.xlu0 %v5689
        %5691 = vperm.xlu0 %5690, %v380
        %v5692 = vpop.permute.xlu0 %5691
        %v5693 = vlaneseq
        %v5694 = vshrl.u32 %v5693, 7
        %v5695 = vadd.s32 %v5694, 88
        %5696 = vset.pattern.permute.xlu0 %v5695
        %5697 = vperm.xlu0 %5696, %v380
        %v5698 = vpop.permute.xlu0 %5697
        %v5699 = vlaneseq
        %v5700 = vshrl.u32 %v5699, 7
        %v5701 = vadd.s32 %v5700, 96
        %5702 = vset.pattern.permute.xlu0 %v5701
        %5703 = vperm.xlu0 %5702, %v380
        %v5704 = vpop.permute.xlu0 %5703
        %v5705 = vlaneseq
        %v5706 = vshrl.u32 %v5705, 7
        %v5707 = vadd.s32 %v5706, 104
        %5708 = vset.pattern.permute.xlu0 %v5707
        %5709 = vperm.xlu0 %5708, %v380
        %v5710 = vpop.permute.xlu0 %5709
        %v5711 = vlaneseq
        %v5712 = vshrl.u32 %v5711, 7
        %v5713 = vadd.s32 %v5712, 112
        %5714 = vset.pattern.permute.xlu0 %v5713
        %5715 = vperm.xlu0 %5714, %v380
        %v5716 = vpop.permute.xlu0 %5715
        %v5717 = vlaneseq
        %v5718 = vshrl.u32 %v5717, 7
        %v5719 = vadd.s32 %v5718, 120
        %5720 = vset.pattern.permute.xlu0 %v5719
        %5721 = vperm.xlu0 %5720, %v380
        %v5722 = vpop.permute.xlu0 %5721
        %v5723 = vlaneseq
        %v5724 = vshrl.u32 %v5723, 7
        %5726 = vset.pattern.permute.xlu0 %v5724
        %5727 = vperm.xlu0 %5726, %v387
        %v5728 = vpop.permute.xlu0 %5727
        %v5729 = vlaneseq
        %v5730 = vshrl.u32 %v5729, 7
        %v5731 = vadd.s32 %v5730, 8
        %5732 = vset.pattern.permute.xlu0 %v5731
        %5733 = vperm.xlu0 %5732, %v387
        %v5734 = vpop.permute.xlu0 %5733
        %v5735 = vlaneseq
        %v5736 = vshrl.u32 %v5735, 7
        %v5737 = vadd.s32 %v5736, 16
        %5738 = vset.pattern.permute.xlu0 %v5737
        %5739 = vperm.xlu0 %5738, %v387
        %v5740 = vpop.permute.xlu0 %5739
        %v5741 = vlaneseq
        %v5742 = vshrl.u32 %v5741, 7
        %v5743 = vadd.s32 %v5742, 24
        %5744 = vset.pattern.permute.xlu0 %v5743
        %5745 = vperm.xlu0 %5744, %v387
        %v5746 = vpop.permute.xlu0 %5745
        %v5747 = vlaneseq
        %v5748 = vshrl.u32 %v5747, 7
        %v5749 = vadd.s32 %v5748, 32
        %5750 = vset.pattern.permute.xlu0 %v5749
        %5751 = vperm.xlu0 %5750, %v387
        %v5752 = vpop.permute.xlu0 %5751
        %v5753 = vlaneseq
        %v5754 = vshrl.u32 %v5753, 7
        %v5755 = vadd.s32 %v5754, 40
        %5756 = vset.pattern.permute.xlu0 %v5755
        %5757 = vperm.xlu0 %5756, %v387
        %v5758 = vpop.permute.xlu0 %5757
        %v5759 = vlaneseq
        %v5760 = vshrl.u32 %v5759, 7
        %v5761 = vadd.s32 %v5760, 48
        %5762 = vset.pattern.permute.xlu0 %v5761
        %5763 = vperm.xlu0 %5762, %v387
        %v5764 = vpop.permute.xlu0 %5763
        %v5765 = vlaneseq
        %v5766 = vshrl.u32 %v5765, 7
        %v5767 = vadd.s32 %v5766, 56
        %5768 = vset.pattern.permute.xlu0 %v5767
        %5769 = vperm.xlu0 %5768, %v387
        %v5770 = vpop.permute.xlu0 %5769
        %v5771 = vlaneseq
        %v5772 = vshrl.u32 %v5771, 7
        %v5773 = vadd.s32 %v5772, 64
        %5774 = vset.pattern.permute.xlu0 %v5773
        %5775 = vperm.xlu0 %5774, %v387
        %v5776 = vpop.permute.xlu0 %5775
        %v5777 = vlaneseq
        %v5778 = vshrl.u32 %v5777, 7
        %v5779 = vadd.s32 %v5778, 72
        %5780 = vset.pattern.permute.xlu0 %v5779
        %5781 = vperm.xlu0 %5780, %v387
        %v5782 = vpop.permute.xlu0 %5781
        %v5783 = vlaneseq
        %v5784 = vshrl.u32 %v5783, 7
        %v5785 = vadd.s32 %v5784, 80
        %5786 = vset.pattern.permute.xlu0 %v5785
        %5787 = vperm.xlu0 %5786, %v387
        %v5788 = vpop.permute.xlu0 %5787
        %v5789 = vlaneseq
        %v5790 = vshrl.u32 %v5789, 7
        %v5791 = vadd.s32 %v5790, 88
        %5792 = vset.pattern.permute.xlu0 %v5791
        %5793 = vperm.xlu0 %5792, %v387
        %v5794 = vpop.permute.xlu0 %5793
        %v5795 = vlaneseq
        %v5796 = vshrl.u32 %v5795, 7
        %v5797 = vadd.s32 %v5796, 96
        %5798 = vset.pattern.permute.xlu0 %v5797
        %5799 = vperm.xlu0 %5798, %v387
        %v5800 = vpop.permute.xlu0 %5799
        %v5801 = vlaneseq
        %v5802 = vshrl.u32 %v5801, 7
        %v5803 = vadd.s32 %v5802, 104
        %5804 = vset.pattern.permute.xlu0 %v5803
        %5805 = vperm.xlu0 %5804, %v387
        %v5806 = vpop.permute.xlu0 %5805
        %v5807 = vlaneseq
        %v5808 = vshrl.u32 %v5807, 7
        %v5809 = vadd.s32 %v5808, 112
        %5810 = vset.pattern.permute.xlu0 %v5809
        %5811 = vperm.xlu0 %5810, %v387
        %v5812 = vpop.permute.xlu0 %5811
        %v5813 = vlaneseq
        %v5814 = vshrl.u32 %v5813, 7
        %v5815 = vadd.s32 %v5814, 120
        %5816 = vset.pattern.permute.xlu0 %v5815
        %5817 = vperm.xlu0 %5816, %v387
        %v5818 = vpop.permute.xlu0 %5817
        %v5819 = vlaneseq
        %v5820 = vshrl.u32 %v5819, 7
        %5822 = vset.pattern.permute.xlu0 %v5820
        %5823 = vperm.xlu0 %5822, %v394
        %v5824 = vpop.permute.xlu0 %5823
        %v5825 = vlaneseq
        %v5826 = vshrl.u32 %v5825, 7
        %v5827 = vadd.s32 %v5826, 8
        %5828 = vset.pattern.permute.xlu0 %v5827
        %5829 = vperm.xlu0 %5828, %v394
        %v5830 = vpop.permute.xlu0 %5829
        %v5831 = vlaneseq
        %v5832 = vshrl.u32 %v5831, 7
        %v5833 = vadd.s32 %v5832, 16
        %5834 = vset.pattern.permute.xlu0 %v5833
        %5835 = vperm.xlu0 %5834, %v394
        %v5836 = vpop.permute.xlu0 %5835
        %v5837 = vlaneseq
        %v5838 = vshrl.u32 %v5837, 7
        %v5839 = vadd.s32 %v5838, 24
        %5840 = vset.pattern.permute.xlu0 %v5839
        %5841 = vperm.xlu0 %5840, %v394
        %v5842 = vpop.permute.xlu0 %5841
        %v5843 = vlaneseq
        %v5844 = vshrl.u32 %v5843, 7
        %v5845 = vadd.s32 %v5844, 32
        %5846 = vset.pattern.permute.xlu0 %v5845
        %5847 = vperm.xlu0 %5846, %v394
        %v5848 = vpop.permute.xlu0 %5847
        %v5849 = vlaneseq
        %v5850 = vshrl.u32 %v5849, 7
        %v5851 = vadd.s32 %v5850, 40
        %5852 = vset.pattern.permute.xlu0 %v5851
        %5853 = vperm.xlu0 %5852, %v394
        %v5854 = vpop.permute.xlu0 %5853
        %v5855 = vlaneseq
        %v5856 = vshrl.u32 %v5855, 7
        %v5857 = vadd.s32 %v5856, 48
        %5858 = vset.pattern.permute.xlu0 %v5857
        %5859 = vperm.xlu0 %5858, %v394
        %v5860 = vpop.permute.xlu0 %5859
        %v5861 = vlaneseq
        %v5862 = vshrl.u32 %v5861, 7
        %v5863 = vadd.s32 %v5862, 56
        %5864 = vset.pattern.permute.xlu0 %v5863
        %5865 = vperm.xlu0 %5864, %v394
        %v5866 = vpop.permute.xlu0 %5865
        %v5867 = vlaneseq
        %v5868 = vshrl.u32 %v5867, 7
        %v5869 = vadd.s32 %v5868, 64
        %5870 = vset.pattern.permute.xlu0 %v5869
        %5871 = vperm.xlu0 %5870, %v394
        %v5872 = vpop.permute.xlu0 %5871
        %v5873 = vlaneseq
        %v5874 = vshrl.u32 %v5873, 7
        %v5875 = vadd.s32 %v5874, 72
        %5876 = vset.pattern.permute.xlu0 %v5875
        %5877 = vperm.xlu0 %5876, %v394
        %v5878 = vpop.permute.xlu0 %5877
        %v5879 = vlaneseq
        %v5880 = vshrl.u32 %v5879, 7
        %v5881 = vadd.s32 %v5880, 80
        %5882 = vset.pattern.permute.xlu0 %v5881
        %5883 = vperm.xlu0 %5882, %v394
        %v5884 = vpop.permute.xlu0 %5883
        %v5885 = vlaneseq
        %v5886 = vshrl.u32 %v5885, 7
        %v5887 = vadd.s32 %v5886, 88
        %5888 = vset.pattern.permute.xlu0 %v5887
        %5889 = vperm.xlu0 %5888, %v394
        %v5890 = vpop.permute.xlu0 %5889
        %v5891 = vlaneseq
        %v5892 = vshrl.u32 %v5891, 7
        %v5893 = vadd.s32 %v5892, 96
        %5894 = vset.pattern.permute.xlu0 %v5893
        %5895 = vperm.xlu0 %5894, %v394
        %v5896 = vpop.permute.xlu0 %5895
        %v5897 = vlaneseq
        %v5898 = vshrl.u32 %v5897, 7
        %v5899 = vadd.s32 %v5898, 104
        %5900 = vset.pattern.permute.xlu0 %v5899
        %5901 = vperm.xlu0 %5900, %v394
        %v5902 = vpop.permute.xlu0 %5901
        %v5903 = vlaneseq
        %v5904 = vshrl.u32 %v5903, 7
        %v5905 = vadd.s32 %v5904, 112
        %5906 = vset.pattern.permute.xlu0 %v5905
        %5907 = vperm.xlu0 %5906, %v394
        %v5908 = vpop.permute.xlu0 %5907
        %v5909 = vlaneseq
        %v5910 = vshrl.u32 %v5909, 7
        %v5911 = vadd.s32 %v5910, 120
        %5912 = vset.pattern.permute.xlu0 %v5911
        %5913 = vperm.xlu0 %5912, %v394
        %v5914 = vpop.permute.xlu0 %5913
        %v5915 = vadd.f32 %v655, %v4384
        %v5916 = vadd.f32 %v658, %v4390
        %v5917 = vadd.f32 %v661, %v4396
        %v5918 = vadd.f32 %v664, %v4402
        %v5919 = vadd.f32 %v667, %v4408
        %v5920 = vadd.f32 %v670, %v4414
        %v5921 = vadd.f32 %v673, %v4420
        %v5922 = vadd.f32 %v676, %v4426
        %v5923 = vadd.f32 %v679, %v4432
        %v5924 = vadd.f32 %v682, %v4438
        %v5925 = vadd.f32 %v685, %v4444
        %v5926 = vadd.f32 %v688, %v4450
        %v5927 = vadd.f32 %v691, %v4456
        %v5928 = vadd.f32 %v694, %v4462
        %v5929 = vadd.f32 %v697, %v4468
        %v5930 = vadd.f32 %v700, %v4474
        %v5931 = vadd.f32 %v703, %v4480
        %v5932 = vadd.f32 %v706, %v4486
        %v5933 = vadd.f32 %v709, %v4492
        %v5934 = vadd.f32 %v712, %v4498
        %v5935 = vadd.f32 %v715, %v4504
        %v5936 = vadd.f32 %v718, %v4510
        %v5937 = vadd.f32 %v721, %v4516
        %v5938 = vadd.f32 %v724, %v4522
        %v5939 = vadd.f32 %v727, %v4528
        %v5940 = vadd.f32 %v730, %v4534
        %v5941 = vadd.f32 %v733, %v4540
        %v5942 = vadd.f32 %v736, %v4546
        %v5943 = vadd.f32 %v739, %v4552
        %v5944 = vadd.f32 %v742, %v4558
        %v5945 = vadd.f32 %v745, %v4564
        %v5946 = vadd.f32 %v748, %v4570
        %v5947 = vadd.f32 %v937, %v4576
        %v5948 = vadd.f32 %v940, %v4582
        %v5949 = vadd.f32 %v943, %v4588
        %v5950 = vadd.f32 %v946, %v4594
        %v5951 = vadd.f32 %v949, %v4600
        %v5952 = vadd.f32 %v952, %v4606
        %v5953 = vadd.f32 %v955, %v4612
        %v5954 = vadd.f32 %v958, %v4618
        %v5955 = vadd.f32 %v961, %v4624
        %v5956 = vadd.f32 %v964, %v4630
        %v5957 = vadd.f32 %v967, %v4636
        %v5958 = vadd.f32 %v970, %v4642
        %v5959 = vadd.f32 %v973, %v4648
        %v5960 = vadd.f32 %v976, %v4654
        %v5961 = vadd.f32 %v979, %v4660
        %v5962 = vadd.f32 %v982, %v4666
        %v5963 = vadd.f32 %v985, %v4672
        %v5964 = vadd.f32 %v988, %v4678
        %v5965 = vadd.f32 %v991, %v4684
        %v5966 = vadd.f32 %v994, %v4690
        %v5967 = vadd.f32 %v997, %v4696
        %v5968 = vadd.f32 %v1000, %v4702
        %v5969 = vadd.f32 %v1003, %v4708
        %v5970 = vadd.f32 %v1006, %v4714
        %v5971 = vadd.f32 %v1009, %v4720
        %v5972 = vadd.f32 %v1012, %v4726
        %v5973 = vadd.f32 %v1015, %v4732
        %v5974 = vadd.f32 %v1018, %v4738
        %v5975 = vadd.f32 %v1021, %v4744
        %v5976 = vadd.f32 %v1024, %v4750
        %v5977 = vadd.f32 %v1027, %v4756
        %v5978 = vadd.f32 %v1030, %v4762
        %v5979 = vadd.f32 %v1219, %v4768
        %v5980 = vadd.f32 %v1222, %v4774
        %v5981 = vadd.f32 %v1225, %v4780
        %v5982 = vadd.f32 %v1228, %v4786
        %v5983 = vadd.f32 %v1231, %v4792
        %v5984 = vadd.f32 %v1234, %v4798
        %v5985 = vadd.f32 %v1237, %v4804
        %v5986 = vadd.f32 %v1240, %v4810
        %v5987 = vadd.f32 %v1243, %v4816
        %v5988 = vadd.f32 %v1246, %v4822
        %v5989 = vadd.f32 %v1249, %v4828
        %v5990 = vadd.f32 %v1252, %v4834
        %v5991 = vadd.f32 %v1255, %v4840
        %v5992 = vadd.f32 %v1258, %v4846
        %v5993 = vadd.f32 %v1261, %v4852
        %v5994 = vadd.f32 %v1264, %v4858
        %v5995 = vadd.f32 %v1267, %v4864
        %v5996 = vadd.f32 %v1270, %v4870
        %v5997 = vadd.f32 %v1273, %v4876
        %v5998 = vadd.f32 %v1276, %v4882
        %v5999 = vadd.f32 %v1279, %v4888
        %v6000 = vadd.f32 %v1282, %v4894
        %v6001 = vadd.f32 %v1285, %v4900
        %v6002 = vadd.f32 %v1288, %v4906
        %v6003 = vadd.f32 %v1291, %v4912
        %v6004 = vadd.f32 %v1294, %v4918
        %v6005 = vadd.f32 %v1297, %v4924
        %v6006 = vadd.f32 %v1300, %v4930
        %v6007 = vadd.f32 %v1303, %v4936
        %v6008 = vadd.f32 %v1306, %v4942
        %v6009 = vadd.f32 %v1309, %v4948
        %v6010 = vadd.f32 %v1312, %v4954
        %v6011 = vadd.f32 %v1501, %v4960
        %v6012 = vadd.f32 %v1504, %v4966
        %v6013 = vadd.f32 %v1507, %v4972
        %v6014 = vadd.f32 %v1510, %v4978
        %v6015 = vadd.f32 %v1513, %v4984
        %v6016 = vadd.f32 %v1516, %v4990
        %v6017 = vadd.f32 %v1519, %v4996
        %v6018 = vadd.f32 %v1522, %v5002
        %v6019 = vadd.f32 %v1525, %v5008
        %v6020 = vadd.f32 %v1528, %v5014
        %v6021 = vadd.f32 %v1531, %v5020
        %v6022 = vadd.f32 %v1534, %v5026
        %v6023 = vadd.f32 %v1537, %v5032
        %v6024 = vadd.f32 %v1540, %v5038
        %v6025 = vadd.f32 %v1543, %v5044
        %v6026 = vadd.f32 %v1546, %v5050
        %v6027 = vadd.f32 %v1549, %v5056
        %v6028 = vadd.f32 %v1552, %v5062
        %v6029 = vadd.f32 %v1555, %v5068
        %v6030 = vadd.f32 %v1558, %v5074
        %v6031 = vadd.f32 %v1561, %v5080
        %v6032 = vadd.f32 %v1564, %v5086
        %v6033 = vadd.f32 %v1567, %v5092
        %v6034 = vadd.f32 %v1570, %v5098
        %v6035 = vadd.f32 %v1573, %v5104
        %v6036 = vadd.f32 %v1576, %v5110
        %v6037 = vadd.f32 %v1579, %v5116
        %v6038 = vadd.f32 %v1582, %v5122
        %v6039 = vadd.f32 %v1585, %v5128
        %v6040 = vadd.f32 %v1588, %v5134
        %v6041 = vadd.f32 %v1591, %v5140
        %v6042 = vadd.f32 %v1594, %v5146
        %v6043 = vadd.f32 %v1783, %v5152
        %v6044 = vadd.f32 %v1786, %v5158
        %v6045 = vadd.f32 %v1789, %v5164
        %v6046 = vadd.f32 %v1792, %v5170
        %v6047 = vadd.f32 %v1795, %v5176
        %v6048 = vadd.f32 %v1798, %v5182
        %v6049 = vadd.f32 %v1801, %v5188
        %v6050 = vadd.f32 %v1804, %v5194
        %v6051 = vadd.f32 %v1807, %v5200
        %v6052 = vadd.f32 %v1810, %v5206
        %v6053 = vadd.f32 %v1813, %v5212
        %v6054 = vadd.f32 %v1816, %v5218
        %v6055 = vadd.f32 %v1819, %v5224
        %v6056 = vadd.f32 %v1822, %v5230
        %v6057 = vadd.f32 %v1825, %v5236
        %v6058 = vadd.f32 %v1828, %v5242
        %v6059 = vadd.f32 %v1831, %v5248
        %v6060 = vadd.f32 %v1834, %v5254
        %v6061 = vadd.f32 %v1837, %v5260
        %v6062 = vadd.f32 %v1840, %v5266
        %v6063 = vadd.f32 %v1843, %v5272
        %v6064 = vadd.f32 %v1846, %v5278
        %v6065 = vadd.f32 %v1849, %v5284
        %v6066 = vadd.f32 %v1852, %v5290
        %v6067 = vadd.f32 %v1855, %v5296
        %v6068 = vadd.f32 %v1858, %v5302
        %v6069 = vadd.f32 %v1861, %v5308
        %v6070 = vadd.f32 %v1864, %v5314
        %v6071 = vadd.f32 %v1867, %v5320
        %v6072 = vadd.f32 %v1870, %v5326
        %v6073 = vadd.f32 %v1873, %v5332
        %v6074 = vadd.f32 %v1876, %v5338
        %v6075 = vadd.f32 %v2065, %v5344
        %v6076 = vadd.f32 %v2068, %v5350
        %v6077 = vadd.f32 %v2071, %v5356
        %v6078 = vadd.f32 %v2074, %v5362
        %v6079 = vadd.f32 %v2077, %v5368
        %v6080 = vadd.f32 %v2080, %v5374
        %v6081 = vadd.f32 %v2083, %v5380
        %v6082 = vadd.f32 %v2086, %v5386
        %v6083 = vadd.f32 %v2089, %v5392
        %v6084 = vadd.f32 %v2092, %v5398
        %v6085 = vadd.f32 %v2095, %v5404
        %v6086 = vadd.f32 %v2098, %v5410
        %v6087 = vadd.f32 %v2101, %v5416
        %v6088 = vadd.f32 %v2104, %v5422
        %v6089 = vadd.f32 %v2107, %v5428
        %v6090 = vadd.f32 %v2110, %v5434
        %v6091 = vadd.f32 %v2113, %v5440
        %v6092 = vadd.f32 %v2116, %v5446
        %v6093 = vadd.f32 %v2119, %v5452
        %v6094 = vadd.f32 %v2122, %v5458
        %v6095 = vadd.f32 %v2125, %v5464
        %v6096 = vadd.f32 %v2128, %v5470
        %v6097 = vadd.f32 %v2131, %v5476
        %v6098 = vadd.f32 %v2134, %v5482
        %v6099 = vadd.f32 %v2137, %v5488
        %v6100 = vadd.f32 %v2140, %v5494
        %v6101 = vadd.f32 %v2143, %v5500
        %v6102 = vadd.f32 %v2146, %v5506
        %v6103 = vadd.f32 %v2149, %v5512
        %v6104 = vadd.f32 %v2152, %v5518
        %v6105 = vadd.f32 %v2155, %v5524
        %v6106 = vadd.f32 %v2158, %v5530
        %v6107 = vadd.f32 %v2347, %v5536
        %v6108 = vadd.f32 %v2350, %v5542
        %v6109 = vadd.f32 %v2353, %v5548
        %v6110 = vadd.f32 %v2356, %v5554
        %v6111 = vadd.f32 %v2359, %v5560
        %v6112 = vadd.f32 %v2362, %v5566
        %v6113 = vadd.f32 %v2365, %v5572
        %v6114 = vadd.f32 %v2368, %v5578
        %v6115 = vadd.f32 %v2371, %v5584
        %v6116 = vadd.f32 %v2374, %v5590
        %v6117 = vadd.f32 %v2377, %v5596
        %v6118 = vadd.f32 %v2380, %v5602
        %v6119 = vadd.f32 %v2383, %v5608
        %v6120 = vadd.f32 %v2386, %v5614
        %v6121 = vadd.f32 %v2389, %v5620
        %v6122 = vadd.f32 %v2392, %v5626
        %v6123 = vadd.f32 %v2395, %v5632
        %v6124 = vadd.f32 %v2398, %v5638
        %v6125 = vadd.f32 %v2401, %v5644
        %v6126 = vadd.f32 %v2404, %v5650
        %v6127 = vadd.f32 %v2407, %v5656
        %v6128 = vadd.f32 %v2410, %v5662
        %v6129 = vadd.f32 %v2413, %v5668
        %v6130 = vadd.f32 %v2416, %v5674
        %v6131 = vadd.f32 %v2419, %v5680
        %v6132 = vadd.f32 %v2422, %v5686
        %v6133 = vadd.f32 %v2425, %v5692
        %v6134 = vadd.f32 %v2428, %v5698
        %v6135 = vadd.f32 %v2431, %v5704
        %v6136 = vadd.f32 %v2434, %v5710
        %v6137 = vadd.f32 %v2437, %v5716
        %v6138 = vadd.f32 %v2440, %v5722
        %v6139 = vadd.f32 %v2629, %v5728
        %v6140 = vadd.f32 %v2632, %v5734
        %v6141 = vadd.f32 %v2635, %v5740
        %v6142 = vadd.f32 %v2638, %v5746
        %v6143 = vadd.f32 %v2641, %v5752
        %v6144 = vadd.f32 %v2644, %v5758
        %v6145 = vadd.f32 %v2647, %v5764
        %v6146 = vadd.f32 %v2650, %v5770
        %v6147 = vadd.f32 %v2653, %v5776
        %v6148 = vadd.f32 %v2656, %v5782
        %v6149 = vadd.f32 %v2659, %v5788
        %v6150 = vadd.f32 %v2662, %v5794
        %v6151 = vadd.f32 %v2665, %v5800
        %v6152 = vadd.f32 %v2668, %v5806
        %v6153 = vadd.f32 %v2671, %v5812
        %v6154 = vadd.f32 %v2674, %v5818
        %v6155 = vadd.f32 %v2677, %v5824
        %v6156 = vadd.f32 %v2680, %v5830
        %v6157 = vadd.f32 %v2683, %v5836
        %v6158 = vadd.f32 %v2686, %v5842
        %v6159 = vadd.f32 %v2689, %v5848
        %v6160 = vadd.f32 %v2692, %v5854
        %v6161 = vadd.f32 %v2695, %v5860
        %v6162 = vadd.f32 %v2698, %v5866
        %v6163 = vadd.f32 %v2701, %v5872
        %v6164 = vadd.f32 %v2704, %v5878
        %v6165 = vadd.f32 %v2707, %v5884
        %v6166 = vadd.f32 %v2710, %v5890
        %v6167 = vadd.f32 %v2713, %v5896
        %v6168 = vadd.f32 %v2716, %v5902
        %v6169 = vadd.f32 %v2719, %v5908
        %v6170 = vadd.f32 %v2722, %v5914
        %v6171 = vmin.f32 %v5915, %v5916
        %v6172 = vmin.f32 %v6171, %v5917
        %v6173 = vmin.f32 %v6172, %v5918
        %v6174 = vmin.f32 %v6173, %v5919
        %v6175 = vmin.f32 %v6174, %v5920
        %v6176 = vmin.f32 %v6175, %v5921
        %v6177 = vmin.f32 %v6176, %v5922
        %v6178 = vmin.f32 %v6177, %v5923
        %v6179 = vmin.f32 %v6178, %v5924
        %v6180 = vmin.f32 %v6179, %v5925
        %v6181 = vmin.f32 %v6180, %v5926
        %v6182 = vmin.f32 %v6181, %v5927
        %v6183 = vmin.f32 %v6182, %v5928
        %v6184 = vmin.f32 %v6183, %v5929
        %v6185 = vmin.f32 %v6184, %v5930
        %v6186 = vmin.f32 %v6185, %v5931
        %v6187 = vmin.f32 %v6186, %v5932
        %v6188 = vmin.f32 %v6187, %v5933
        %v6189 = vmin.f32 %v6188, %v5934
        %v6190 = vmin.f32 %v6189, %v5935
        %v6191 = vmin.f32 %v6190, %v5936
        %v6192 = vmin.f32 %v6191, %v5937
        %v6193 = vmin.f32 %v6192, %v5938
        %v6194 = vmin.f32 %v6193, %v5939
        %v6195 = vmin.f32 %v6194, %v5940
        %v6196 = vmin.f32 %v6195, %v5941
        %v6197 = vmin.f32 %v6196, %v5942
        %v6198 = vmin.f32 %v6197, %v5943
        %v6199 = vmin.f32 %v6198, %v5944
        %v6200 = vmin.f32 %v6199, %v5945
        %v6201 = vmin.f32 %v6200, %v5946
        %v6202 = vrot.slane %v6201, 4
        %v6203 = vmin.f32 %v6201, %v6202
        %v6204 = vrot.slane %v6203, 2
        %v6205 = vmin.f32 %v6203, %v6204
        %v6206 = vrot.slane %v6205, 1
        %v6207 = vmin.f32 %v6205, %v6206
        %v6208 = vmin.f32 %v5947, %v5948
        %v6209 = vmin.f32 %v6208, %v5949
        %v6210 = vmin.f32 %v6209, %v5950
        %v6211 = vmin.f32 %v6210, %v5951
        %v6212 = vmin.f32 %v6211, %v5952
        %v6213 = vmin.f32 %v6212, %v5953
        %v6214 = vmin.f32 %v6213, %v5954
        %v6215 = vmin.f32 %v6214, %v5955
        %v6216 = vmin.f32 %v6215, %v5956
        %v6217 = vmin.f32 %v6216, %v5957
        %v6218 = vmin.f32 %v6217, %v5958
        %v6219 = vmin.f32 %v6218, %v5959
        %v6220 = vmin.f32 %v6219, %v5960
        %v6221 = vmin.f32 %v6220, %v5961
        %v6222 = vmin.f32 %v6221, %v5962
        %v6223 = vmin.f32 %v6222, %v5963
        %v6224 = vmin.f32 %v6223, %v5964
        %v6225 = vmin.f32 %v6224, %v5965
        %v6226 = vmin.f32 %v6225, %v5966
        %v6227 = vmin.f32 %v6226, %v5967
        %v6228 = vmin.f32 %v6227, %v5968
        %v6229 = vmin.f32 %v6228, %v5969
        %v6230 = vmin.f32 %v6229, %v5970
        %v6231 = vmin.f32 %v6230, %v5971
        %v6232 = vmin.f32 %v6231, %v5972
        %v6233 = vmin.f32 %v6232, %v5973
        %v6234 = vmin.f32 %v6233, %v5974
        %v6235 = vmin.f32 %v6234, %v5975
        %v6236 = vmin.f32 %v6235, %v5976
        %v6237 = vmin.f32 %v6236, %v5977
        %v6238 = vmin.f32 %v6237, %v5978
        %v6239 = vrot.slane %v6238, 4
        %v6240 = vmin.f32 %v6238, %v6239
        %v6241 = vrot.slane %v6240, 2
        %v6242 = vmin.f32 %v6240, %v6241
        %v6243 = vrot.slane %v6242, 1
        %v6244 = vmin.f32 %v6242, %v6243
        %v6245 = vmin.f32 %v5979, %v5980
        %v6246 = vmin.f32 %v6245, %v5981
        %v6247 = vmin.f32 %v6246, %v5982
        %v6248 = vmin.f32 %v6247, %v5983
        %v6249 = vmin.f32 %v6248, %v5984
        %v6250 = vmin.f32 %v6249, %v5985
        %v6251 = vmin.f32 %v6250, %v5986
        %v6252 = vmin.f32 %v6251, %v5987
        %v6253 = vmin.f32 %v6252, %v5988
        %v6254 = vmin.f32 %v6253, %v5989
        %v6255 = vmin.f32 %v6254, %v5990
        %v6256 = vmin.f32 %v6255, %v5991
        %v6257 = vmin.f32 %v6256, %v5992
        %v6258 = vmin.f32 %v6257, %v5993
        %v6259 = vmin.f32 %v6258, %v5994
        %v6260 = vmin.f32 %v6259, %v5995
        %v6261 = vmin.f32 %v6260, %v5996
        %v6262 = vmin.f32 %v6261, %v5997
        %v6263 = vmin.f32 %v6262, %v5998
        %v6264 = vmin.f32 %v6263, %v5999
        %v6265 = vmin.f32 %v6264, %v6000
        %v6266 = vmin.f32 %v6265, %v6001
        %v6267 = vmin.f32 %v6266, %v6002
        %v6268 = vmin.f32 %v6267, %v6003
        %v6269 = vmin.f32 %v6268, %v6004
        %v6270 = vmin.f32 %v6269, %v6005
        %v6271 = vmin.f32 %v6270, %v6006
        %v6272 = vmin.f32 %v6271, %v6007
        %v6273 = vmin.f32 %v6272, %v6008
        %v6274 = vmin.f32 %v6273, %v6009
        %v6275 = vmin.f32 %v6274, %v6010
        %v6276 = vrot.slane %v6275, 4
        %v6277 = vmin.f32 %v6275, %v6276
        %v6278 = vrot.slane %v6277, 2
        %v6279 = vmin.f32 %v6277, %v6278
        %v6280 = vrot.slane %v6279, 1
        %v6281 = vmin.f32 %v6279, %v6280
        %v6282 = vmin.f32 %v6011, %v6012
        %v6283 = vmin.f32 %v6282, %v6013
        %v6284 = vmin.f32 %v6283, %v6014
        %v6285 = vmin.f32 %v6284, %v6015
        %v6286 = vmin.f32 %v6285, %v6016
        %v6287 = vmin.f32 %v6286, %v6017
        %v6288 = vmin.f32 %v6287, %v6018
        %v6289 = vmin.f32 %v6288, %v6019
        %v6290 = vmin.f32 %v6289, %v6020
        %v6291 = vmin.f32 %v6290, %v6021
        %v6292 = vmin.f32 %v6291, %v6022
        %v6293 = vmin.f32 %v6292, %v6023
        %v6294 = vmin.f32 %v6293, %v6024
        %v6295 = vmin.f32 %v6294, %v6025
        %v6296 = vmin.f32 %v6295, %v6026
        %v6297 = vmin.f32 %v6296, %v6027
        %v6298 = vmin.f32 %v6297, %v6028
        %v6299 = vmin.f32 %v6298, %v6029
        %v6300 = vmin.f32 %v6299, %v6030
        %v6301 = vmin.f32 %v6300, %v6031
        %v6302 = vmin.f32 %v6301, %v6032
        %v6303 = vmin.f32 %v6302, %v6033
        %v6304 = vmin.f32 %v6303, %v6034
        %v6305 = vmin.f32 %v6304, %v6035
        %v6306 = vmin.f32 %v6305, %v6036
        %v6307 = vmin.f32 %v6306, %v6037
        %v6308 = vmin.f32 %v6307, %v6038
        %v6309 = vmin.f32 %v6308, %v6039
        %v6310 = vmin.f32 %v6309, %v6040
        %v6311 = vmin.f32 %v6310, %v6041
        %v6312 = vmin.f32 %v6311, %v6042
        %v6313 = vrot.slane %v6312, 4
        %v6314 = vmin.f32 %v6312, %v6313
        %v6315 = vrot.slane %v6314, 2
        %v6316 = vmin.f32 %v6314, %v6315
        %v6317 = vrot.slane %v6316, 1
        %v6318 = vmin.f32 %v6316, %v6317
        %v6319 = vmin.f32 %v6043, %v6044
        %v6320 = vmin.f32 %v6319, %v6045
        %v6321 = vmin.f32 %v6320, %v6046
        %v6322 = vmin.f32 %v6321, %v6047
        %v6323 = vmin.f32 %v6322, %v6048
        %v6324 = vmin.f32 %v6323, %v6049
        %v6325 = vmin.f32 %v6324, %v6050
        %v6326 = vmin.f32 %v6325, %v6051
        %v6327 = vmin.f32 %v6326, %v6052
        %v6328 = vmin.f32 %v6327, %v6053
        %v6329 = vmin.f32 %v6328, %v6054
        %v6330 = vmin.f32 %v6329, %v6055
        %v6331 = vmin.f32 %v6330, %v6056
        %v6332 = vmin.f32 %v6331, %v6057
        %v6333 = vmin.f32 %v6332, %v6058
        %v6334 = vmin.f32 %v6333, %v6059
        %v6335 = vmin.f32 %v6334, %v6060
        %v6336 = vmin.f32 %v6335, %v6061
        %v6337 = vmin.f32 %v6336, %v6062
        %v6338 = vmin.f32 %v6337, %v6063
        %v6339 = vmin.f32 %v6338, %v6064
        %v6340 = vmin.f32 %v6339, %v6065
        %v6341 = vmin.f32 %v6340, %v6066
        %v6342 = vmin.f32 %v6341, %v6067
        %v6343 = vmin.f32 %v6342, %v6068
        %v6344 = vmin.f32 %v6343, %v6069
        %v6345 = vmin.f32 %v6344, %v6070
        %v6346 = vmin.f32 %v6345, %v6071
        %v6347 = vmin.f32 %v6346, %v6072
        %v6348 = vmin.f32 %v6347, %v6073
        %v6349 = vmin.f32 %v6348, %v6074
        %v6350 = vrot.slane %v6349, 4
        %v6351 = vmin.f32 %v6349, %v6350
        %v6352 = vrot.slane %v6351, 2
        %v6353 = vmin.f32 %v6351, %v6352
        %v6354 = vrot.slane %v6353, 1
        %v6355 = vmin.f32 %v6353, %v6354
        %v6356 = vmin.f32 %v6075, %v6076
        %v6357 = vmin.f32 %v6356, %v6077
        %v6358 = vmin.f32 %v6357, %v6078
        %v6359 = vmin.f32 %v6358, %v6079
        %v6360 = vmin.f32 %v6359, %v6080
        %v6361 = vmin.f32 %v6360, %v6081
        %v6362 = vmin.f32 %v6361, %v6082
        %v6363 = vmin.f32 %v6362, %v6083
        %v6364 = vmin.f32 %v6363, %v6084
        %v6365 = vmin.f32 %v6364, %v6085
        %v6366 = vmin.f32 %v6365, %v6086
        %v6367 = vmin.f32 %v6366, %v6087
        %v6368 = vmin.f32 %v6367, %v6088
        %v6369 = vmin.f32 %v6368, %v6089
        %v6370 = vmin.f32 %v6369, %v6090
        %v6371 = vmin.f32 %v6370, %v6091
        %v6372 = vmin.f32 %v6371, %v6092
        %v6373 = vmin.f32 %v6372, %v6093
        %v6374 = vmin.f32 %v6373, %v6094
        %v6375 = vmin.f32 %v6374, %v6095
        %v6376 = vmin.f32 %v6375, %v6096
        %v6377 = vmin.f32 %v6376, %v6097
        %v6378 = vmin.f32 %v6377, %v6098
        %v6379 = vmin.f32 %v6378, %v6099
        %v6380 = vmin.f32 %v6379, %v6100
        %v6381 = vmin.f32 %v6380, %v6101
        %v6382 = vmin.f32 %v6381, %v6102
        %v6383 = vmin.f32 %v6382, %v6103
        %v6384 = vmin.f32 %v6383, %v6104
        %v6385 = vmin.f32 %v6384, %v6105
        %v6386 = vmin.f32 %v6385, %v6106
        %v6387 = vrot.slane %v6386, 4
        %v6388 = vmin.f32 %v6386, %v6387
        %v6389 = vrot.slane %v6388, 2
        %v6390 = vmin.f32 %v6388, %v6389
        %v6391 = vrot.slane %v6390, 1
        %v6392 = vmin.f32 %v6390, %v6391
        %v6393 = vmin.f32 %v6107, %v6108
        %v6394 = vmin.f32 %v6393, %v6109
        %v6395 = vmin.f32 %v6394, %v6110
        %v6396 = vmin.f32 %v6395, %v6111
        %v6397 = vmin.f32 %v6396, %v6112
        %v6398 = vmin.f32 %v6397, %v6113
        %v6399 = vmin.f32 %v6398, %v6114
        %v6400 = vmin.f32 %v6399, %v6115
        %v6401 = vmin.f32 %v6400, %v6116
        %v6402 = vmin.f32 %v6401, %v6117
        %v6403 = vmin.f32 %v6402, %v6118
        %v6404 = vmin.f32 %v6403, %v6119
        %v6405 = vmin.f32 %v6404, %v6120
        %v6406 = vmin.f32 %v6405, %v6121
        %v6407 = vmin.f32 %v6406, %v6122
        %v6408 = vmin.f32 %v6407, %v6123
        %v6409 = vmin.f32 %v6408, %v6124
        %v6410 = vmin.f32 %v6409, %v6125
        %v6411 = vmin.f32 %v6410, %v6126
        %v6412 = vmin.f32 %v6411, %v6127
        %v6413 = vmin.f32 %v6412, %v6128
        %v6414 = vmin.f32 %v6413, %v6129
        %v6415 = vmin.f32 %v6414, %v6130
        %v6416 = vmin.f32 %v6415, %v6131
        %v6417 = vmin.f32 %v6416, %v6132
        %v6418 = vmin.f32 %v6417, %v6133
        %v6419 = vmin.f32 %v6418, %v6134
        %v6420 = vmin.f32 %v6419, %v6135
        %v6421 = vmin.f32 %v6420, %v6136
        %v6422 = vmin.f32 %v6421, %v6137
        %v6423 = vmin.f32 %v6422, %v6138
        %v6424 = vrot.slane %v6423, 4
        %v6425 = vmin.f32 %v6423, %v6424
        %v6426 = vrot.slane %v6425, 2
        %v6427 = vmin.f32 %v6425, %v6426
        %v6428 = vrot.slane %v6427, 1
        %v6429 = vmin.f32 %v6427, %v6428
        %v6430 = vmin.f32 %v6139, %v6140
        %v6431 = vmin.f32 %v6430, %v6141
        %v6432 = vmin.f32 %v6431, %v6142
        %v6433 = vmin.f32 %v6432, %v6143
        %v6434 = vmin.f32 %v6433, %v6144
        %v6435 = vmin.f32 %v6434, %v6145
        %v6436 = vmin.f32 %v6435, %v6146
        %v6437 = vmin.f32 %v6436, %v6147
        %v6438 = vmin.f32 %v6437, %v6148
        %v6439 = vmin.f32 %v6438, %v6149
        %v6440 = vmin.f32 %v6439, %v6150
        %v6441 = vmin.f32 %v6440, %v6151
        %v6442 = vmin.f32 %v6441, %v6152
        %v6443 = vmin.f32 %v6442, %v6153
        %v6444 = vmin.f32 %v6443, %v6154
        %v6445 = vmin.f32 %v6444, %v6155
        %v6446 = vmin.f32 %v6445, %v6156
        %v6447 = vmin.f32 %v6446, %v6157
        %v6448 = vmin.f32 %v6447, %v6158
        %v6449 = vmin.f32 %v6448, %v6159
        %v6450 = vmin.f32 %v6449, %v6160
        %v6451 = vmin.f32 %v6450, %v6161
        %v6452 = vmin.f32 %v6451, %v6162
        %v6453 = vmin.f32 %v6452, %v6163
        %v6454 = vmin.f32 %v6453, %v6164
        %v6455 = vmin.f32 %v6454, %v6165
        %v6456 = vmin.f32 %v6455, %v6166
        %v6457 = vmin.f32 %v6456, %v6167
        %v6458 = vmin.f32 %v6457, %v6168
        %v6459 = vmin.f32 %v6458, %v6169
        %v6460 = vmin.f32 %v6459, %v6170
        %v6461 = vrot.slane %v6460, 4
        %v6462 = vmin.f32 %v6460, %v6461
        %v6463 = vrot.slane %v6462, 2
        %v6464 = vmin.f32 %v6462, %v6463
        %v6465 = vrot.slane %v6464, 1
        %v6466 = vmin.f32 %v6464, %v6465
        %v6467 = vadd.f32 %v409, %v6207
        %v6468 = vadd.f32 %v416, %v6244
        %v6469 = vadd.f32 %v423, %v6281
        %v6470 = vadd.f32 %v430, %v6318
        %v6471 = vadd.f32 %v437, %v6355
        %v6472 = vadd.f32 %v444, %v6392
        %v6473 = vadd.f32 %v451, %v6429
        %v6474 = vadd.f32 %v458, %v6466
        %v6475 = vmax.f32 %v6467, 0.0
        %v6476 = vmax.f32 %v6468, 0.0
        %v6477 = vmax.f32 %v6469, 0.0
        %v6478 = vmax.f32 %v6470, 0.0
        %v6479 = vmax.f32 %v6471, 0.0
        %v6480 = vmax.f32 %v6472, 0.0
        %v6481 = vmax.f32 %v6473, 0.0
        %v6482 = vmax.f32 %v6474, 0.0
        %v6491 = vsel %vm4341, %v6476, %v6475
        %v6492 = vsel %vm4344, %v6477, %v6491
        %v6493 = vsel %vm4347, %v6478, %v6492
        %v6494 = vsel %vm4350, %v6479, %v6493
        %v6495 = vsel %vm4353, %v6480, %v6494
        %v6496 = vsel %vm4356, %v6481, %v6495
        %v6497 = vsel %vm4359, %v6482, %v6496
        %6499 = vst [vmem:[%s193] sm:$0xff] %v6497
        %s6500 = sand.u32 %s81, 1
        %s6501 = scalar_lea.sflag [#allocation3], %s6500
        %s6502 = sand.u32 %s81, 1
        %s6503 = smul.addr %s6502, 16
        %s6504 = scalar_lea.vmem [#allocation2], %s6503
        %s6505 = sand.u32 %s107, 1
        %s6506 = scalar_lea.sflag [#allocation5], %s6505
        %s6507 = sand.u32 %s107, 1
        %s6508 = smul.addr %s6507, 8
        %s6509 = scalar_lea.vmem [#allocation4], %s6508
        // Predicated region
        $region29: #{tpu_custom_call.1} parent=27 // pred_check
          %p6510 = pneg %p91
        $region30: #{tpu_custom_call.1} parent=27 // pred_check_branch
          %6512 = sbr.rel (%p6510) target = $region32
        $region31: #{tpu_custom_call.1} parent=27 // pred_region
          %6514 = vsyncadd %s6501, 0
          %s6515 = smul.addr %s21, 2
          %s6516 = smul.addr %s6515, 8
          %s6517 = scalar_lea.hbm %s2, %s6516
          %s6519 = sshll.u32 %s6504, 4
          %s6520 = int_to_ptr.vmem [resolvable:$true] %s6519
          %s6521 = sshll.u32 %s6517, 4
          %s6522 = int_to_ptr.hbm [resolvable:$true] %s6521
          %6524 = dma.vmem_to_hbm [thread:$0]  %s6520, 256, %s6522, %s6501
        $region32: #{tpu_custom_call.1} parent=27 // pred_fallthru
          _
        // Predicated region
        $region33: #{tpu_custom_call.1} parent=27 // pred_check
          %p6525 = pneg %p117
        $region34: #{tpu_custom_call.1} parent=27 // pred_check_branch
          %6527 = sbr.rel (%p6525) target = $region36
        $region35: #{tpu_custom_call.1} parent=27 // pred_region
          %6529 = vsyncadd %s6506, 0
          %s6530 = smul.addr %s21, 8
          %s6531 = scalar_lea.hbm %s3, %s6530
          %s6533 = sshll.u32 %s6509, 4
          %s6534 = int_to_ptr.vmem [resolvable:$true] %s6533
          %s6535 = sshll.u32 %s6531, 4
          %s6536 = int_to_ptr.hbm [resolvable:$true] %s6535
          %6538 = dma.vmem_to_hbm [thread:$0]  %s6534, 128, %s6536, %s6506
        $region36: #{tpu_custom_call.1} parent=27 // pred_fallthru
          _
      $region28: #{tpu_custom_call.1} parent=5 // pred_fallthru
        _
      %p6539 = scmp.le.s32.totalorder 2, %s16
      // Predicated region
      $region37: #{tpu_custom_call.1} parent=5 // pred_check
        %p6540 = pneg %p6539
      $region38: #{tpu_custom_call.1} parent=5 // pred_check_branch
        %6542 = sbr.rel (%p6540) target = $region40
      $region39: #{tpu_custom_call.1} parent=5 // pred_region
        %s6543 = ssub.s32 %s16, 2
        // Predicated region
        $region41: #{tpu_custom_call.1} parent=39 // pred_check
          %p6544 = pneg %p97
        $region42: #{tpu_custom_call.1} parent=39 // pred_check_branch
          %6546 = sbr.rel (%p6544) target = $region44
        $region43: #{tpu_custom_call.1} parent=39 // pred_region
          %s6547 = sand.u32 %s82, 1
          %s6548 = scalar_lea.sflag [#allocation3], %s6547
          %s6549 = sand.u32 %s82, 1
          %s6550 = smul.addr %s6549, 16
          %s6551 = scalar_lea.vmem [#allocation2], %s6550
          %6553 = dma.done %s6548, 256
        $region44: #{tpu_custom_call.1} parent=39 // pred_fallthru
          _
        // Predicated region
        $region45: #{tpu_custom_call.1} parent=39 // pred_check
          %p6554 = pneg %p123
        $region46: #{tpu_custom_call.1} parent=39 // pred_check_branch
          %6556 = sbr.rel (%p6554) target = $region48
        $region47: #{tpu_custom_call.1} parent=39 // pred_region
          %s6557 = sand.u32 %s108, 1
          %s6558 = scalar_lea.sflag [#allocation5], %s6557
          %s6559 = sand.u32 %s108, 1
          %s6560 = smul.addr %s6559, 8
          %s6561 = scalar_lea.vmem [#allocation4], %s6560
          %6563 = dma.done %s6558, 128
        $region48: #{tpu_custom_call.1} parent=39 // pred_fallthru
          _
      $region40: #{tpu_custom_call.1} parent=5 // pred_fallthru
        _
    $region6: #{tpu_custom_call.1} parent=1 // loop_footer
      %s20 = sadd.s32 1, %s16
    $region7: #{tpu_custom_call.1} parent=1 // loop_footer_branch
      %15 = sbr.rel target = $region3
    $region8: #{tpu_custom_call.1} parent=1 // loop_exit
      _
    %6564 = vsyncpa [#allocation3], 1
    %s6565 = scalar_lea.sflag [#allocation3], 1
    %6566 = vsyncpa %s6565, 1
    %6567 = vsyncpa [#allocation5], 1
    %s6568 = scalar_lea.sflag [#allocation5], 1
    %6569 = vsyncpa %s6568, 1

</llo_original>
